<compile_context>
chip_gen: v5e
topology: v5e:2x2
jax: 0.10.0
libtpu: 0.0.40
codegen_flags: <defaults>
</compile_context>

<pallas_src>
import math

import jax
import jax.numpy as jnp
from jax.experimental import pallas as pl
from jax.experimental.pallas import tpu as pltpu

# ---------------- small synthetic BERT config ----------------
B = 2            # batch (per encode)
S = 8            # sequence length
H = 32           # hidden size
NH = 4           # attention heads
DH = H // NH     # head dim
I = 64           # intermediate (FFN) size
L = 2            # number of transformer layers
VOCAB = 128
TYPE_VOCAB = 2
MAX_POS = 16
LN_EPS = 1e-12
MASK_ID = 4      # synthetic [MASK] token id

BT = 2 * B       # prompt + template concatenated along batch
R = BT * S       # total token rows in the fused pass

VMEM_SPEC = pl.BlockSpec(memory_space=pltpu.MemorySpace.VMEM)


def _layernorm(x, g, b):
    mu = jnp.mean(x, axis=-1, keepdims=True)
    var = jnp.mean((x - mu) ** 2, axis=-1, keepdims=True)
    return (x - mu) * jax.lax.rsqrt(var + LN_EPS) * g + b


# ---------------- the single fused Pallas kernel ----------------
def prompt_bert_kernel(emb_ref, ids_ref, amask_ref, embln_ref,
                       wqkv_ref, bqkv_ref, wo_ref, wi_ref, bi_ref, w2_ref, vecs_ref,
                       o_ref):
    f32 = jnp.float32
    bf16 = jnp.bfloat16

    # Attention bias built once in-kernel, hoisted out of the layer/head loops.
    amask = amask_ref[...].astype(f32)                       # [BT, S]
    bias3 = ((1.0 - amask) * -1e9)[:, None, :]               # [BT, 1, S] (key axis)

    # Embedding LayerNorm; h stays resident as an [R, H] f32 slab for the whole encoder.
    embln = embln_ref[...]                                    # [2, H]
    h = _layernorm(emb_ref[...], embln[0:1], embln[1:2])      # [R, H]

    scale = 1.0 / math.sqrt(DH)
    for l in range(L):                                        # static loop, L = 2
        vecs = vecs_ref[l]                                    # [6, H] packed per-layer vectors
        bo, g1, b1 = vecs[0:1], vecs[1:2], vecs[2:3]
        b2, g2, b2b = vecs[3:4], vecs[4:5], vecs[5:6]

        # --- fused QKV projection: one full-width MXU pass ---
        qkv = jnp.dot(h.astype(bf16), wqkv_ref[l],
                      preferred_element_type=f32) + bqkv_ref[l]          # [R, 3H]

        # --- attention: per-head score/softmax/context (3-D batched einsums) ---
        ctx_heads = []
        for hd in range(NH):                                  # static loop, NH = 4
            lo = hd * DH
            qh = qkv[:, lo:lo + DH].reshape(BT, S, DH).astype(bf16)
            kh = qkv[:, H + lo:H + lo + DH].reshape(BT, S, DH).astype(bf16)
            vh = qkv[:, 2 * H + lo:2 * H + lo + DH].reshape(BT, S, DH).astype(bf16)

            s = jnp.einsum('bqd,bkd->bqk', qh, kh,
                           preferred_element_type=f32) * scale + bias3   # [BT, S, S]
            s = s - jnp.max(s, axis=-1, keepdims=True)
            p = jnp.exp(s)
            p = p * pl.reciprocal(jnp.sum(p, axis=-1, keepdims=True), approx=True)
            ctx_heads.append(jnp.einsum('bqk,bkd->bqd', p.astype(bf16), vh,
                                        preferred_element_type=f32))     # [BT, S, DH]

        # head-major concat matches the row ordering of the unsplit Wo
        ctx = jnp.concatenate(ctx_heads, axis=-1).reshape(R, H)          # [R, H]
        attn = jnp.dot(ctx.astype(bf16), wo_ref[l],
                       preferred_element_type=f32) + bo                  # [R, H]
        h1 = _layernorm(h + attn, g1, b1)

        # --- FFN ---
        inter = jnp.dot(h1.astype(bf16), wi_ref[l],
                        preferred_element_type=f32) + bi_ref[l]          # [R, I]
        # TODO(synk): HF BERT default act is exact (erf) GELU; tanh-approx GELU used here (EUP friendly).
        inter = jax.nn.gelu(inter, approximate=True)
        ffn = jnp.dot(inter.astype(bf16), w2_ref[l],
                      preferred_element_type=f32) + b2                   # [R, H]
        h = _layernorm(h1 + ffn, g2, b2b)

    # [MASK]-token pooling + prompt-minus-template difference, fused into the same kernel.
    mask = (ids_ref[...] == MASK_ID).astype(f32)                         # [BT, S]
    pooled = jnp.sum(h.reshape(BT, S, H) * mask[:, :, None], axis=1)     # [BT, H]
    o_ref[...] = pooled[:B] - pooled[B:]                                 # [B, H]


# Rough advisory cost estimate for XLA scheduling around the custom call.
_FLOPS = L * (2 * R * H * 3 * H            # fused QKV
              + NH * 4 * BT * S * S * DH   # scores + context
              + 2 * R * H * H              # output projection
              + 2 * R * H * I + 2 * R * I * H)  # FFN
_TRANS = L * (BT * NH * S * S + R * I + 4 * R)
_BYTES = (R * H * 4 + 2 * BT * S * 4 + 2 * H * 4
          + L * (H * 3 * H + H * H + H * I + I * H) * 2   # bf16 weights
          + L * (3 * H + I + 6 * H) * 4
          + B * H * 4)

_N_IN = 11
_fused_prompt_bert = pl.pallas_call(
    prompt_bert_kernel,
    out_shape=jax.ShapeDtypeStruct((B, H), jnp.float32),
    in_specs=[VMEM_SPEC] * _N_IN,
    out_specs=VMEM_SPEC,
    cost_estimate=pl.CostEstimate(flops=_FLOPS, transcendentals=_TRANS,
                                  bytes_accessed=_BYTES),
)


# ---------------- parameters ----------------
def init_params(key):
    n_keys = 3 + L * 6
    keys = iter(jax.random.split(key, n_keys))

    def w(shape):
        return 0.02 * jax.random.normal(next(keys), shape, jnp.float32)

    params = {
        "word_emb": w((VOCAB, H)),
        "pos_emb": w((MAX_POS, H)),
        "type_emb": w((TYPE_VOCAB, H)),
        "emb_ln_g": jnp.ones((H,), jnp.float32),
        "emb_ln_b": jnp.zeros((H,), jnp.float32),
        "layers": [],
    }
    for _ in range(L):
        params["layers"].append({
            "wq": w((H, H)), "bq": jnp.zeros((H,), jnp.float32),
            "wk": w((H, H)), "bk": jnp.zeros((H,), jnp.float32),
            "wv": w((H, H)), "bv": jnp.zeros((H,), jnp.float32),
            "wo": w((H, H)), "bo": jnp.zeros((H,), jnp.float32),
            "g1": jnp.ones((H,), jnp.float32), "b1": jnp.zeros((H,), jnp.float32),
            "wi": w((H, I)), "bi": jnp.zeros((I,), jnp.float32),
            "w2": w((I, H)), "b2": jnp.zeros((H,), jnp.float32),
            "g2": jnp.ones((H,), jnp.float32), "b2b": jnp.zeros((H,), jnp.float32),
        })
    return params


def stack_params(params):
    """Stack per-layer weights with a leading [L] dim, fuse QKV along output columns,
    cast matmul weights to bf16 once, and pack all small bias/LN vectors densely.

    Done once outside the hot path; the fused kernel only does static leading-dim indexing."""
    def bf(x):
        return x.astype(jnp.bfloat16)

    lyrs = params["layers"]
    wqkv = jnp.stack([jnp.concatenate([lp["wq"], lp["wk"], lp["wv"]], axis=1)
                      for lp in lyrs])                                    # [L, H, 3H]
    bqkv = jnp.stack([jnp.concatenate([lp["bq"], lp["bk"], lp["bv"]]).reshape(1, 3 * H)
                      for lp in lyrs])                                    # [L, 1, 3H]
    vecs = jnp.stack([jnp.stack([lp["bo"], lp["g1"], lp["b1"],
                                 lp["b2"], lp["g2"], lp["b2b"]])
                      for lp in lyrs])                                    # [L, 6, H]
    return {
        "word_emb": params["word_emb"],
        "pos_emb": params["pos_emb"],
        "type_emb": params["type_emb"],
        "emb_ln": jnp.stack([params["emb_ln_g"], params["emb_ln_b"]]),    # [2, H]
        "wqkv": bf(wqkv),
        "bqkv": bqkv,
        "wo": bf(jnp.stack([lp["wo"] for lp in lyrs])),                   # [L, H, H]
        "wi": bf(jnp.stack([lp["wi"] for lp in lyrs])),                   # [L, H, I]
        "bi": jnp.stack([lp["bi"].reshape(1, I) for lp in lyrs]),         # [L, 1, I]
        "w2": bf(jnp.stack([lp["w2"] for lp in lyrs])),                   # [L, I, H]
        "vecs": vecs,
    }


# ---------------- model glue ----------------
def prompt_bert_forward(sp,
                        prompt_input_ids, prompt_attention_mask, prompt_token_type_ids,
                        template_input_ids, template_attention_mask, template_token_type_ids):
    # Prompt and template share one encoder pass: concatenate along batch (2B sequences).
    ids = jnp.concatenate([prompt_input_ids, template_input_ids], axis=0)        # [BT, S]
    amask = jnp.concatenate([prompt_attention_mask, template_attention_mask], axis=0)
    ttype = jnp.concatenate([prompt_token_type_ids, template_token_type_ids], axis=0)

    # Integer embedding gathers stay in plain JAX (glue); everything else is in the kernel.
    # TODO(synk): could be moved in-kernel via PrefetchScalarGridSpec row-gather at real BERT scale.
    emb = (sp["word_emb"][ids]
           + sp["pos_emb"][jnp.arange(S)][None, :, :]
           + sp["type_emb"][ttype]).astype(jnp.float32).reshape(R, H)

    return _fused_prompt_bert(
        emb, ids, amask, sp["emb_ln"],
        sp["wqkv"], sp["bqkv"], sp["wo"], sp["wi"], sp["bi"], sp["w2"], sp["vecs"])


if __name__ == "__main__":
    params = init_params(jax.random.PRNGKey(0))
    sp = stack_params(params)

    k_p, k_t = jax.random.split(jax.random.PRNGKey(0), 2)
    prompt_input_ids = jax.random.randint(k_p, (B, S), 5, VOCAB, dtype=jnp.int32)
    template_input_ids = jax.random.randint(k_t, (B, S), 5, VOCAB, dtype=jnp.int32)
    # place exactly one [MASK] token per sequence
    prompt_input_ids = prompt_input_ids.at[:, 3].set(MASK_ID)
    template_input_ids = template_input_ids.at[:, 5].set(MASK_ID)

    prompt_attention_mask = jnp.ones((B, S), jnp.int32)
    template_attention_mask = jnp.ones((B, S), jnp.int32).at[1, 6:].set(0)  # some padding
    prompt_token_type_ids = jnp.zeros((B, S), jnp.int32)
    template_token_type_ids = jnp.zeros((B, S), jnp.int32)

    fwd = jax.jit(prompt_bert_forward)
    out = fwd(sp,
              prompt_input_ids, prompt_attention_mask, prompt_token_type_ids,
              template_input_ids, template_attention_mask, template_token_type_ids)
    jax.block_until_ready(out)
    assert out.shape == (B, H) and out.dtype == jnp.float32
    print("KERNEL_OK")
</pallas_src>

<mosaic_0001>
module attributes {stable_mosaic.version = 11 : i64} {
  func.func @prompt_bert_kernel(%arg0: memref<32x32xf32, #tpu.memory_space<vmem>>, %arg1: memref<4x8xi32, #tpu.memory_space<vmem>>, %arg2: memref<4x8xi32, #tpu.memory_space<vmem>>, %arg3: memref<2x32xf32, #tpu.memory_space<vmem>>, %arg4: memref<2x32x96xbf16, #tpu.memory_space<vmem>>, %arg5: memref<2x1x96xf32, #tpu.memory_space<vmem>>, %arg6: memref<2x32x32xbf16, #tpu.memory_space<vmem>>, %arg7: memref<2x32x64xbf16, #tpu.memory_space<vmem>>, %arg8: memref<2x1x64xf32, #tpu.memory_space<vmem>>, %arg9: memref<2x64x32xbf16, #tpu.memory_space<vmem>>, %arg10: memref<2x6x32xf32, #tpu.memory_space<vmem>>, %arg11: memref<2x32xf32, #tpu.memory_space<vmem>>) attributes {dimension_semantics = [], scalar_prefetch = 0 : i64, scratch_operands = 0 : i64, tpu.core_type = #tpu.core_type<tc>} {
    %c0 = arith.constant 0 : index
    %c0_0 = arith.constant 0 : index
    %0 = vector.load %arg2[%c0, %c0_0] : memref<4x8xi32, #tpu.memory_space<vmem>>, vector<4x8xi32>
    %1 = arith.sitofp %0 : vector<4x8xi32> to vector<4x8xf32>
    %cst = arith.constant 1.000000e+00 : f32
    %2 = vector.broadcast %cst : f32 to vector<4x8xf32>
    %3 = arith.subf %2, %1 : vector<4x8xf32>
    %cst_1 = arith.constant -1.000000e+09 : f32
    %4 = vector.broadcast %cst_1 : f32 to vector<4x8xf32>
    %5 = arith.mulf %3, %4 : vector<4x8xf32>
    %6 = vector.shape_cast %5 : vector<4x8xf32> to vector<4x1x8xf32>
    %c0_2 = arith.constant 0 : index
    %c0_3 = arith.constant 0 : index
    %7 = vector.load %arg3[%c0_2, %c0_3] : memref<2x32xf32, #tpu.memory_space<vmem>>, vector<2x32xf32>
    %c0_4 = arith.constant 0 : index
    %c0_5 = arith.constant 0 : index
    %8 = vector.load %arg0[%c0_4, %c0_5] : memref<32x32xf32, #tpu.memory_space<vmem>>, vector<32x32xf32>
    %9 = vector.extract_strided_slice %7 {offsets = [0, 0], sizes = [1, 32], strides = [1, 1]} : vector<2x32xf32> to vector<1x32xf32>
    %10 = vector.extract_strided_slice %7 {offsets = [1, 0], sizes = [1, 32], strides = [1, 1]} : vector<2x32xf32> to vector<1x32xf32>
    %cst_6 = arith.constant dense<0.000000e+00> : vector<32xf32>
    %11 = vector.multi_reduction <add>, %8, %cst_6 [1] : vector<32x32xf32> to vector<32xf32>
    %12 = vector.shape_cast %11 : vector<32xf32> to vector<32x1xf32>
    %cst_7 = arith.constant 3.200000e+01 : f32
    %13 = vector.broadcast %cst_7 : f32 to vector<32x1xf32>
    %14 = arith.divf %12, %13 : vector<32x1xf32>
    %15 = vector.broadcast %14 : vector<32x1xf32> to vector<32x32xf32>
    %16 = arith.subf %8, %15 : vector<32x32xf32>
    %17 = arith.mulf %16, %16 : vector<32x32xf32>
    %cst_8 = arith.constant dense<0.000000e+00> : vector<32xf32>
    %18 = vector.multi_reduction <add>, %17, %cst_8 [1] : vector<32x32xf32> to vector<32xf32>
    %19 = vector.shape_cast %18 : vector<32xf32> to vector<32x1xf32>
    %cst_9 = arith.constant 3.200000e+01 : f32
    %20 = vector.broadcast %cst_9 : f32 to vector<32x1xf32>
    %21 = arith.divf %19, %20 : vector<32x1xf32>
    %22 = vector.broadcast %14 : vector<32x1xf32> to vector<32x32xf32>
    %23 = arith.subf %8, %22 : vector<32x32xf32>
    %cst_10 = arith.constant 9.99999996E-13 : f32
    %24 = vector.broadcast %cst_10 : f32 to vector<32x1xf32>
    %25 = arith.addf %21, %24 : vector<32x1xf32>
    %26 = math.rsqrt %25 : vector<32x1xf32>
    %27 = vector.broadcast %26 : vector<32x1xf32> to vector<32x32xf32>
    %28 = arith.mulf %23, %27 : vector<32x32xf32>
    %29 = vector.broadcast %9 : vector<1x32xf32> to vector<32x32xf32>
    %30 = arith.mulf %28, %29 : vector<32x32xf32>
    %31 = vector.broadcast %10 : vector<1x32xf32> to vector<32x32xf32>
    %32 = arith.addf %30, %31 : vector<32x32xf32>
    %c0_11 = arith.constant 0 : index
    %c0_12 = arith.constant 0 : index
    %c0_13 = arith.constant 0 : index
    %33 = vector.load %arg10[%c0_11, %c0_12, %c0_13] : memref<2x6x32xf32, #tpu.memory_space<vmem>>, vector<1x6x32xf32>
    %34 = vector.shape_cast %33 : vector<1x6x32xf32> to vector<6x32xf32>
    %35 = vector.extract_strided_slice %34 {offsets = [0, 0], sizes = [1, 32], strides = [1, 1]} : vector<6x32xf32> to vector<1x32xf32>
    %36 = vector.extract_strided_slice %34 {offsets = [1, 0], sizes = [1, 32], strides = [1, 1]} : vector<6x32xf32> to vector<1x32xf32>
    %37 = vector.extract_strided_slice %34 {offsets = [2, 0], sizes = [1, 32], strides = [1, 1]} : vector<6x32xf32> to vector<1x32xf32>
    %38 = vector.extract_strided_slice %34 {offsets = [3, 0], sizes = [1, 32], strides = [1, 1]} : vector<6x32xf32> to vector<1x32xf32>
    %39 = vector.extract_strided_slice %34 {offsets = [4, 0], sizes = [1, 32], strides = [1, 1]} : vector<6x32xf32> to vector<1x32xf32>
    %40 = vector.extract_strided_slice %34 {offsets = [5, 0], sizes = [1, 32], strides = [1, 1]} : vector<6x32xf32> to vector<1x32xf32>
    %41 = arith.truncf %32 : vector<32x32xf32> to vector<32x32xbf16>
    %c0_14 = arith.constant 0 : index
    %c0_15 = arith.constant 0 : index
    %c0_16 = arith.constant 0 : index
    %42 = vector.load %arg4[%c0_14, %c0_15, %c0_16] : memref<2x32x96xbf16, #tpu.memory_space<vmem>>, vector<1x32x96xbf16>
    %43 = vector.shape_cast %42 : vector<1x32x96xbf16> to vector<32x96xbf16>
    %cst_17 = arith.constant dense<0.000000e+00> : vector<32x96xf32>
    %44 = tpu.matmul %41, %43, %cst_17 {dimension_numbers = #tpu.dot_dimension_numbers<[1], [0], [0], [1], [0, 0, 1, 1], [], []>} : vector<32x32xbf16>, vector<32x96xbf16>, vector<32x96xf32> -> vector<32x96xf32>
    %c0_18 = arith.constant 0 : index
    %c0_19 = arith.constant 0 : index
    %c0_20 = arith.constant 0 : index
    %45 = vector.load %arg5[%c0_18, %c0_19, %c0_20] : memref<2x1x96xf32, #tpu.memory_space<vmem>>, vector<1x1x96xf32>
    %46 = vector.shape_cast %45 : vector<1x1x96xf32> to vector<1x96xf32>
    %47 = vector.broadcast %46 : vector<1x96xf32> to vector<32x96xf32>
    %48 = arith.addf %44, %47 : vector<32x96xf32>
    %49 = vector.extract_strided_slice %48 {offsets = [0, 0], sizes = [32, 8], strides = [1, 1]} : vector<32x96xf32> to vector<32x8xf32>
    %50 = vector.shape_cast %49 : vector<32x8xf32> to vector<4x8x8xf32>
    %51 = arith.truncf %50 : vector<4x8x8xf32> to vector<4x8x8xbf16>
    %52 = vector.extract_strided_slice %48 {offsets = [0, 32], sizes = [32, 8], strides = [1, 1]} : vector<32x96xf32> to vector<32x8xf32>
    %53 = vector.shape_cast %52 : vector<32x8xf32> to vector<4x8x8xf32>
    %54 = arith.truncf %53 : vector<4x8x8xf32> to vector<4x8x8xbf16>
    %55 = vector.extract_strided_slice %48 {offsets = [0, 64], sizes = [32, 8], strides = [1, 1]} : vector<32x96xf32> to vector<32x8xf32>
    %56 = vector.shape_cast %55 : vector<32x8xf32> to vector<4x8x8xf32>
    %57 = arith.truncf %56 : vector<4x8x8xf32> to vector<4x8x8xbf16>
    "tpu.trace_start"() <{level = 10 : i32, message = "bqd,bkd->bqk"}> : () -> ()
    %cst_21 = arith.constant dense<0.000000e+00> : vector<4x8x8xf32>
    %58 = tpu.matmul %51, %54, %cst_21 {dimension_numbers = #tpu.dot_dimension_numbers<[2], [2], [1], [1], [0, 0, 0, 1, 1, 1], [0], [0]>} : vector<4x8x8xbf16>, vector<4x8x8xbf16>, vector<4x8x8xf32> -> vector<4x8x8xf32>
    "tpu.trace_stop"() : () -> ()
    %cst_22 = arith.constant 0.353553385 : f32
    %59 = vector.broadcast %cst_22 : f32 to vector<4x8x8xf32>
    %60 = arith.mulf %58, %59 : vector<4x8x8xf32>
    %61 = vector.broadcast %6 : vector<4x1x8xf32> to vector<4x8x8xf32>
    %62 = arith.addf %60, %61 : vector<4x8x8xf32>
    %cst_23 = arith.constant dense<0xFF800000> : vector<4x8xf32>
    %63 = vector.multi_reduction <maximumf>, %62, %cst_23 [2] : vector<4x8x8xf32> to vector<4x8xf32>
    %64 = vector.shape_cast %63 : vector<4x8xf32> to vector<4x8x1xf32>
    %65 = vector.broadcast %64 : vector<4x8x1xf32> to vector<4x8x8xf32>
    %66 = arith.subf %62, %65 : vector<4x8x8xf32>
    %67 = math.exp %66 : vector<4x8x8xf32>
    %cst_24 = arith.constant dense<0.000000e+00> : vector<4x8xf32>
    %68 = vector.multi_reduction <add>, %67, %cst_24 [2] : vector<4x8x8xf32> to vector<4x8xf32>
    %69 = vector.shape_cast %68 : vector<4x8xf32> to vector<4x8x1xf32>
    %70 = tpu.reciprocal %69 {approx = true} : vector<4x8x1xf32> -> vector<4x8x1xf32>
    %71 = vector.broadcast %70 : vector<4x8x1xf32> to vector<4x8x8xf32>
    %72 = arith.mulf %67, %71 : vector<4x8x8xf32>
    %73 = arith.truncf %72 : vector<4x8x8xf32> to vector<4x8x8xbf16>
    "tpu.trace_start"() <{level = 10 : i32, message = "bqk,bkd->bqd"}> : () -> ()
    %cst_25 = arith.constant dense<0.000000e+00> : vector<4x8x8xf32>
    %74 = tpu.matmul %73, %57, %cst_25 {dimension_numbers = #tpu.dot_dimension_numbers<[2], [1], [1], [2], [0, 0, 0, 1, 1, 2], [0], [0]>} : vector<4x8x8xbf16>, vector<4x8x8xbf16>, vector<4x8x8xf32> -> vector<4x8x8xf32>
    "tpu.trace_stop"() : () -> ()
    %75 = vector.extract_strided_slice %48 {offsets = [0, 8], sizes = [32, 8], strides = [1, 1]} : vector<32x96xf32> to vector<32x8xf32>
    %76 = vector.shape_cast %75 : vector<32x8xf32> to vector<4x8x8xf32>
    %77 = arith.truncf %76 : vector<4x8x8xf32> to vector<4x8x8xbf16>
    %78 = vector.extract_strided_slice %48 {offsets = [0, 40], sizes = [32, 8], strides = [1, 1]} : vector<32x96xf32> to vector<32x8xf32>
    %79 = vector.shape_cast %78 : vector<32x8xf32> to vector<4x8x8xf32>
    %80 = arith.truncf %79 : vector<4x8x8xf32> to vector<4x8x8xbf16>
    %81 = vector.extract_strided_slice %48 {offsets = [0, 72], sizes = [32, 8], strides = [1, 1]} : vector<32x96xf32> to vector<32x8xf32>
    %82 = vector.shape_cast %81 : vector<32x8xf32> to vector<4x8x8xf32>
    %83 = arith.truncf %82 : vector<4x8x8xf32> to vector<4x8x8xbf16>
    "tpu.trace_start"() <{level = 10 : i32, message = "bqd,bkd->bqk"}> : () -> ()
    %cst_26 = arith.constant dense<0.000000e+00> : vector<4x8x8xf32>
    %84 = tpu.matmul %77, %80, %cst_26 {dimension_numbers = #tpu.dot_dimension_numbers<[2], [2], [1], [1], [0, 0, 0, 1, 1, 1], [0], [0]>} : vector<4x8x8xbf16>, vector<4x8x8xbf16>, vector<4x8x8xf32> -> vector<4x8x8xf32>
    "tpu.trace_stop"() : () -> ()
    %cst_27 = arith.constant 0.353553385 : f32
    %85 = vector.broadcast %cst_27 : f32 to vector<4x8x8xf32>
    %86 = arith.mulf %84, %85 : vector<4x8x8xf32>
    %87 = vector.broadcast %6 : vector<4x1x8xf32> to vector<4x8x8xf32>
    %88 = arith.addf %86, %87 : vector<4x8x8xf32>
    %cst_28 = arith.constant dense<0xFF800000> : vector<4x8xf32>
    %89 = vector.multi_reduction <maximumf>, %88, %cst_28 [2] : vector<4x8x8xf32> to vector<4x8xf32>
    %90 = vector.shape_cast %89 : vector<4x8xf32> to vector<4x8x1xf32>
    %91 = vector.broadcast %90 : vector<4x8x1xf32> to vector<4x8x8xf32>
    %92 = arith.subf %88, %91 : vector<4x8x8xf32>
    %93 = math.exp %92 : vector<4x8x8xf32>
    %cst_29 = arith.constant dense<0.000000e+00> : vector<4x8xf32>
    %94 = vector.multi_reduction <add>, %93, %cst_29 [2] : vector<4x8x8xf32> to vector<4x8xf32>
    %95 = vector.shape_cast %94 : vector<4x8xf32> to vector<4x8x1xf32>
    %96 = tpu.reciprocal %95 {approx = true} : vector<4x8x1xf32> -> vector<4x8x1xf32>
    %97 = vector.broadcast %96 : vector<4x8x1xf32> to vector<4x8x8xf32>
    %98 = arith.mulf %93, %97 : vector<4x8x8xf32>
    %99 = arith.truncf %98 : vector<4x8x8xf32> to vector<4x8x8xbf16>
    "tpu.trace_start"() <{level = 10 : i32, message = "bqk,bkd->bqd"}> : () -> ()
    %cst_30 = arith.constant dense<0.000000e+00> : vector<4x8x8xf32>
    %100 = tpu.matmul %99, %83, %cst_30 {dimension_numbers = #tpu.dot_dimension_numbers<[2], [1], [1], [2], [0, 0, 0, 1, 1, 2], [0], [0]>} : vector<4x8x8xbf16>, vector<4x8x8xbf16>, vector<4x8x8xf32> -> vector<4x8x8xf32>
    "tpu.trace_stop"() : () -> ()
    %101 = vector.extract_strided_slice %48 {offsets = [0, 16], sizes = [32, 8], strides = [1, 1]} : vector<32x96xf32> to vector<32x8xf32>
    %102 = vector.shape_cast %101 : vector<32x8xf32> to vector<4x8x8xf32>
    %103 = arith.truncf %102 : vector<4x8x8xf32> to vector<4x8x8xbf16>
    %104 = vector.extract_strided_slice %48 {offsets = [0, 48], sizes = [32, 8], strides = [1, 1]} : vector<32x96xf32> to vector<32x8xf32>
    %105 = vector.shape_cast %104 : vector<32x8xf32> to vector<4x8x8xf32>
    %106 = arith.truncf %105 : vector<4x8x8xf32> to vector<4x8x8xbf16>
    %107 = vector.extract_strided_slice %48 {offsets = [0, 80], sizes = [32, 8], strides = [1, 1]} : vector<32x96xf32> to vector<32x8xf32>
    %108 = vector.shape_cast %107 : vector<32x8xf32> to vector<4x8x8xf32>
    %109 = arith.truncf %108 : vector<4x8x8xf32> to vector<4x8x8xbf16>
    "tpu.trace_start"() <{level = 10 : i32, message = "bqd,bkd->bqk"}> : () -> ()
    %cst_31 = arith.constant dense<0.000000e+00> : vector<4x8x8xf32>
    %110 = tpu.matmul %103, %106, %cst_31 {dimension_numbers = #tpu.dot_dimension_numbers<[2], [2], [1], [1], [0, 0, 0, 1, 1, 1], [0], [0]>} : vector<4x8x8xbf16>, vector<4x8x8xbf16>, vector<4x8x8xf32> -> vector<4x8x8xf32>
    "tpu.trace_stop"() : () -> ()
    %cst_32 = arith.constant 0.353553385 : f32
    %111 = vector.broadcast %cst_32 : f32 to vector<4x8x8xf32>
    %112 = arith.mulf %110, %111 : vector<4x8x8xf32>
    %113 = vector.broadcast %6 : vector<4x1x8xf32> to vector<4x8x8xf32>
    %114 = arith.addf %112, %113 : vector<4x8x8xf32>
    %cst_33 = arith.constant dense<0xFF800000> : vector<4x8xf32>
    %115 = vector.multi_reduction <maximumf>, %114, %cst_33 [2] : vector<4x8x8xf32> to vector<4x8xf32>
    %116 = vector.shape_cast %115 : vector<4x8xf32> to vector<4x8x1xf32>
    %117 = vector.broadcast %116 : vector<4x8x1xf32> to vector<4x8x8xf32>
    %118 = arith.subf %114, %117 : vector<4x8x8xf32>
    %119 = math.exp %118 : vector<4x8x8xf32>
    %cst_34 = arith.constant dense<0.000000e+00> : vector<4x8xf32>
    %120 = vector.multi_reduction <add>, %119, %cst_34 [2] : vector<4x8x8xf32> to vector<4x8xf32>
    %121 = vector.shape_cast %120 : vector<4x8xf32> to vector<4x8x1xf32>
    %122 = tpu.reciprocal %121 {approx = true} : vector<4x8x1xf32> -> vector<4x8x1xf32>
    %123 = vector.broadcast %122 : vector<4x8x1xf32> to vector<4x8x8xf32>
    %124 = arith.mulf %119, %123 : vector<4x8x8xf32>
    %125 = arith.truncf %124 : vector<4x8x8xf32> to vector<4x8x8xbf16>
    "tpu.trace_start"() <{level = 10 : i32, message = "bqk,bkd->bqd"}> : () -> ()
    %cst_35 = arith.constant dense<0.000000e+00> : vector<4x8x8xf32>
    %126 = tpu.matmul %125, %109, %cst_35 {dimension_numbers = #tpu.dot_dimension_numbers<[2], [1], [1], [2], [0, 0, 0, 1, 1, 2], [0], [0]>} : vector<4x8x8xbf16>, vector<4x8x8xbf16>, vector<4x8x8xf32> -> vector<4x8x8xf32>
    "tpu.trace_stop"() : () -> ()
    %127 = vector.extract_strided_slice %48 {offsets = [0, 24], sizes = [32, 8], strides = [1, 1]} : vector<32x96xf32> to vector<32x8xf32>
    %128 = vector.shape_cast %127 : vector<32x8xf32> to vector<4x8x8xf32>
    %129 = arith.truncf %128 : vector<4x8x8xf32> to vector<4x8x8xbf16>
    %130 = vector.extract_strided_slice %48 {offsets = [0, 56], sizes = [32, 8], strides = [1, 1]} : vector<32x96xf32> to vector<32x8xf32>
    %131 = vector.shape_cast %130 : vector<32x8xf32> to vector<4x8x8xf32>
    %132 = arith.truncf %131 : vector<4x8x8xf32> to vector<4x8x8xbf16>
    %133 = vector.extract_strided_slice %48 {offsets = [0, 88], sizes = [32, 8], strides = [1, 1]} : vector<32x96xf32> to vector<32x8xf32>
    %134 = vector.shape_cast %133 : vector<32x8xf32> to vector<4x8x8xf32>
    %135 = arith.truncf %134 : vector<4x8x8xf32> to vector<4x8x8xbf16>
    "tpu.trace_start"() <{level = 10 : i32, message = "bqd,bkd->bqk"}> : () -> ()
    %cst_36 = arith.constant dense<0.000000e+00> : vector<4x8x8xf32>
    %136 = tpu.matmul %129, %132, %cst_36 {dimension_numbers = #tpu.dot_dimension_numbers<[2], [2], [1], [1], [0, 0, 0, 1, 1, 1], [0], [0]>} : vector<4x8x8xbf16>, vector<4x8x8xbf16>, vector<4x8x8xf32> -> vector<4x8x8xf32>
    "tpu.trace_stop"() : () -> ()
    %cst_37 = arith.constant 0.353553385 : f32
    %137 = vector.broadcast %cst_37 : f32 to vector<4x8x8xf32>
    %138 = arith.mulf %136, %137 : vector<4x8x8xf32>
    %139 = vector.broadcast %6 : vector<4x1x8xf32> to vector<4x8x8xf32>
    %140 = arith.addf %138, %139 : vector<4x8x8xf32>
    %cst_38 = arith.constant dense<0xFF800000> : vector<4x8xf32>
    %141 = vector.multi_reduction <maximumf>, %140, %cst_38 [2] : vector<4x8x8xf32> to vector<4x8xf32>
    %142 = vector.shape_cast %141 : vector<4x8xf32> to vector<4x8x1xf32>
    %143 = vector.broadcast %142 : vector<4x8x1xf32> to vector<4x8x8xf32>
    %144 = arith.subf %140, %143 : vector<4x8x8xf32>
    %145 = math.exp %144 : vector<4x8x8xf32>
    %cst_39 = arith.constant dense<0.000000e+00> : vector<4x8xf32>
    %146 = vector.multi_reduction <add>, %145, %cst_39 [2] : vector<4x8x8xf32> to vector<4x8xf32>
    %147 = vector.shape_cast %146 : vector<4x8xf32> to vector<4x8x1xf32>
    %148 = tpu.reciprocal %147 {approx = true} : vector<4x8x1xf32> -> vector<4x8x1xf32>
    %149 = vector.broadcast %148 : vector<4x8x1xf32> to vector<4x8x8xf32>
    %150 = arith.mulf %145, %149 : vector<4x8x8xf32>
    %151 = arith.truncf %150 : vector<4x8x8xf32> to vector<4x8x8xbf16>
    "tpu.trace_start"() <{level = 10 : i32, message = "bqk,bkd->bqd"}> : () -> ()
    %cst_40 = arith.constant dense<0.000000e+00> : vector<4x8x8xf32>
    %152 = tpu.matmul %151, %135, %cst_40 {dimension_numbers = #tpu.dot_dimension_numbers<[2], [1], [1], [2], [0, 0, 0, 1, 1, 2], [0], [0]>} : vector<4x8x8xbf16>, vector<4x8x8xbf16>, vector<4x8x8xf32> -> vector<4x8x8xf32>
    "tpu.trace_stop"() : () -> ()
    %153 = tpu.concatenate %74, %100, %126, %152 in 2 : vector<4x8x8xf32>, vector<4x8x8xf32>, vector<4x8x8xf32>, vector<4x8x8xf32> -> vector<4x8x32xf32>
    %154 = vector.shape_cast %153 : vector<4x8x32xf32> to vector<32x32xf32>
    %155 = arith.truncf %154 : vector<32x32xf32> to vector<32x32xbf16>
    %c0_41 = arith.constant 0 : index
    %c0_42 = arith.constant 0 : index
    %c0_43 = arith.constant 0 : index
    %156 = vector.load %arg6[%c0_41, %c0_42, %c0_43] : memref<2x32x32xbf16, #tpu.memory_space<vmem>>, vector<1x32x32xbf16>
    %157 = vector.shape_cast %156 : vector<1x32x32xbf16> to vector<32x32xbf16>
    %cst_44 = arith.constant dense<0.000000e+00> : vector<32x32xf32>
    %158 = tpu.matmul %155, %157, %cst_44 {dimension_numbers = #tpu.dot_dimension_numbers<[1], [0], [0], [1], [0, 0, 1, 1], [], []>} : vector<32x32xbf16>, vector<32x32xbf16>, vector<32x32xf32> -> vector<32x32xf32>
    %159 = vector.broadcast %35 : vector<1x32xf32> to vector<32x32xf32>
    %160 = arith.addf %158, %159 : vector<32x32xf32>
    %161 = arith.addf %32, %160 : vector<32x32xf32>
    %cst_45 = arith.constant dense<0.000000e+00> : vector<32xf32>
    %162 = vector.multi_reduction <add>, %161, %cst_45 [1] : vector<32x32xf32> to vector<32xf32>
    %163 = vector.shape_cast %162 : vector<32xf32> to vector<32x1xf32>
    %cst_46 = arith.constant 3.200000e+01 : f32
    %164 = vector.broadcast %cst_46 : f32 to vector<32x1xf32>
    %165 = arith.divf %163, %164 : vector<32x1xf32>
    %166 = vector.broadcast %165 : vector<32x1xf32> to vector<32x32xf32>
    %167 = arith.subf %161, %166 : vector<32x32xf32>
    %168 = arith.mulf %167, %167 : vector<32x32xf32>
    %cst_47 = arith.constant dense<0.000000e+00> : vector<32xf32>
    %169 = vector.multi_reduction <add>, %168, %cst_47 [1] : vector<32x32xf32> to vector<32xf32>
    %170 = vector.shape_cast %169 : vector<32xf32> to vector<32x1xf32>
    %cst_48 = arith.constant 3.200000e+01 : f32
    %171 = vector.broadcast %cst_48 : f32 to vector<32x1xf32>
    %172 = arith.divf %170, %171 : vector<32x1xf32>
    %173 = vector.broadcast %165 : vector<32x1xf32> to vector<32x32xf32>
    %174 = arith.subf %161, %173 : vector<32x32xf32>
    %cst_49 = arith.constant 9.99999996E-13 : f32
    %175 = vector.broadcast %cst_49 : f32 to vector<32x1xf32>
    %176 = arith.addf %172, %175 : vector<32x1xf32>
    %177 = math.rsqrt %176 : vector<32x1xf32>
    %178 = vector.broadcast %177 : vector<32x1xf32> to vector<32x32xf32>
    %179 = arith.mulf %174, %178 : vector<32x32xf32>
    %180 = vector.broadcast %36 : vector<1x32xf32> to vector<32x32xf32>
    %181 = arith.mulf %179, %180 : vector<32x32xf32>
    %182 = vector.broadcast %37 : vector<1x32xf32> to vector<32x32xf32>
    %183 = arith.addf %181, %182 : vector<32x32xf32>
    %184 = arith.truncf %183 : vector<32x32xf32> to vector<32x32xbf16>
    %c0_50 = arith.constant 0 : index
    %c0_51 = arith.constant 0 : index
    %c0_52 = arith.constant 0 : index
    %185 = vector.load %arg7[%c0_50, %c0_51, %c0_52] : memref<2x32x64xbf16, #tpu.memory_space<vmem>>, vector<1x32x64xbf16>
    %186 = vector.shape_cast %185 : vector<1x32x64xbf16> to vector<32x64xbf16>
    %cst_53 = arith.constant dense<0.000000e+00> : vector<32x64xf32>
    %187 = tpu.matmul %184, %186, %cst_53 {dimension_numbers = #tpu.dot_dimension_numbers<[1], [0], [0], [1], [0, 0, 1, 1], [], []>} : vector<32x32xbf16>, vector<32x64xbf16>, vector<32x64xf32> -> vector<32x64xf32>
    %c0_54 = arith.constant 0 : index
    %c0_55 = arith.constant 0 : index
    %c0_56 = arith.constant 0 : index
    %188 = vector.load %arg8[%c0_54, %c0_55, %c0_56] : memref<2x1x64xf32, #tpu.memory_space<vmem>>, vector<1x1x64xf32>
    %189 = vector.shape_cast %188 : vector<1x1x64xf32> to vector<1x64xf32>
    %190 = vector.broadcast %189 : vector<1x64xf32> to vector<32x64xf32>
    %191 = arith.addf %187, %190 : vector<32x64xf32>
    %192 = arith.mulf %191, %191 : vector<32x64xf32>
    %193 = arith.mulf %191, %192 : vector<32x64xf32>
    %cst_57 = arith.constant 4.471500e-02 : f32
    %194 = vector.broadcast %cst_57 : f32 to vector<32x64xf32>
    %195 = arith.mulf %194, %193 : vector<32x64xf32>
    %196 = arith.addf %191, %195 : vector<32x64xf32>
    %cst_58 = arith.constant 0.797884583 : f32
    %197 = vector.broadcast %cst_58 : f32 to vector<32x64xf32>
    %198 = arith.mulf %197, %196 : vector<32x64xf32>
    %199 = math.tanh %198 : vector<32x64xf32>
    %cst_59 = arith.constant 1.000000e+00 : f32
    %200 = vector.broadcast %cst_59 : f32 to vector<32x64xf32>
    %201 = arith.addf %200, %199 : vector<32x64xf32>
    %cst_60 = arith.constant 5.000000e-01 : f32
    %202 = vector.broadcast %cst_60 : f32 to vector<32x64xf32>
    %203 = arith.mulf %202, %201 : vector<32x64xf32>
    %204 = arith.mulf %191, %203 : vector<32x64xf32>
    %205 = arith.truncf %204 : vector<32x64xf32> to vector<32x64xbf16>
    %c0_61 = arith.constant 0 : index
    %c0_62 = arith.constant 0 : index
    %c0_63 = arith.constant 0 : index
    %206 = vector.load %arg9[%c0_61, %c0_62, %c0_63] : memref<2x64x32xbf16, #tpu.memory_space<vmem>>, vector<1x64x32xbf16>
    %207 = vector.shape_cast %206 : vector<1x64x32xbf16> to vector<64x32xbf16>
    %cst_64 = arith.constant dense<0.000000e+00> : vector<32x32xf32>
    %208 = tpu.matmul %205, %207, %cst_64 {dimension_numbers = #tpu.dot_dimension_numbers<[1], [0], [0], [1], [0, 0, 1, 1], [], []>} : vector<32x64xbf16>, vector<64x32xbf16>, vector<32x32xf32> -> vector<32x32xf32>
    %209 = vector.broadcast %38 : vector<1x32xf32> to vector<32x32xf32>
    %210 = arith.addf %208, %209 : vector<32x32xf32>
    %211 = arith.addf %183, %210 : vector<32x32xf32>
    %cst_65 = arith.constant dense<0.000000e+00> : vector<32xf32>
    %212 = vector.multi_reduction <add>, %211, %cst_65 [1] : vector<32x32xf32> to vector<32xf32>
    %213 = vector.shape_cast %212 : vector<32xf32> to vector<32x1xf32>
    %cst_66 = arith.constant 3.200000e+01 : f32
    %214 = vector.broadcast %cst_66 : f32 to vector<32x1xf32>
    %215 = arith.divf %213, %214 : vector<32x1xf32>
    %216 = vector.broadcast %215 : vector<32x1xf32> to vector<32x32xf32>
    %217 = arith.subf %211, %216 : vector<32x32xf32>
    %218 = arith.mulf %217, %217 : vector<32x32xf32>
    %cst_67 = arith.constant dense<0.000000e+00> : vector<32xf32>
    %219 = vector.multi_reduction <add>, %218, %cst_67 [1] : vector<32x32xf32> to vector<32xf32>
    %220 = vector.shape_cast %219 : vector<32xf32> to vector<32x1xf32>
    %cst_68 = arith.constant 3.200000e+01 : f32
    %221 = vector.broadcast %cst_68 : f32 to vector<32x1xf32>
    %222 = arith.divf %220, %221 : vector<32x1xf32>
    %223 = vector.broadcast %215 : vector<32x1xf32> to vector<32x32xf32>
    %224 = arith.subf %211, %223 : vector<32x32xf32>
    %cst_69 = arith.constant 9.99999996E-13 : f32
    %225 = vector.broadcast %cst_69 : f32 to vector<32x1xf32>
    %226 = arith.addf %222, %225 : vector<32x1xf32>
    %227 = math.rsqrt %226 : vector<32x1xf32>
    %228 = vector.broadcast %227 : vector<32x1xf32> to vector<32x32xf32>
    %229 = arith.mulf %224, %228 : vector<32x32xf32>
    %230 = vector.broadcast %39 : vector<1x32xf32> to vector<32x32xf32>
    %231 = arith.mulf %229, %230 : vector<32x32xf32>
    %232 = vector.broadcast %40 : vector<1x32xf32> to vector<32x32xf32>
    %233 = arith.addf %231, %232 : vector<32x32xf32>
    %c1 = arith.constant 1 : index
    %c0_70 = arith.constant 0 : index
    %c0_71 = arith.constant 0 : index
    %234 = vector.load %arg10[%c1, %c0_70, %c0_71] : memref<2x6x32xf32, #tpu.memory_space<vmem>>, vector<1x6x32xf32>
    %235 = vector.shape_cast %234 : vector<1x6x32xf32> to vector<6x32xf32>
    %236 = vector.extract_strided_slice %235 {offsets = [0, 0], sizes = [1, 32], strides = [1, 1]} : vector<6x32xf32> to vector<1x32xf32>
    %237 = vector.extract_strided_slice %235 {offsets = [1, 0], sizes = [1, 32], strides = [1, 1]} : vector<6x32xf32> to vector<1x32xf32>
    %238 = vector.extract_strided_slice %235 {offsets = [2, 0], sizes = [1, 32], strides = [1, 1]} : vector<6x32xf32> to vector<1x32xf32>
    %239 = vector.extract_strided_slice %235 {offsets = [3, 0], sizes = [1, 32], strides = [1, 1]} : vector<6x32xf32> to vector<1x32xf32>
    %240 = vector.extract_strided_slice %235 {offsets = [4, 0], sizes = [1, 32], strides = [1, 1]} : vector<6x32xf32> to vector<1x32xf32>
    %241 = vector.extract_strided_slice %235 {offsets = [5, 0], sizes = [1, 32], strides = [1, 1]} : vector<6x32xf32> to vector<1x32xf32>
    %242 = arith.truncf %233 : vector<32x32xf32> to vector<32x32xbf16>
    %c1_72 = arith.constant 1 : index
    %c0_73 = arith.constant 0 : index
    %c0_74 = arith.constant 0 : index
    %243 = vector.load %arg4[%c1_72, %c0_73, %c0_74] : memref<2x32x96xbf16, #tpu.memory_space<vmem>>, vector<1x32x96xbf16>
    %244 = vector.shape_cast %243 : vector<1x32x96xbf16> to vector<32x96xbf16>
    %cst_75 = arith.constant dense<0.000000e+00> : vector<32x96xf32>
    %245 = tpu.matmul %242, %244, %cst_75 {dimension_numbers = #tpu.dot_dimension_numbers<[1], [0], [0], [1], [0, 0, 1, 1], [], []>} : vector<32x32xbf16>, vector<32x96xbf16>, vector<32x96xf32> -> vector<32x96xf32>
    %c1_76 = arith.constant 1 : index
    %c0_77 = arith.constant 0 : index
    %c0_78 = arith.constant 0 : index
    %246 = vector.load %arg5[%c1_76, %c0_77, %c0_78] : memref<2x1x96xf32, #tpu.memory_space<vmem>>, vector<1x1x96xf32>
    %247 = vector.shape_cast %246 : vector<1x1x96xf32> to vector<1x96xf32>
    %248 = vector.broadcast %247 : vector<1x96xf32> to vector<32x96xf32>
    %249 = arith.addf %245, %248 : vector<32x96xf32>
    %250 = vector.extract_strided_slice %249 {offsets = [0, 0], sizes = [32, 8], strides = [1, 1]} : vector<32x96xf32> to vector<32x8xf32>
    %251 = vector.shape_cast %250 : vector<32x8xf32> to vector<4x8x8xf32>
    %252 = arith.truncf %251 : vector<4x8x8xf32> to vector<4x8x8xbf16>
    %253 = vector.extract_strided_slice %249 {offsets = [0, 32], sizes = [32, 8], strides = [1, 1]} : vector<32x96xf32> to vector<32x8xf32>
    %254 = vector.shape_cast %253 : vector<32x8xf32> to vector<4x8x8xf32>
    %255 = arith.truncf %254 : vector<4x8x8xf32> to vector<4x8x8xbf16>
    %256 = vector.extract_strided_slice %249 {offsets = [0, 64], sizes = [32, 8], strides = [1, 1]} : vector<32x96xf32> to vector<32x8xf32>
    %257 = vector.shape_cast %256 : vector<32x8xf32> to vector<4x8x8xf32>
    %258 = arith.truncf %257 : vector<4x8x8xf32> to vector<4x8x8xbf16>
    "tpu.trace_start"() <{level = 10 : i32, message = "bqd,bkd->bqk"}> : () -> ()
    %cst_79 = arith.constant dense<0.000000e+00> : vector<4x8x8xf32>
    %259 = tpu.matmul %252, %255, %cst_79 {dimension_numbers = #tpu.dot_dimension_numbers<[2], [2], [1], [1], [0, 0, 0, 1, 1, 1], [0], [0]>} : vector<4x8x8xbf16>, vector<4x8x8xbf16>, vector<4x8x8xf32> -> vector<4x8x8xf32>
    "tpu.trace_stop"() : () -> ()
    %cst_80 = arith.constant 0.353553385 : f32
    %260 = vector.broadcast %cst_80 : f32 to vector<4x8x8xf32>
    %261 = arith.mulf %259, %260 : vector<4x8x8xf32>
    %262 = vector.broadcast %6 : vector<4x1x8xf32> to vector<4x8x8xf32>
    %263 = arith.addf %261, %262 : vector<4x8x8xf32>
    %cst_81 = arith.constant dense<0xFF800000> : vector<4x8xf32>
    %264 = vector.multi_reduction <maximumf>, %263, %cst_81 [2] : vector<4x8x8xf32> to vector<4x8xf32>
    %265 = vector.shape_cast %264 : vector<4x8xf32> to vector<4x8x1xf32>
    %266 = vector.broadcast %265 : vector<4x8x1xf32> to vector<4x8x8xf32>
    %267 = arith.subf %263, %266 : vector<4x8x8xf32>
    %268 = math.exp %267 : vector<4x8x8xf32>
    %cst_82 = arith.constant dense<0.000000e+00> : vector<4x8xf32>
    %269 = vector.multi_reduction <add>, %268, %cst_82 [2] : vector<4x8x8xf32> to vector<4x8xf32>
    %270 = vector.shape_cast %269 : vector<4x8xf32> to vector<4x8x1xf32>
    %271 = tpu.reciprocal %270 {approx = true} : vector<4x8x1xf32> -> vector<4x8x1xf32>
    %272 = vector.broadcast %271 : vector<4x8x1xf32> to vector<4x8x8xf32>
    %273 = arith.mulf %268, %272 : vector<4x8x8xf32>
    %274 = arith.truncf %273 : vector<4x8x8xf32> to vector<4x8x8xbf16>
    "tpu.trace_start"() <{level = 10 : i32, message = "bqk,bkd->bqd"}> : () -> ()
    %cst_83 = arith.constant dense<0.000000e+00> : vector<4x8x8xf32>
    %275 = tpu.matmul %274, %258, %cst_83 {dimension_numbers = #tpu.dot_dimension_numbers<[2], [1], [1], [2], [0, 0, 0, 1, 1, 2], [0], [0]>} : vector<4x8x8xbf16>, vector<4x8x8xbf16>, vector<4x8x8xf32> -> vector<4x8x8xf32>
    "tpu.trace_stop"() : () -> ()
    %276 = vector.extract_strided_slice %249 {offsets = [0, 8], sizes = [32, 8], strides = [1, 1]} : vector<32x96xf32> to vector<32x8xf32>
    %277 = vector.shape_cast %276 : vector<32x8xf32> to vector<4x8x8xf32>
    %278 = arith.truncf %277 : vector<4x8x8xf32> to vector<4x8x8xbf16>
    %279 = vector.extract_strided_slice %249 {offsets = [0, 40], sizes = [32, 8], strides = [1, 1]} : vector<32x96xf32> to vector<32x8xf32>
    %280 = vector.shape_cast %279 : vector<32x8xf32> to vector<4x8x8xf32>
    %281 = arith.truncf %280 : vector<4x8x8xf32> to vector<4x8x8xbf16>
    %282 = vector.extract_strided_slice %249 {offsets = [0, 72], sizes = [32, 8], strides = [1, 1]} : vector<32x96xf32> to vector<32x8xf32>
    %283 = vector.shape_cast %282 : vector<32x8xf32> to vector<4x8x8xf32>
    %284 = arith.truncf %283 : vector<4x8x8xf32> to vector<4x8x8xbf16>
    "tpu.trace_start"() <{level = 10 : i32, message = "bqd,bkd->bqk"}> : () -> ()
    %cst_84 = arith.constant dense<0.000000e+00> : vector<4x8x8xf32>
    %285 = tpu.matmul %278, %281, %cst_84 {dimension_numbers = #tpu.dot_dimension_numbers<[2], [2], [1], [1], [0, 0, 0, 1, 1, 1], [0], [0]>} : vector<4x8x8xbf16>, vector<4x8x8xbf16>, vector<4x8x8xf32> -> vector<4x8x8xf32>
    "tpu.trace_stop"() : () -> ()
    %cst_85 = arith.constant 0.353553385 : f32
    %286 = vector.broadcast %cst_85 : f32 to vector<4x8x8xf32>
    %287 = arith.mulf %285, %286 : vector<4x8x8xf32>
    %288 = vector.broadcast %6 : vector<4x1x8xf32> to vector<4x8x8xf32>
    %289 = arith.addf %287, %288 : vector<4x8x8xf32>
    %cst_86 = arith.constant dense<0xFF800000> : vector<4x8xf32>
    %290 = vector.multi_reduction <maximumf>, %289, %cst_86 [2] : vector<4x8x8xf32> to vector<4x8xf32>
    %291 = vector.shape_cast %290 : vector<4x8xf32> to vector<4x8x1xf32>
    %292 = vector.broadcast %291 : vector<4x8x1xf32> to vector<4x8x8xf32>
    %293 = arith.subf %289, %292 : vector<4x8x8xf32>
    %294 = math.exp %293 : vector<4x8x8xf32>
    %cst_87 = arith.constant dense<0.000000e+00> : vector<4x8xf32>
    %295 = vector.multi_reduction <add>, %294, %cst_87 [2] : vector<4x8x8xf32> to vector<4x8xf32>
    %296 = vector.shape_cast %295 : vector<4x8xf32> to vector<4x8x1xf32>
    %297 = tpu.reciprocal %296 {approx = true} : vector<4x8x1xf32> -> vector<4x8x1xf32>
    %298 = vector.broadcast %297 : vector<4x8x1xf32> to vector<4x8x8xf32>
    %299 = arith.mulf %294, %298 : vector<4x8x8xf32>
    %300 = arith.truncf %299 : vector<4x8x8xf32> to vector<4x8x8xbf16>
    "tpu.trace_start"() <{level = 10 : i32, message = "bqk,bkd->bqd"}> : () -> ()
    %cst_88 = arith.constant dense<0.000000e+00> : vector<4x8x8xf32>
    %301 = tpu.matmul %300, %284, %cst_88 {dimension_numbers = #tpu.dot_dimension_numbers<[2], [1], [1], [2], [0, 0, 0, 1, 1, 2], [0], [0]>} : vector<4x8x8xbf16>, vector<4x8x8xbf16>, vector<4x8x8xf32> -> vector<4x8x8xf32>
    "tpu.trace_stop"() : () -> ()
    %302 = vector.extract_strided_slice %249 {offsets = [0, 16], sizes = [32, 8], strides = [1, 1]} : vector<32x96xf32> to vector<32x8xf32>
    %303 = vector.shape_cast %302 : vector<32x8xf32> to vector<4x8x8xf32>
    %304 = arith.truncf %303 : vector<4x8x8xf32> to vector<4x8x8xbf16>
    %305 = vector.extract_strided_slice %249 {offsets = [0, 48], sizes = [32, 8], strides = [1, 1]} : vector<32x96xf32> to vector<32x8xf32>
    %306 = vector.shape_cast %305 : vector<32x8xf32> to vector<4x8x8xf32>
    %307 = arith.truncf %306 : vector<4x8x8xf32> to vector<4x8x8xbf16>
    %308 = vector.extract_strided_slice %249 {offsets = [0, 80], sizes = [32, 8], strides = [1, 1]} : vector<32x96xf32> to vector<32x8xf32>
    %309 = vector.shape_cast %308 : vector<32x8xf32> to vector<4x8x8xf32>
    %310 = arith.truncf %309 : vector<4x8x8xf32> to vector<4x8x8xbf16>
    "tpu.trace_start"() <{level = 10 : i32, message = "bqd,bkd->bqk"}> : () -> ()
    %cst_89 = arith.constant dense<0.000000e+00> : vector<4x8x8xf32>
    %311 = tpu.matmul %304, %307, %cst_89 {dimension_numbers = #tpu.dot_dimension_numbers<[2], [2], [1], [1], [0, 0, 0, 1, 1, 1], [0], [0]>} : vector<4x8x8xbf16>, vector<4x8x8xbf16>, vector<4x8x8xf32> -> vector<4x8x8xf32>
    "tpu.trace_stop"() : () -> ()
    %cst_90 = arith.constant 0.353553385 : f32
    %312 = vector.broadcast %cst_90 : f32 to vector<4x8x8xf32>
    %313 = arith.mulf %311, %312 : vector<4x8x8xf32>
    %314 = vector.broadcast %6 : vector<4x1x8xf32> to vector<4x8x8xf32>
    %315 = arith.addf %313, %314 : vector<4x8x8xf32>
    %cst_91 = arith.constant dense<0xFF800000> : vector<4x8xf32>
    %316 = vector.multi_reduction <maximumf>, %315, %cst_91 [2] : vector<4x8x8xf32> to vector<4x8xf32>
    %317 = vector.shape_cast %316 : vector<4x8xf32> to vector<4x8x1xf32>
    %318 = vector.broadcast %317 : vector<4x8x1xf32> to vector<4x8x8xf32>
    %319 = arith.subf %315, %318 : vector<4x8x8xf32>
    %320 = math.exp %319 : vector<4x8x8xf32>
    %cst_92 = arith.constant dense<0.000000e+00> : vector<4x8xf32>
    %321 = vector.multi_reduction <add>, %320, %cst_92 [2] : vector<4x8x8xf32> to vector<4x8xf32>
    %322 = vector.shape_cast %321 : vector<4x8xf32> to vector<4x8x1xf32>
    %323 = tpu.reciprocal %322 {approx = true} : vector<4x8x1xf32> -> vector<4x8x1xf32>
    %324 = vector.broadcast %323 : vector<4x8x1xf32> to vector<4x8x8xf32>
    %325 = arith.mulf %320, %324 : vector<4x8x8xf32>
    %326 = arith.truncf %325 : vector<4x8x8xf32> to vector<4x8x8xbf16>
    "tpu.trace_start"() <{level = 10 : i32, message = "bqk,bkd->bqd"}> : () -> ()
    %cst_93 = arith.constant dense<0.000000e+00> : vector<4x8x8xf32>
    %327 = tpu.matmul %326, %310, %cst_93 {dimension_numbers = #tpu.dot_dimension_numbers<[2], [1], [1], [2], [0, 0, 0, 1, 1, 2], [0], [0]>} : vector<4x8x8xbf16>, vector<4x8x8xbf16>, vector<4x8x8xf32> -> vector<4x8x8xf32>
    "tpu.trace_stop"() : () -> ()
    %328 = vector.extract_strided_slice %249 {offsets = [0, 24], sizes = [32, 8], strides = [1, 1]} : vector<32x96xf32> to vector<32x8xf32>
    %329 = vector.shape_cast %328 : vector<32x8xf32> to vector<4x8x8xf32>
    %330 = arith.truncf %329 : vector<4x8x8xf32> to vector<4x8x8xbf16>
    %331 = vector.extract_strided_slice %249 {offsets = [0, 56], sizes = [32, 8], strides = [1, 1]} : vector<32x96xf32> to vector<32x8xf32>
    %332 = vector.shape_cast %331 : vector<32x8xf32> to vector<4x8x8xf32>
    %333 = arith.truncf %332 : vector<4x8x8xf32> to vector<4x8x8xbf16>
    %334 = vector.extract_strided_slice %249 {offsets = [0, 88], sizes = [32, 8], strides = [1, 1]} : vector<32x96xf32> to vector<32x8xf32>
    %335 = vector.shape_cast %334 : vector<32x8xf32> to vector<4x8x8xf32>
    %336 = arith.truncf %335 : vector<4x8x8xf32> to vector<4x8x8xbf16>
    "tpu.trace_start"() <{level = 10 : i32, message = "bqd,bkd->bqk"}> : () -> ()
    %cst_94 = arith.constant dense<0.000000e+00> : vector<4x8x8xf32>
    %337 = tpu.matmul %330, %333, %cst_94 {dimension_numbers = #tpu.dot_dimension_numbers<[2], [2], [1], [1], [0, 0, 0, 1, 1, 1], [0], [0]>} : vector<4x8x8xbf16>, vector<4x8x8xbf16>, vector<4x8x8xf32> -> vector<4x8x8xf32>
    "tpu.trace_stop"() : () -> ()
    %cst_95 = arith.constant 0.353553385 : f32
    %338 = vector.broadcast %cst_95 : f32 to vector<4x8x8xf32>
    %339 = arith.mulf %337, %338 : vector<4x8x8xf32>
    %340 = vector.broadcast %6 : vector<4x1x8xf32> to vector<4x8x8xf32>
    %341 = arith.addf %339, %340 : vector<4x8x8xf32>
    %cst_96 = arith.constant dense<0xFF800000> : vector<4x8xf32>
    %342 = vector.multi_reduction <maximumf>, %341, %cst_96 [2] : vector<4x8x8xf32> to vector<4x8xf32>
    %343 = vector.shape_cast %342 : vector<4x8xf32> to vector<4x8x1xf32>
    %344 = vector.broadcast %343 : vector<4x8x1xf32> to vector<4x8x8xf32>
    %345 = arith.subf %341, %344 : vector<4x8x8xf32>
    %346 = math.exp %345 : vector<4x8x8xf32>
    %cst_97 = arith.constant dense<0.000000e+00> : vector<4x8xf32>
    %347 = vector.multi_reduction <add>, %346, %cst_97 [2] : vector<4x8x8xf32> to vector<4x8xf32>
    %348 = vector.shape_cast %347 : vector<4x8xf32> to vector<4x8x1xf32>
    %349 = tpu.reciprocal %348 {approx = true} : vector<4x8x1xf32> -> vector<4x8x1xf32>
    %350 = vector.broadcast %349 : vector<4x8x1xf32> to vector<4x8x8xf32>
    %351 = arith.mulf %346, %350 : vector<4x8x8xf32>
    %352 = arith.truncf %351 : vector<4x8x8xf32> to vector<4x8x8xbf16>
    "tpu.trace_start"() <{level = 10 : i32, message = "bqk,bkd->bqd"}> : () -> ()
    %cst_98 = arith.constant dense<0.000000e+00> : vector<4x8x8xf32>
    %353 = tpu.matmul %352, %336, %cst_98 {dimension_numbers = #tpu.dot_dimension_numbers<[2], [1], [1], [2], [0, 0, 0, 1, 1, 2], [0], [0]>} : vector<4x8x8xbf16>, vector<4x8x8xbf16>, vector<4x8x8xf32> -> vector<4x8x8xf32>
    "tpu.trace_stop"() : () -> ()
    %354 = tpu.concatenate %275, %301, %327, %353 in 2 : vector<4x8x8xf32>, vector<4x8x8xf32>, vector<4x8x8xf32>, vector<4x8x8xf32> -> vector<4x8x32xf32>
    %355 = vector.shape_cast %354 : vector<4x8x32xf32> to vector<32x32xf32>
    %356 = arith.truncf %355 : vector<32x32xf32> to vector<32x32xbf16>
    %c1_99 = arith.constant 1 : index
    %c0_100 = arith.constant 0 : index
    %c0_101 = arith.constant 0 : index
    %357 = vector.load %arg6[%c1_99, %c0_100, %c0_101] : memref<2x32x32xbf16, #tpu.memory_space<vmem>>, vector<1x32x32xbf16>
    %358 = vector.shape_cast %357 : vector<1x32x32xbf16> to vector<32x32xbf16>
    %cst_102 = arith.constant dense<0.000000e+00> : vector<32x32xf32>
    %359 = tpu.matmul %356, %358, %cst_102 {dimension_numbers = #tpu.dot_dimension_numbers<[1], [0], [0], [1], [0, 0, 1, 1], [], []>} : vector<32x32xbf16>, vector<32x32xbf16>, vector<32x32xf32> -> vector<32x32xf32>
    %360 = vector.broadcast %236 : vector<1x32xf32> to vector<32x32xf32>
    %361 = arith.addf %359, %360 : vector<32x32xf32>
    %362 = arith.addf %233, %361 : vector<32x32xf32>
    %cst_103 = arith.constant dense<0.000000e+00> : vector<32xf32>
    %363 = vector.multi_reduction <add>, %362, %cst_103 [1] : vector<32x32xf32> to vector<32xf32>
    %364 = vector.shape_cast %363 : vector<32xf32> to vector<32x1xf32>
    %cst_104 = arith.constant 3.200000e+01 : f32
    %365 = vector.broadcast %cst_104 : f32 to vector<32x1xf32>
    %366 = arith.divf %364, %365 : vector<32x1xf32>
    %367 = vector.broadcast %366 : vector<32x1xf32> to vector<32x32xf32>
    %368 = arith.subf %362, %367 : vector<32x32xf32>
    %369 = arith.mulf %368, %368 : vector<32x32xf32>
    %cst_105 = arith.constant dense<0.000000e+00> : vector<32xf32>
    %370 = vector.multi_reduction <add>, %369, %cst_105 [1] : vector<32x32xf32> to vector<32xf32>
    %371 = vector.shape_cast %370 : vector<32xf32> to vector<32x1xf32>
    %cst_106 = arith.constant 3.200000e+01 : f32
    %372 = vector.broadcast %cst_106 : f32 to vector<32x1xf32>
    %373 = arith.divf %371, %372 : vector<32x1xf32>
    %374 = vector.broadcast %366 : vector<32x1xf32> to vector<32x32xf32>
    %375 = arith.subf %362, %374 : vector<32x32xf32>
    %cst_107 = arith.constant 9.99999996E-13 : f32
    %376 = vector.broadcast %cst_107 : f32 to vector<32x1xf32>
    %377 = arith.addf %373, %376 : vector<32x1xf32>
    %378 = math.rsqrt %377 : vector<32x1xf32>
    %379 = vector.broadcast %378 : vector<32x1xf32> to vector<32x32xf32>
    %380 = arith.mulf %375, %379 : vector<32x32xf32>
    %381 = vector.broadcast %237 : vector<1x32xf32> to vector<32x32xf32>
    %382 = arith.mulf %380, %381 : vector<32x32xf32>
    %383 = vector.broadcast %238 : vector<1x32xf32> to vector<32x32xf32>
    %384 = arith.addf %382, %383 : vector<32x32xf32>
    %385 = arith.truncf %384 : vector<32x32xf32> to vector<32x32xbf16>
    %c1_108 = arith.constant 1 : index
    %c0_109 = arith.constant 0 : index
    %c0_110 = arith.constant 0 : index
    %386 = vector.load %arg7[%c1_108, %c0_109, %c0_110] : memref<2x32x64xbf16, #tpu.memory_space<vmem>>, vector<1x32x64xbf16>
    %387 = vector.shape_cast %386 : vector<1x32x64xbf16> to vector<32x64xbf16>
    %cst_111 = arith.constant dense<0.000000e+00> : vector<32x64xf32>
    %388 = tpu.matmul %385, %387, %cst_111 {dimension_numbers = #tpu.dot_dimension_numbers<[1], [0], [0], [1], [0, 0, 1, 1], [], []>} : vector<32x32xbf16>, vector<32x64xbf16>, vector<32x64xf32> -> vector<32x64xf32>
    %c1_112 = arith.constant 1 : index
    %c0_113 = arith.constant 0 : index
    %c0_114 = arith.constant 0 : index
    %389 = vector.load %arg8[%c1_112, %c0_113, %c0_114] : memref<2x1x64xf32, #tpu.memory_space<vmem>>, vector<1x1x64xf32>
    %390 = vector.shape_cast %389 : vector<1x1x64xf32> to vector<1x64xf32>
    %391 = vector.broadcast %390 : vector<1x64xf32> to vector<32x64xf32>
    %392 = arith.addf %388, %391 : vector<32x64xf32>
    %393 = arith.mulf %392, %392 : vector<32x64xf32>
    %394 = arith.mulf %392, %393 : vector<32x64xf32>
    %cst_115 = arith.constant 4.471500e-02 : f32
    %395 = vector.broadcast %cst_115 : f32 to vector<32x64xf32>
    %396 = arith.mulf %395, %394 : vector<32x64xf32>
    %397 = arith.addf %392, %396 : vector<32x64xf32>
    %cst_116 = arith.constant 0.797884583 : f32
    %398 = vector.broadcast %cst_116 : f32 to vector<32x64xf32>
    %399 = arith.mulf %398, %397 : vector<32x64xf32>
    %400 = math.tanh %399 : vector<32x64xf32>
    %cst_117 = arith.constant 1.000000e+00 : f32
    %401 = vector.broadcast %cst_117 : f32 to vector<32x64xf32>
    %402 = arith.addf %401, %400 : vector<32x64xf32>
    %cst_118 = arith.constant 5.000000e-01 : f32
    %403 = vector.broadcast %cst_118 : f32 to vector<32x64xf32>
    %404 = arith.mulf %403, %402 : vector<32x64xf32>
    %405 = arith.mulf %392, %404 : vector<32x64xf32>
    %406 = arith.truncf %405 : vector<32x64xf32> to vector<32x64xbf16>
    %c1_119 = arith.constant 1 : index
    %c0_120 = arith.constant 0 : index
    %c0_121 = arith.constant 0 : index
    %407 = vector.load %arg9[%c1_119, %c0_120, %c0_121] : memref<2x64x32xbf16, #tpu.memory_space<vmem>>, vector<1x64x32xbf16>
    %408 = vector.shape_cast %407 : vector<1x64x32xbf16> to vector<64x32xbf16>
    %cst_122 = arith.constant dense<0.000000e+00> : vector<32x32xf32>
    %409 = tpu.matmul %406, %408, %cst_122 {dimension_numbers = #tpu.dot_dimension_numbers<[1], [0], [0], [1], [0, 0, 1, 1], [], []>} : vector<32x64xbf16>, vector<64x32xbf16>, vector<32x32xf32> -> vector<32x32xf32>
    %410 = vector.broadcast %239 : vector<1x32xf32> to vector<32x32xf32>
    %411 = arith.addf %409, %410 : vector<32x32xf32>
    %412 = arith.addf %384, %411 : vector<32x32xf32>
    %cst_123 = arith.constant dense<0.000000e+00> : vector<32xf32>
    %413 = vector.multi_reduction <add>, %412, %cst_123 [1] : vector<32x32xf32> to vector<32xf32>
    %414 = vector.shape_cast %413 : vector<32xf32> to vector<32x1xf32>
    %cst_124 = arith.constant 3.200000e+01 : f32
    %415 = vector.broadcast %cst_124 : f32 to vector<32x1xf32>
    %416 = arith.divf %414, %415 : vector<32x1xf32>
    %417 = vector.broadcast %416 : vector<32x1xf32> to vector<32x32xf32>
    %418 = arith.subf %412, %417 : vector<32x32xf32>
    %419 = arith.mulf %418, %418 : vector<32x32xf32>
    %cst_125 = arith.constant dense<0.000000e+00> : vector<32xf32>
    %420 = vector.multi_reduction <add>, %419, %cst_125 [1] : vector<32x32xf32> to vector<32xf32>
    %421 = vector.shape_cast %420 : vector<32xf32> to vector<32x1xf32>
    %cst_126 = arith.constant 3.200000e+01 : f32
    %422 = vector.broadcast %cst_126 : f32 to vector<32x1xf32>
    %423 = arith.divf %421, %422 : vector<32x1xf32>
    %424 = vector.broadcast %416 : vector<32x1xf32> to vector<32x32xf32>
    %425 = arith.subf %412, %424 : vector<32x32xf32>
    %cst_127 = arith.constant 9.99999996E-13 : f32
    %426 = vector.broadcast %cst_127 : f32 to vector<32x1xf32>
    %427 = arith.addf %423, %426 : vector<32x1xf32>
    %428 = math.rsqrt %427 : vector<32x1xf32>
    %429 = vector.broadcast %428 : vector<32x1xf32> to vector<32x32xf32>
    %430 = arith.mulf %425, %429 : vector<32x32xf32>
    %431 = vector.broadcast %240 : vector<1x32xf32> to vector<32x32xf32>
    %432 = arith.mulf %430, %431 : vector<32x32xf32>
    %433 = vector.broadcast %241 : vector<1x32xf32> to vector<32x32xf32>
    %434 = arith.addf %432, %433 : vector<32x32xf32>
    %c0_128 = arith.constant 0 : index
    %c0_129 = arith.constant 0 : index
    %435 = vector.load %arg1[%c0_128, %c0_129] : memref<4x8xi32, #tpu.memory_space<vmem>>, vector<4x8xi32>
    %c4_i32 = arith.constant 4 : i32
    %436 = vector.broadcast %c4_i32 : i32 to vector<4x8xi32>
    %437 = arith.cmpi eq, %435, %436 : vector<4x8xi32>
    %438 = arith.extui %437 : vector<4x8xi1> to vector<4x8xi32>
    %439 = arith.sitofp %438 : vector<4x8xi32> to vector<4x8xf32>
    %440 = vector.shape_cast %434 : vector<32x32xf32> to vector<4x8x32xf32>
    %441 = vector.shape_cast %439 : vector<4x8xf32> to vector<4x8x1xf32>
    %442 = vector.broadcast %441 : vector<4x8x1xf32> to vector<4x8x32xf32>
    %443 = arith.mulf %440, %442 : vector<4x8x32xf32>
    %cst_130 = arith.constant dense<0.000000e+00> : vector<4x32xf32>
    %444 = vector.multi_reduction <add>, %443, %cst_130 [1] : vector<4x8x32xf32> to vector<4x32xf32>
    %445 = vector.extract_strided_slice %444 {offsets = [0, 0], sizes = [2, 32], strides = [1, 1]} : vector<4x32xf32> to vector<2x32xf32>
    %446 = vector.extract_strided_slice %444 {offsets = [2, 0], sizes = [2, 32], strides = [1, 1]} : vector<4x32xf32> to vector<2x32xf32>
    %447 = arith.subf %445, %446 : vector<2x32xf32>
    %c0_131 = arith.constant 0 : index
    %c0_132 = arith.constant 0 : index
    %448 = vector.load %arg11[%c0_131, %c0_132] : memref<2x32xf32, #tpu.memory_space<vmem>>, vector<2x32xf32>
    tpu.vector_store %arg11[%c0_131, %c0_132], %447 {strides = array<i32>} : memref<2x32xf32, #tpu.memory_space<vmem>>, vector<2x32xf32>,
    return
  }
}

</mosaic_0001>

<llo_original>
// kernel: prompt_bert_forward.1
$region0: #{prompt_bert_forward.1}
  #allocation0 [shape = 'u32[]', space=smem, size = 0x4, offset = 0x4, fixed_abs, tag = 'smem constant byte address 0x4 - core index']
  #allocation1 [shape = 'u32[72,128]{1,0:T(1,128)}', space=vmem, size = 0x9000, scoped, tag = 'internal scratch']
  %s0 = inlined_call_operand.vmem [shape: f32[32,32], index: 0, kind: input, shape index: {}]
  %s1 = inlined_call_operand.vmem [shape: s32[4,8], index: 1, kind: input, shape index: {}]
  %s2 = inlined_call_operand.vmem [shape: s32[4,8], index: 2, kind: input, shape index: {}]
  %s3 = inlined_call_operand.vmem [shape: f32[2,32], index: 3, kind: input, shape index: {}]
  %s4 = inlined_call_operand.vmem [shape: bf16[2,32,96], index: 4, kind: input, shape index: {}]
  %s5 = inlined_call_operand.vmem [shape: f32[2,1,96], index: 5, kind: input, shape index: {}]
  %s6 = inlined_call_operand.vmem [shape: bf16[2,32,32], index: 6, kind: input, shape index: {}]
  %s7 = inlined_call_operand.vmem [shape: bf16[2,32,64], index: 7, kind: input, shape index: {}]
  %s8 = inlined_call_operand.vmem [shape: f32[2,1,64], index: 8, kind: input, shape index: {}]
  %s9 = inlined_call_operand.vmem [shape: bf16[2,64,32], index: 9, kind: input, shape index: {}]
  %s10 = inlined_call_operand.vmem [shape: f32[2,6,32], index: 10, kind: input, shape index: {}]
  %s11 = inlined_call_operand.hbm [shape: f32[2,32], index: 11, kind: output, shape index: {}]
  %s12 = sld [smem:[#allocation0]]
  $region54: #{prompt_bert_forward.1} parent=0
    _
  %s14 = ssub.s32 1, %s12
  %s15 = scalar_select 0, %s14, %s12
  $region1: #{prompt_bert_forward.1} parent=0
    #allocation2 [shape = 'u8[1024]{0}', space=vmem, size = 0x400, scoped, tag = 'output window, operand 0, single buffered']
    #allocation3 [shape = 's32[1]{0}', space=sflag, size = 0x4, scoped, tag = 'scoped memory for prompt_bert_forward.1']
    %16 = vsyncpa [#allocation3], 0
    // Predicated region
    $region2: #{prompt_bert_forward.1} parent=1 // pred_check
      _
    $region3: #{prompt_bert_forward.1} parent=1 // pred_check_branch
      %18 = sbr.rel (0) target = $region5
    $region4: #{prompt_bert_forward.1} parent=1 // pred_region
      _
    $region5: #{prompt_bert_forward.1} parent=1 // pred_fallthru
      _
    // Predicated region
    $region6: #{prompt_bert_forward.1} parent=1 // pred_check
      _
    $region7: #{prompt_bert_forward.1} parent=1 // pred_check_branch
      %20 = sbr.rel (0) target = $region9
    $region8: #{prompt_bert_forward.1} parent=1 // pred_region
      _
    $region9: #{prompt_bert_forward.1} parent=1 // pred_fallthru
      _
    // Predicated region
    $region10: #{prompt_bert_forward.1} parent=1 // pred_check
      _
    $region11: #{prompt_bert_forward.1} parent=1 // pred_check_branch
      %22 = sbr.rel (0) target = $region13
    $region12: #{prompt_bert_forward.1} parent=1 // pred_region
      _
    $region13: #{prompt_bert_forward.1} parent=1 // pred_fallthru
      _
    // Predicated region
    $region14: #{prompt_bert_forward.1} parent=1 // pred_check
      _
    $region15: #{prompt_bert_forward.1} parent=1 // pred_check_branch
      %24 = sbr.rel (0) target = $region17
    $region16: #{prompt_bert_forward.1} parent=1 // pred_region
      _
    $region17: #{prompt_bert_forward.1} parent=1 // pred_fallthru
      _
    // Predicated region
    $region18: #{prompt_bert_forward.1} parent=1 // pred_check
      _
    $region19: #{prompt_bert_forward.1} parent=1 // pred_check_branch
      %26 = sbr.rel (0) target = $region21
    $region20: #{prompt_bert_forward.1} parent=1 // pred_region
      _
    $region21: #{prompt_bert_forward.1} parent=1 // pred_fallthru
      _
    // Predicated region
    $region22: #{prompt_bert_forward.1} parent=1 // pred_check
      _
    $region23: #{prompt_bert_forward.1} parent=1 // pred_check_branch
      %28 = sbr.rel (0) target = $region25
    $region24: #{prompt_bert_forward.1} parent=1 // pred_region
      _
    $region25: #{prompt_bert_forward.1} parent=1 // pred_fallthru
      _
    // Predicated region
    $region26: #{prompt_bert_forward.1} parent=1 // pred_check
      _
    $region27: #{prompt_bert_forward.1} parent=1 // pred_check_branch
      %30 = sbr.rel (0) target = $region29
    $region28: #{prompt_bert_forward.1} parent=1 // pred_region
      _
    $region29: #{prompt_bert_forward.1} parent=1 // pred_fallthru
      _
    // Predicated region
    $region30: #{prompt_bert_forward.1} parent=1 // pred_check
      _
    $region31: #{prompt_bert_forward.1} parent=1 // pred_check_branch
      %32 = sbr.rel (0) target = $region33
    $region32: #{prompt_bert_forward.1} parent=1 // pred_region
      _
    $region33: #{prompt_bert_forward.1} parent=1 // pred_fallthru
      _
    // Predicated region
    $region34: #{prompt_bert_forward.1} parent=1 // pred_check
      _
    $region35: #{prompt_bert_forward.1} parent=1 // pred_check_branch
      %34 = sbr.rel (0) target = $region37
    $region36: #{prompt_bert_forward.1} parent=1 // pred_region
      _
    $region37: #{prompt_bert_forward.1} parent=1 // pred_fallthru
      _
    // Predicated region
    $region38: #{prompt_bert_forward.1} parent=1 // pred_check
      _
    $region39: #{prompt_bert_forward.1} parent=1 // pred_check_branch
      %36 = sbr.rel (0) target = $region41
    $region40: #{prompt_bert_forward.1} parent=1 // pred_region
      _
    $region41: #{prompt_bert_forward.1} parent=1 // pred_fallthru
      _
    // Predicated region
    $region42: #{prompt_bert_forward.1} parent=1 // pred_check
      _
    $region43: #{prompt_bert_forward.1} parent=1 // pred_check_branch
      %38 = sbr.rel (0) target = $region45
    $region44: #{prompt_bert_forward.1} parent=1 // pred_region
      _
    $region45: #{prompt_bert_forward.1} parent=1 // pred_fallthru
      _
    %v40 = vld [vmem:[%s2] sm:$0xf]
    %v41 = vcvt.s32.f32 %v40
    %v42 = vsub.f32 1.0, %v41
    %v43 = vmul.f32 %v42, -1e+09
    %v45 = vrot.slane %v43, 1
    %v46 = vrot.slane %v43, 2
    %v47 = vrot.slane %v43, 3
    %v48 = vld [vmem:[%s3] sm:$0x3]
    %v49 = vld [vmem:[%s0] sm:$0xff]
    %v50 = vld [vmem:[%s0 + $0x8] sm:$0xff]
    %v51 = vld [vmem:[%s0 + $0x10] sm:$0xff]
    %v52 = vld [vmem:[%s0 + $0x18] sm:$0xff]
    %vm53 = vcmask 261120
    %v54 = vsel %vm53, %v49, 0.0
    %55 = vadd.xlane.f32.xlu0 %v54
    %v56 = vpop.xlane.xlu0 %55
    %v57 = vsel %vm53, %v50, 0.0
    %58 = vadd.xlane.f32.xlu0 %v57
    %v59 = vpop.xlane.xlu0 %58
    %v60 = vsel %vm53, %v51, 0.0
    %61 = vadd.xlane.f32.xlu0 %v60
    %v62 = vpop.xlane.xlu0 %61
    %v63 = vsel %vm53, %v52, 0.0
    %64 = vadd.xlane.f32.xlu0 %v63
    %v65 = vpop.xlane.xlu0 %64
    %v66 = vrcp.pop 32.0
    %v67 = vmul.f32 32.0, %v66
    %v68 = vsub.f32 1.0, %v67
    %v69 = vmul.f32 %v66, %v68
    %v70 = vadd.f32 %v66, %v69
    %vm71 = vweird.f32 %v66
    %v72 = vsel %vm71, %v66, %v70
    %v73 = vmul.f32 %v56, %v72
    %v74 = vmul.f32 %v59, %v72
    %v75 = vmul.f32 %v62, %v72
    %v76 = vmul.f32 %v65, %v72
    %v77 = vsub.f32 %v49, %v73
    %v78 = vsub.f32 %v50, %v74
    %v79 = vsub.f32 %v51, %v75
    %v80 = vsub.f32 %v52, %v76
    %v81 = vmul.f32 %v77, %v77
    %v82 = vmul.f32 %v78, %v78
    %v83 = vmul.f32 %v79, %v79
    %v84 = vmul.f32 %v80, %v80
    %v85 = vsel %vm53, %v81, 0.0
    %86 = vadd.xlane.f32.xlu0 %v85
    %v87 = vpop.xlane.xlu0 %86
    %v88 = vsel %vm53, %v82, 0.0
    %89 = vadd.xlane.f32.xlu0 %v88
    %v90 = vpop.xlane.xlu0 %89
    %v91 = vsel %vm53, %v83, 0.0
    %92 = vadd.xlane.f32.xlu0 %v91
    %v93 = vpop.xlane.xlu0 %92
    %v94 = vsel %vm53, %v84, 0.0
    %95 = vadd.xlane.f32.xlu0 %v94
    %v96 = vpop.xlane.xlu0 %95
    %v97 = vmul.f32 %v87, %v72
    %v98 = vmul.f32 %v90, %v72
    %v99 = vmul.f32 %v93, %v72
    %v100 = vmul.f32 %v96, %v72
    %v101 = vadd.f32 %v97, 1e-12
    %v102 = vadd.f32 %v98, 1e-12
    %v103 = vadd.f32 %v99, 1e-12
    %v104 = vadd.f32 %v100, 1e-12
    %v105 = vrsqrt.pop %v101
    %v106 = vmul.f32 %v105, %v101
    %v107 = vmul.f32 %v106, %v105
    %v108 = vmul.f32 0.5, %v107
    %v109 = vsub.f32 1.5, %v108
    %v110 = vmul.f32 %v105, %v109
    %vm111 = vweird.f32 %v101
    %vm112 = vweird.f32 %v105
    %vm113 = vmor %vm111, %vm112
    %v114 = vsel %vm113, %v105, %v110
    %v115 = vrsqrt.pop %v102
    %v116 = vmul.f32 %v115, %v102
    %v117 = vmul.f32 %v116, %v115
    %v118 = vmul.f32 0.5, %v117
    %v119 = vsub.f32 1.5, %v118
    %v120 = vmul.f32 %v115, %v119
    %vm121 = vweird.f32 %v102
    %vm122 = vweird.f32 %v115
    %vm123 = vmor %vm121, %vm122
    %v124 = vsel %vm123, %v115, %v120
    %v125 = vrsqrt.pop %v103
    %v126 = vmul.f32 %v125, %v103
    %v127 = vmul.f32 %v126, %v125
    %v128 = vmul.f32 0.5, %v127
    %v129 = vsub.f32 1.5, %v128
    %v130 = vmul.f32 %v125, %v129
    %vm131 = vweird.f32 %v103
    %vm132 = vweird.f32 %v125
    %vm133 = vmor %vm131, %vm132
    %v134 = vsel %vm133, %v125, %v130
    %v135 = vrsqrt.pop %v104
    %v136 = vmul.f32 %v135, %v104
    %v137 = vmul.f32 %v136, %v135
    %v138 = vmul.f32 0.5, %v137
    %v139 = vsub.f32 1.5, %v138
    %v140 = vmul.f32 %v135, %v139
    %vm141 = vweird.f32 %v104
    %vm142 = vweird.f32 %v135
    %vm143 = vmor %vm141, %vm142
    %v144 = vsel %vm143, %v135, %v140
    %v145 = vmul.f32 %v77, %v114
    %v146 = vmul.f32 %v78, %v124
    %v147 = vmul.f32 %v79, %v134
    %v148 = vmul.f32 %v80, %v144
    %v149 = vperm.slane %v48, 0
    %v150 = vmul.f32 %v145, %v149
    %v151 = vmul.f32 %v146, %v149
    %v152 = vmul.f32 %v147, %v149
    %v153 = vmul.f32 %v148, %v149
    %v154 = vperm.slane %v48, 1
    %v155 = vadd.f32 %v150, %v154
    %v156 = vadd.f32 %v151, %v154
    %v157 = vadd.f32 %v152, %v154
    %v158 = vadd.f32 %v153, %v154
    %v159 = vld [vmem:[%s10] sm:$0x3f]
    %v160 = vpack.c.bf16 %v156, %v155
    %v161 = vpack.c.bf16 %v158, %v157
    %v162 = vld [vmem:[%s4] sm:$0xf]
    %v163 = vld [vmem:[%s4 + $0x4] sm:$0xf]
    %v164 = vld [vmem:[%s4 + $0x8] sm:$0xf]
    %v165 = vld [vmem:[%s4 + $0xc] sm:$0xf]
    %v166 = vld [vmem:[%s5] sm:$0x1]
    %v168 = vperm.slane %v166, 0
    %v174 = vunpack.c.l.b16 %v162
    %v175 = vunpack.c.l.b16 %v163
    %v176 = vunpack.c.l.b16 %v164
    %v177 = vunpack.c.l.b16 %v165
    %v178 = vpack.c.b16 %v175, %v174
    %v179 = vpack.c.b16 %v177, %v176
    %v183 = vsel %vm53, %v160, 0
    %v186 = vsel %vm53, %v161, 0
    %188 = vmatpush.bf16.msra.mxu0 0
    %189 = vmatpush.bf16.msra.mxu0 0
    %190 = vmatpush.bf16.msra.mxu0 0
    %191 = vmatpush.bf16.msra.mxu0 0
    %192 = vmatpush.bf16.msra.mxu0 0
    %193 = vmatpush.bf16.msra.mxu0 0
    %194 = vmatpush.bf16.msra.mxu0 %v179
    %195 = vmatpush.bf16.msra.mxu0 %v178
    %196 = vmatmul.bf16.gmra.mxu0 %v183
    %v197 = vpop.f32.mrf.mxu0
    %v198 = vadd.f32 %v168, %v197
    %v199 = vpop.f32.mrf.mxu0
    %v200 = vadd.f32 %v168, %v199
    %201 = vmatmul.bf16.gmra.mxu0 %v186
    %v202 = vpop.f32.mrf.mxu0
    %v203 = vadd.f32 %v168, %v202
    %v204 = vpop.f32.mrf.mxu0
    %v205 = vadd.f32 %v168, %v204
    %206 = vdwg.mxu0
    %v207 = vpack.c.bf16 %v198, %v198
    %v208 = vpack.c.bf16 %v200, %v200
    %v209 = vpack.c.bf16 %v203, %v203
    %v210 = vpack.c.bf16 %v205, %v205
    %v212 = vunpack.c.l.b16 %v207
    %v213 = vpack.c.b16 %v212, %v212
    %214 = vrot.lane.b32.xlu0 %v213, 96
    %v215 = vpop.permute.xlu0 %214
    %vm216 = vcmask 64512
    %v218 = vsel %vm216, %v207, 0
    %v221 = vsel %vm216, %v215, 0
    %223 = vmatpush.bf16.xpose.msra.mxu0 0
    %224 = vmatpush.bf16.xpose.msra.mxu0 0
    %225 = vmatpush.bf16.xpose.msra.mxu0 0
    %226 = vmatpush.bf16.xpose.msra.mxu0 0
    %227 = vmatpush.bf16.xpose.msra.mxu0 0
    %228 = vmatpush.bf16.xpose.msra.mxu0 0
    %229 = vmatpush.bf16.xpose.msra.mxu0 0
    %230 = vmatpush.bf16.xpose.msra.mxu0 %v221
    %231 = vmatmul.bf16.gmra.mxu0 %v218
    %v232 = vpop.f32.mrf.mxu0
    %v233 = vadd.f32 0.0, %v232
    %v234 = vpop.f32.mrf.mxu0
    %235 = vdwg.mxu0
    %v237 = vunpack.c.l.b16 %v208
    %v238 = vpack.c.b16 %v237, %v237
    %239 = vrot.lane.b32.xlu0 %v238, 96
    %v240 = vpop.permute.xlu0 %239
    %v242 = vsel %vm216, %v208, 0
    %v245 = vsel %vm216, %v240, 0
    %247 = vmatpush.bf16.xpose.msra.mxu0 0
    %248 = vmatpush.bf16.xpose.msra.mxu0 0
    %249 = vmatpush.bf16.xpose.msra.mxu0 0
    %250 = vmatpush.bf16.xpose.msra.mxu0 0
    %251 = vmatpush.bf16.xpose.msra.mxu0 0
    %252 = vmatpush.bf16.xpose.msra.mxu0 0
    %253 = vmatpush.bf16.xpose.msra.mxu0 0
    %254 = vmatpush.bf16.xpose.msra.mxu0 %v245
    %255 = vmatmul.bf16.gmra.mxu0 %v242
    %v256 = vpop.f32.mrf.mxu0
    %v257 = vadd.f32 0.0, %v256
    %v258 = vpop.f32.mrf.mxu0
    %259 = vdwg.mxu0
    %v261 = vunpack.c.l.b16 %v209
    %v262 = vpack.c.b16 %v261, %v261
    %263 = vrot.lane.b32.xlu0 %v262, 96
    %v264 = vpop.permute.xlu0 %263
    %v266 = vsel %vm216, %v209, 0
    %v269 = vsel %vm216, %v264, 0
    %271 = vmatpush.bf16.xpose.msra.mxu0 0
    %272 = vmatpush.bf16.xpose.msra.mxu0 0
    %273 = vmatpush.bf16.xpose.msra.mxu0 0
    %274 = vmatpush.bf16.xpose.msra.mxu0 0
    %275 = vmatpush.bf16.xpose.msra.mxu0 0
    %276 = vmatpush.bf16.xpose.msra.mxu0 0
    %277 = vmatpush.bf16.xpose.msra.mxu0 0
    %278 = vmatpush.bf16.xpose.msra.mxu0 %v269
    %279 = vmatmul.bf16.gmra.mxu0 %v266
    %v280 = vpop.f32.mrf.mxu0
    %v281 = vadd.f32 0.0, %v280
    %v282 = vpop.f32.mrf.mxu0
    %283 = vdwg.mxu0
    %v285 = vunpack.c.l.b16 %v210
    %v286 = vpack.c.b16 %v285, %v285
    %287 = vrot.lane.b32.xlu0 %v286, 96
    %v288 = vpop.permute.xlu0 %287
    %v290 = vsel %vm216, %v210, 0
    %v293 = vsel %vm216, %v288, 0
    %295 = vmatpush.bf16.xpose.msra.mxu0 0
    %296 = vmatpush.bf16.xpose.msra.mxu0 0
    %297 = vmatpush.bf16.xpose.msra.mxu0 0
    %298 = vmatpush.bf16.xpose.msra.mxu0 0
    %299 = vmatpush.bf16.xpose.msra.mxu0 0
    %300 = vmatpush.bf16.xpose.msra.mxu0 0
    %301 = vmatpush.bf16.xpose.msra.mxu0 0
    %302 = vmatpush.bf16.xpose.msra.mxu0 %v293
    %303 = vmatmul.bf16.gmra.mxu0 %v290
    %v304 = vpop.f32.mrf.mxu0
    %v305 = vadd.f32 0.0, %v304
    %v306 = vpop.f32.mrf.mxu0
    %307 = vdwg.mxu0
    %v308 = vmul.f32 %v233, 0.35355338
    %v309 = vmul.f32 %v257, 0.35355338
    %v310 = vmul.f32 %v281, 0.35355338
    %v311 = vmul.f32 %v305, 0.35355338
    %v312 = vperm.slane %v43, 0
    %v313 = vperm.slane %v45, 0
    %v314 = vperm.slane %v46, 0
    %v315 = vperm.slane %v47, 0
    %v320 = vadd.f32 %v308, %v312
    %v321 = vadd.f32 %v309, %v313
    %v322 = vadd.f32 %v310, %v314
    %v323 = vadd.f32 %v311, %v315
    %v324 = vsel %vm216, %v320, -inf
    %325 = vmax.xlane.f32.xlu0 %v324
    %v326 = vpop.xlane.xlu0 %325
    %v327 = vsel %vm216, %v321, -inf
    %328 = vmax.xlane.f32.xlu0 %v327
    %v329 = vpop.xlane.xlu0 %328
    %v330 = vsel %vm216, %v322, -inf
    %331 = vmax.xlane.f32.xlu0 %v330
    %v332 = vpop.xlane.xlu0 %331
    %v333 = vsel %vm216, %v323, -inf
    %334 = vmax.xlane.f32.xlu0 %v333
    %v335 = vpop.xlane.xlu0 %334
    %v336 = vsub.f32 %v320, %v326
    %v337 = vsub.f32 %v321, %v329
    %v338 = vsub.f32 %v322, %v332
    %v339 = vsub.f32 %v323, %v335
    %v340 = vmul.f32 %v336, 1.442695
    %v341 = vpow.pop %v340
    %v342 = vmul.f32 %v337, 1.442695
    %v343 = vpow.pop %v342
    %v344 = vmul.f32 %v338, 1.442695
    %v345 = vpow.pop %v344
    %v346 = vmul.f32 %v339, 1.442695
    %v347 = vpow.pop %v346
    %v348 = vsel %vm216, %v341, 0.0
    %349 = vadd.xlane.f32.xlu0 %v348
    %v350 = vpop.xlane.xlu0 %349
    %v351 = vsel %vm216, %v343, 0.0
    %352 = vadd.xlane.f32.xlu0 %v351
    %v353 = vpop.xlane.xlu0 %352
    %v354 = vsel %vm216, %v345, 0.0
    %355 = vadd.xlane.f32.xlu0 %v354
    %v356 = vpop.xlane.xlu0 %355
    %v357 = vsel %vm216, %v347, 0.0
    %358 = vadd.xlane.f32.xlu0 %v357
    %v359 = vpop.xlane.xlu0 %358
    %v360 = vrcp.pop %v350
    %v361 = vrcp.pop %v353
    %v362 = vrcp.pop %v356
    %v363 = vrcp.pop %v359
    %v364 = vmul.f32 %v341, %v360
    %v365 = vmul.f32 %v343, %v361
    %v366 = vmul.f32 %v345, %v362
    %v367 = vmul.f32 %v347, %v363
    %v368 = vpack.c.bf16 %v364, %v364
    %v369 = vpack.c.bf16 %v365, %v365
    %v370 = vpack.c.bf16 %v366, %v366
    %v371 = vpack.c.bf16 %v367, %v367
    %372 = vrot.lane.b32.xlu0 %v213, 64
    %v373 = vpop.permute.xlu0 %372
    %v375 = vsel %vm216, %v368, 0
    %vm377 = vcmask 1043456
    %v379 = vsel %vm377, %v373, 0
    %381 = vmatpush.bf16.msra.mxu0 0
    %382 = vmatpush.bf16.msra.mxu0 0
    %383 = vmatpush.bf16.msra.mxu0 0
    %384 = vmatpush.bf16.msra.mxu0 0
    %385 = vmatpush.bf16.msra.mxu0 0
    %386 = vmatpush.bf16.msra.mxu0 0
    %387 = vmatpush.bf16.msra.mxu0 0
    %388 = vmatpush.bf16.msra.mxu0 %v379
    %389 = vmatmul.bf16.gmra.mxu0 %v375
    %v390 = vpop.f32.mrf.mxu0
    %v391 = vadd.f32 0.0, %v390
    %v392 = vpop.f32.mrf.mxu0
    %393 = vdwg.mxu0
    %394 = vrot.lane.b32.xlu0 %v238, 64
    %v395 = vpop.permute.xlu0 %394
    %v397 = vsel %vm216, %v369, 0
    %v400 = vsel %vm377, %v395, 0
    %402 = vmatpush.bf16.msra.mxu0 0
    %403 = vmatpush.bf16.msra.mxu0 0
    %404 = vmatpush.bf16.msra.mxu0 0
    %405 = vmatpush.bf16.msra.mxu0 0
    %406 = vmatpush.bf16.msra.mxu0 0
    %407 = vmatpush.bf16.msra.mxu0 0
    %408 = vmatpush.bf16.msra.mxu0 0
    %409 = vmatpush.bf16.msra.mxu0 %v400
    %410 = vmatmul.bf16.gmra.mxu0 %v397
    %v411 = vpop.f32.mrf.mxu0
    %v412 = vadd.f32 0.0, %v411
    %v413 = vpop.f32.mrf.mxu0
    %414 = vdwg.mxu0
    %415 = vrot.lane.b32.xlu0 %v262, 64
    %v416 = vpop.permute.xlu0 %415
    %v418 = vsel %vm216, %v370, 0
    %v421 = vsel %vm377, %v416, 0
    %423 = vmatpush.bf16.msra.mxu0 0
    %424 = vmatpush.bf16.msra.mxu0 0
    %425 = vmatpush.bf16.msra.mxu0 0
    %426 = vmatpush.bf16.msra.mxu0 0
    %427 = vmatpush.bf16.msra.mxu0 0
    %428 = vmatpush.bf16.msra.mxu0 0
    %429 = vmatpush.bf16.msra.mxu0 0
    %430 = vmatpush.bf16.msra.mxu0 %v421
    %431 = vmatmul.bf16.gmra.mxu0 %v418
    %v432 = vpop.f32.mrf.mxu0
    %v433 = vadd.f32 0.0, %v432
    %v434 = vpop.f32.mrf.mxu0
    %435 = vdwg.mxu0
    %436 = vrot.lane.b32.xlu0 %v286, 64
    %v437 = vpop.permute.xlu0 %436
    %v439 = vsel %vm216, %v371, 0
    %v442 = vsel %vm377, %v437, 0
    %444 = vmatpush.bf16.msra.mxu0 0
    %445 = vmatpush.bf16.msra.mxu0 0
    %446 = vmatpush.bf16.msra.mxu0 0
    %447 = vmatpush.bf16.msra.mxu0 0
    %448 = vmatpush.bf16.msra.mxu0 0
    %449 = vmatpush.bf16.msra.mxu0 0
    %450 = vmatpush.bf16.msra.mxu0 0
    %451 = vmatpush.bf16.msra.mxu0 %v442
    %452 = vmatmul.bf16.gmra.mxu0 %v439
    %v453 = vpop.f32.mrf.mxu0
    %v454 = vadd.f32 0.0, %v453
    %v455 = vpop.f32.mrf.mxu0
    %456 = vdwg.mxu0
    %457 = vrot.lane.b32.xlu0 %v213, 120
    %v458 = vpop.permute.xlu0 %457
    %459 = vrot.lane.b32.xlu0 %v213, 88
    %v460 = vpop.permute.xlu0 %459
    %v462 = vsel %vm216, %v458, 0
    %v465 = vsel %vm216, %v460, 0
    %467 = vmatpush.bf16.xpose.msra.mxu0 0
    %468 = vmatpush.bf16.xpose.msra.mxu0 0
    %469 = vmatpush.bf16.xpose.msra.mxu0 0
    %470 = vmatpush.bf16.xpose.msra.mxu0 0
    %471 = vmatpush.bf16.xpose.msra.mxu0 0
    %472 = vmatpush.bf16.xpose.msra.mxu0 0
    %473 = vmatpush.bf16.xpose.msra.mxu0 0
    %474 = vmatpush.bf16.xpose.msra.mxu0 %v465
    %475 = vmatmul.bf16.gmra.mxu0 %v462
    %v476 = vpop.f32.mrf.mxu0
    %v477 = vadd.f32 0.0, %v476
    %v478 = vpop.f32.mrf.mxu0
    %479 = vdwg.mxu0
    %480 = vrot.lane.b32.xlu0 %v238, 120
    %v481 = vpop.permute.xlu0 %480
    %482 = vrot.lane.b32.xlu0 %v238, 88
    %v483 = vpop.permute.xlu0 %482
    %v485 = vsel %vm216, %v481, 0
    %v488 = vsel %vm216, %v483, 0
    %490 = vmatpush.bf16.xpose.msra.mxu0 0
    %491 = vmatpush.bf16.xpose.msra.mxu0 0
    %492 = vmatpush.bf16.xpose.msra.mxu0 0
    %493 = vmatpush.bf16.xpose.msra.mxu0 0
    %494 = vmatpush.bf16.xpose.msra.mxu0 0
    %495 = vmatpush.bf16.xpose.msra.mxu0 0
    %496 = vmatpush.bf16.xpose.msra.mxu0 0
    %497 = vmatpush.bf16.xpose.msra.mxu0 %v488
    %498 = vmatmul.bf16.gmra.mxu0 %v485
    %v499 = vpop.f32.mrf.mxu0
    %v500 = vadd.f32 0.0, %v499
    %v501 = vpop.f32.mrf.mxu0
    %502 = vdwg.mxu0
    %503 = vrot.lane.b32.xlu0 %v262, 120
    %v504 = vpop.permute.xlu0 %503
    %505 = vrot.lane.b32.xlu0 %v262, 88
    %v506 = vpop.permute.xlu0 %505
    %v508 = vsel %vm216, %v504, 0
    %v511 = vsel %vm216, %v506, 0
    %513 = vmatpush.bf16.xpose.msra.mxu0 0
    %514 = vmatpush.bf16.xpose.msra.mxu0 0
    %515 = vmatpush.bf16.xpose.msra.mxu0 0
    %516 = vmatpush.bf16.xpose.msra.mxu0 0
    %517 = vmatpush.bf16.xpose.msra.mxu0 0
    %518 = vmatpush.bf16.xpose.msra.mxu0 0
    %519 = vmatpush.bf16.xpose.msra.mxu0 0
    %520 = vmatpush.bf16.xpose.msra.mxu0 %v511
    %521 = vmatmul.bf16.gmra.mxu0 %v508
    %v522 = vpop.f32.mrf.mxu0
    %v523 = vadd.f32 0.0, %v522
    %v524 = vpop.f32.mrf.mxu0
    %525 = vdwg.mxu0
    %526 = vrot.lane.b32.xlu0 %v286, 120
    %v527 = vpop.permute.xlu0 %526
    %528 = vrot.lane.b32.xlu0 %v286, 88
    %v529 = vpop.permute.xlu0 %528
    %v531 = vsel %vm216, %v527, 0
    %v534 = vsel %vm216, %v529, 0
    %536 = vmatpush.bf16.xpose.msra.mxu0 0
    %537 = vmatpush.bf16.xpose.msra.mxu0 0
    %538 = vmatpush.bf16.xpose.msra.mxu0 0
    %539 = vmatpush.bf16.xpose.msra.mxu0 0
    %540 = vmatpush.bf16.xpose.msra.mxu0 0
    %541 = vmatpush.bf16.xpose.msra.mxu0 0
    %542 = vmatpush.bf16.xpose.msra.mxu0 0
    %543 = vmatpush.bf16.xpose.msra.mxu0 %v534
    %544 = vmatmul.bf16.gmra.mxu0 %v531
    %v545 = vpop.f32.mrf.mxu0
    %v546 = vadd.f32 0.0, %v545
    %v547 = vpop.f32.mrf.mxu0
    %548 = vdwg.mxu0
    %v549 = vmul.f32 %v477, 0.35355338
    %v550 = vmul.f32 %v500, 0.35355338
    %v551 = vmul.f32 %v523, 0.35355338
    %v552 = vmul.f32 %v546, 0.35355338
    %v553 = vadd.f32 %v549, %v312
    %v554 = vadd.f32 %v550, %v313
    %v555 = vadd.f32 %v551, %v314
    %v556 = vadd.f32 %v552, %v315
    %v557 = vsel %vm216, %v553, -inf
    %558 = vmax.xlane.f32.xlu0 %v557
    %v559 = vpop.xlane.xlu0 %558
    %v560 = vsel %vm216, %v554, -inf
    %561 = vmax.xlane.f32.xlu0 %v560
    %v562 = vpop.xlane.xlu0 %561
    %v563 = vsel %vm216, %v555, -inf
    %564 = vmax.xlane.f32.xlu0 %v563
    %v565 = vpop.xlane.xlu0 %564
    %v566 = vsel %vm216, %v556, -inf
    %567 = vmax.xlane.f32.xlu0 %v566
    %v568 = vpop.xlane.xlu0 %567
    %v569 = vsub.f32 %v553, %v559
    %v570 = vsub.f32 %v554, %v562
    %v571 = vsub.f32 %v555, %v565
    %v572 = vsub.f32 %v556, %v568
    %v573 = vmul.f32 %v569, 1.442695
    %v574 = vpow.pop %v573
    %v575 = vmul.f32 %v570, 1.442695
    %v576 = vpow.pop %v575
    %v577 = vmul.f32 %v571, 1.442695
    %v578 = vpow.pop %v577
    %v579 = vmul.f32 %v572, 1.442695
    %v580 = vpow.pop %v579
    %v581 = vsel %vm216, %v574, 0.0
    %582 = vadd.xlane.f32.xlu0 %v581
    %v583 = vpop.xlane.xlu0 %582
    %v584 = vsel %vm216, %v576, 0.0
    %585 = vadd.xlane.f32.xlu0 %v584
    %v586 = vpop.xlane.xlu0 %585
    %v587 = vsel %vm216, %v578, 0.0
    %588 = vadd.xlane.f32.xlu0 %v587
    %v589 = vpop.xlane.xlu0 %588
    %v590 = vsel %vm216, %v580, 0.0
    %591 = vadd.xlane.f32.xlu0 %v590
    %v592 = vpop.xlane.xlu0 %591
    %v593 = vrcp.pop %v583
    %v594 = vrcp.pop %v586
    %v595 = vrcp.pop %v589
    %v596 = vrcp.pop %v592
    %v597 = vmul.f32 %v574, %v593
    %v598 = vmul.f32 %v576, %v594
    %v599 = vmul.f32 %v578, %v595
    %v600 = vmul.f32 %v580, %v596
    %v601 = vpack.c.bf16 %v597, %v597
    %v602 = vpack.c.bf16 %v598, %v598
    %v603 = vpack.c.bf16 %v599, %v599
    %v604 = vpack.c.bf16 %v600, %v600
    %605 = vrot.lane.b32.xlu0 %v213, 56
    %v606 = vpop.permute.xlu0 %605
    %v608 = vsel %vm216, %v601, 0
    %v611 = vsel %vm377, %v606, 0
    %613 = vmatpush.bf16.msra.mxu0 0
    %614 = vmatpush.bf16.msra.mxu0 0
    %615 = vmatpush.bf16.msra.mxu0 0
    %616 = vmatpush.bf16.msra.mxu0 0
    %617 = vmatpush.bf16.msra.mxu0 0
    %618 = vmatpush.bf16.msra.mxu0 0
    %619 = vmatpush.bf16.msra.mxu0 0
    %620 = vmatpush.bf16.msra.mxu0 %v611
    %621 = vmatmul.bf16.gmra.mxu0 %v608
    %v622 = vpop.f32.mrf.mxu0
    %v623 = vadd.f32 0.0, %v622
    %v624 = vpop.f32.mrf.mxu0
    %625 = vdwg.mxu0
    %626 = vrot.lane.b32.xlu0 %v238, 56
    %v627 = vpop.permute.xlu0 %626
    %v629 = vsel %vm216, %v602, 0
    %v632 = vsel %vm377, %v627, 0
    %634 = vmatpush.bf16.msra.mxu0 0
    %635 = vmatpush.bf16.msra.mxu0 0
    %636 = vmatpush.bf16.msra.mxu0 0
    %637 = vmatpush.bf16.msra.mxu0 0
    %638 = vmatpush.bf16.msra.mxu0 0
    %639 = vmatpush.bf16.msra.mxu0 0
    %640 = vmatpush.bf16.msra.mxu0 0
    %641 = vmatpush.bf16.msra.mxu0 %v632
    %642 = vmatmul.bf16.gmra.mxu0 %v629
    %v643 = vpop.f32.mrf.mxu0
    %v644 = vadd.f32 0.0, %v643
    %v645 = vpop.f32.mrf.mxu0
    %646 = vdwg.mxu0
    %647 = vrot.lane.b32.xlu0 %v262, 56
    %v648 = vpop.permute.xlu0 %647
    %v650 = vsel %vm216, %v603, 0
    %v653 = vsel %vm377, %v648, 0
    %655 = vmatpush.bf16.msra.mxu0 0
    %656 = vmatpush.bf16.msra.mxu0 0
    %657 = vmatpush.bf16.msra.mxu0 0
    %658 = vmatpush.bf16.msra.mxu0 0
    %659 = vmatpush.bf16.msra.mxu0 0
    %660 = vmatpush.bf16.msra.mxu0 0
    %661 = vmatpush.bf16.msra.mxu0 0
    %662 = vmatpush.bf16.msra.mxu0 %v653
    %663 = vmatmul.bf16.gmra.mxu0 %v650
    %v664 = vpop.f32.mrf.mxu0
    %v665 = vadd.f32 0.0, %v664
    %v666 = vpop.f32.mrf.mxu0
    %667 = vdwg.mxu0
    %668 = vrot.lane.b32.xlu0 %v286, 56
    %v669 = vpop.permute.xlu0 %668
    %v671 = vsel %vm216, %v604, 0
    %v674 = vsel %vm377, %v669, 0
    %676 = vmatpush.bf16.msra.mxu0 0
    %677 = vmatpush.bf16.msra.mxu0 0
    %678 = vmatpush.bf16.msra.mxu0 0
    %679 = vmatpush.bf16.msra.mxu0 0
    %680 = vmatpush.bf16.msra.mxu0 0
    %681 = vmatpush.bf16.msra.mxu0 0
    %682 = vmatpush.bf16.msra.mxu0 0
    %683 = vmatpush.bf16.msra.mxu0 %v674
    %684 = vmatmul.bf16.gmra.mxu0 %v671
    %v685 = vpop.f32.mrf.mxu0
    %v686 = vadd.f32 0.0, %v685
    %v687 = vpop.f32.mrf.mxu0
    %688 = vdwg.mxu0
    %689 = vrot.lane.b32.xlu0 %v213, 112
    %v690 = vpop.permute.xlu0 %689
    %691 = vrot.lane.b32.xlu0 %v213, 80
    %v692 = vpop.permute.xlu0 %691
    %v694 = vsel %vm216, %v690, 0
    %v697 = vsel %vm216, %v692, 0
    %699 = vmatpush.bf16.xpose.msra.mxu0 0
    %700 = vmatpush.bf16.xpose.msra.mxu0 0
    %701 = vmatpush.bf16.xpose.msra.mxu0 0
    %702 = vmatpush.bf16.xpose.msra.mxu0 0
    %703 = vmatpush.bf16.xpose.msra.mxu0 0
    %704 = vmatpush.bf16.xpose.msra.mxu0 0
    %705 = vmatpush.bf16.xpose.msra.mxu0 0
    %706 = vmatpush.bf16.xpose.msra.mxu0 %v697
    %707 = vmatmul.bf16.gmra.mxu0 %v694
    %v708 = vpop.f32.mrf.mxu0
    %v709 = vadd.f32 0.0, %v708
    %v710 = vpop.f32.mrf.mxu0
    %711 = vdwg.mxu0
    %712 = vrot.lane.b32.xlu0 %v238, 112
    %v713 = vpop.permute.xlu0 %712
    %714 = vrot.lane.b32.xlu0 %v238, 80
    %v715 = vpop.permute.xlu0 %714
    %v717 = vsel %vm216, %v713, 0
    %v720 = vsel %vm216, %v715, 0
    %722 = vmatpush.bf16.xpose.msra.mxu0 0
    %723 = vmatpush.bf16.xpose.msra.mxu0 0
    %724 = vmatpush.bf16.xpose.msra.mxu0 0
    %725 = vmatpush.bf16.xpose.msra.mxu0 0
    %726 = vmatpush.bf16.xpose.msra.mxu0 0
    %727 = vmatpush.bf16.xpose.msra.mxu0 0
    %728 = vmatpush.bf16.xpose.msra.mxu0 0
    %729 = vmatpush.bf16.xpose.msra.mxu0 %v720
    %730 = vmatmul.bf16.gmra.mxu0 %v717
    %v731 = vpop.f32.mrf.mxu0
    %v732 = vadd.f32 0.0, %v731
    %v733 = vpop.f32.mrf.mxu0
    %734 = vdwg.mxu0
    %735 = vrot.lane.b32.xlu0 %v262, 112
    %v736 = vpop.permute.xlu0 %735
    %737 = vrot.lane.b32.xlu0 %v262, 80
    %v738 = vpop.permute.xlu0 %737
    %v740 = vsel %vm216, %v736, 0
    %v743 = vsel %vm216, %v738, 0
    %745 = vmatpush.bf16.xpose.msra.mxu0 0
    %746 = vmatpush.bf16.xpose.msra.mxu0 0
    %747 = vmatpush.bf16.xpose.msra.mxu0 0
    %748 = vmatpush.bf16.xpose.msra.mxu0 0
    %749 = vmatpush.bf16.xpose.msra.mxu0 0
    %750 = vmatpush.bf16.xpose.msra.mxu0 0
    %751 = vmatpush.bf16.xpose.msra.mxu0 0
    %752 = vmatpush.bf16.xpose.msra.mxu0 %v743
    %753 = vmatmul.bf16.gmra.mxu0 %v740
    %v754 = vpop.f32.mrf.mxu0
    %v755 = vadd.f32 0.0, %v754
    %v756 = vpop.f32.mrf.mxu0
    %757 = vdwg.mxu0
    %758 = vrot.lane.b32.xlu0 %v286, 112
    %v759 = vpop.permute.xlu0 %758
    %760 = vrot.lane.b32.xlu0 %v286, 80
    %v761 = vpop.permute.xlu0 %760
    %v763 = vsel %vm216, %v759, 0
    %v766 = vsel %vm216, %v761, 0
    %768 = vmatpush.bf16.xpose.msra.mxu0 0
    %769 = vmatpush.bf16.xpose.msra.mxu0 0
    %770 = vmatpush.bf16.xpose.msra.mxu0 0
    %771 = vmatpush.bf16.xpose.msra.mxu0 0
    %772 = vmatpush.bf16.xpose.msra.mxu0 0
    %773 = vmatpush.bf16.xpose.msra.mxu0 0
    %774 = vmatpush.bf16.xpose.msra.mxu0 0
    %775 = vmatpush.bf16.xpose.msra.mxu0 %v766
    %776 = vmatmul.bf16.gmra.mxu0 %v763
    %v777 = vpop.f32.mrf.mxu0
    %v778 = vadd.f32 0.0, %v777
    %v779 = vpop.f32.mrf.mxu0
    %780 = vdwg.mxu0
    %v781 = vmul.f32 %v709, 0.35355338
    %v782 = vmul.f32 %v732, 0.35355338
    %v783 = vmul.f32 %v755, 0.35355338
    %v784 = vmul.f32 %v778, 0.35355338
    %v785 = vadd.f32 %v781, %v312
    %v786 = vadd.f32 %v782, %v313
    %v787 = vadd.f32 %v783, %v314
    %v788 = vadd.f32 %v784, %v315
    %v789 = vsel %vm216, %v785, -inf
    %790 = vmax.xlane.f32.xlu0 %v789
    %v791 = vpop.xlane.xlu0 %790
    %v792 = vsel %vm216, %v786, -inf
    %793 = vmax.xlane.f32.xlu0 %v792
    %v794 = vpop.xlane.xlu0 %793
    %v795 = vsel %vm216, %v787, -inf
    %796 = vmax.xlane.f32.xlu0 %v795
    %v797 = vpop.xlane.xlu0 %796
    %v798 = vsel %vm216, %v788, -inf
    %799 = vmax.xlane.f32.xlu0 %v798
    %v800 = vpop.xlane.xlu0 %799
    %v801 = vsub.f32 %v785, %v791
    %v802 = vsub.f32 %v786, %v794
    %v803 = vsub.f32 %v787, %v797
    %v804 = vsub.f32 %v788, %v800
    %v805 = vmul.f32 %v801, 1.442695
    %v806 = vpow.pop %v805
    %v807 = vmul.f32 %v802, 1.442695
    %v808 = vpow.pop %v807
    %v809 = vmul.f32 %v803, 1.442695
    %v810 = vpow.pop %v809
    %v811 = vmul.f32 %v804, 1.442695
    %v812 = vpow.pop %v811
    %v813 = vsel %vm216, %v806, 0.0
    %814 = vadd.xlane.f32.xlu0 %v813
    %v815 = vpop.xlane.xlu0 %814
    %v816 = vsel %vm216, %v808, 0.0
    %817 = vadd.xlane.f32.xlu0 %v816
    %v818 = vpop.xlane.xlu0 %817
    %v819 = vsel %vm216, %v810, 0.0
    %820 = vadd.xlane.f32.xlu0 %v819
    %v821 = vpop.xlane.xlu0 %820
    %v822 = vsel %vm216, %v812, 0.0
    %823 = vadd.xlane.f32.xlu0 %v822
    %v824 = vpop.xlane.xlu0 %823
    %v825 = vrcp.pop %v815
    %v826 = vrcp.pop %v818
    %v827 = vrcp.pop %v821
    %v828 = vrcp.pop %v824
    %v829 = vmul.f32 %v806, %v825
    %v830 = vmul.f32 %v808, %v826
    %v831 = vmul.f32 %v810, %v827
    %v832 = vmul.f32 %v812, %v828
    %v833 = vpack.c.bf16 %v829, %v829
    %v834 = vpack.c.bf16 %v830, %v830
    %v835 = vpack.c.bf16 %v831, %v831
    %v836 = vpack.c.bf16 %v832, %v832
    %837 = vrot.lane.b32.xlu0 %v213, 48
    %v838 = vpop.permute.xlu0 %837
    %v840 = vsel %vm216, %v833, 0
    %v843 = vsel %vm377, %v838, 0
    %845 = vmatpush.bf16.msra.mxu0 0
    %846 = vmatpush.bf16.msra.mxu0 0
    %847 = vmatpush.bf16.msra.mxu0 0
    %848 = vmatpush.bf16.msra.mxu0 0
    %849 = vmatpush.bf16.msra.mxu0 0
    %850 = vmatpush.bf16.msra.mxu0 0
    %851 = vmatpush.bf16.msra.mxu0 0
    %852 = vmatpush.bf16.msra.mxu0 %v843
    %853 = vmatmul.bf16.gmra.mxu0 %v840
    %v854 = vpop.f32.mrf.mxu0
    %v855 = vadd.f32 0.0, %v854
    %v856 = vpop.f32.mrf.mxu0
    %857 = vdwg.mxu0
    %858 = vrot.lane.b32.xlu0 %v238, 48
    %v859 = vpop.permute.xlu0 %858
    %v861 = vsel %vm216, %v834, 0
    %v864 = vsel %vm377, %v859, 0
    %866 = vmatpush.bf16.msra.mxu0 0
    %867 = vmatpush.bf16.msra.mxu0 0
    %868 = vmatpush.bf16.msra.mxu0 0
    %869 = vmatpush.bf16.msra.mxu0 0
    %870 = vmatpush.bf16.msra.mxu0 0
    %871 = vmatpush.bf16.msra.mxu0 0
    %872 = vmatpush.bf16.msra.mxu0 0
    %873 = vmatpush.bf16.msra.mxu0 %v864
    %874 = vmatmul.bf16.gmra.mxu0 %v861
    %v875 = vpop.f32.mrf.mxu0
    %v876 = vadd.f32 0.0, %v875
    %v877 = vpop.f32.mrf.mxu0
    %878 = vdwg.mxu0
    %879 = vrot.lane.b32.xlu0 %v262, 48
    %v880 = vpop.permute.xlu0 %879
    %v882 = vsel %vm216, %v835, 0
    %v885 = vsel %vm377, %v880, 0
    %887 = vmatpush.bf16.msra.mxu0 0
    %888 = vmatpush.bf16.msra.mxu0 0
    %889 = vmatpush.bf16.msra.mxu0 0
    %890 = vmatpush.bf16.msra.mxu0 0
    %891 = vmatpush.bf16.msra.mxu0 0
    %892 = vmatpush.bf16.msra.mxu0 0
    %893 = vmatpush.bf16.msra.mxu0 0
    %894 = vmatpush.bf16.msra.mxu0 %v885
    %895 = vmatmul.bf16.gmra.mxu0 %v882
    %v896 = vpop.f32.mrf.mxu0
    %v897 = vadd.f32 0.0, %v896
    %v898 = vpop.f32.mrf.mxu0
    %899 = vdwg.mxu0
    %900 = vrot.lane.b32.xlu0 %v286, 48
    %v901 = vpop.permute.xlu0 %900
    %v903 = vsel %vm216, %v836, 0
    %v906 = vsel %vm377, %v901, 0
    %908 = vmatpush.bf16.msra.mxu0 0
    %909 = vmatpush.bf16.msra.mxu0 0
    %910 = vmatpush.bf16.msra.mxu0 0
    %911 = vmatpush.bf16.msra.mxu0 0
    %912 = vmatpush.bf16.msra.mxu0 0
    %913 = vmatpush.bf16.msra.mxu0 0
    %914 = vmatpush.bf16.msra.mxu0 0
    %915 = vmatpush.bf16.msra.mxu0 %v906
    %916 = vmatmul.bf16.gmra.mxu0 %v903
    %v917 = vpop.f32.mrf.mxu0
    %v918 = vadd.f32 0.0, %v917
    %v919 = vpop.f32.mrf.mxu0
    %920 = vdwg.mxu0
    %921 = vrot.lane.b32.xlu0 %v213, 104
    %v922 = vpop.permute.xlu0 %921
    %923 = vrot.lane.b32.xlu0 %v213, 72
    %v924 = vpop.permute.xlu0 %923
    %v926 = vsel %vm216, %v922, 0
    %v929 = vsel %vm216, %v924, 0
    %931 = vmatpush.bf16.xpose.msra.mxu0 0
    %932 = vmatpush.bf16.xpose.msra.mxu0 0
    %933 = vmatpush.bf16.xpose.msra.mxu0 0
    %934 = vmatpush.bf16.xpose.msra.mxu0 0
    %935 = vmatpush.bf16.xpose.msra.mxu0 0
    %936 = vmatpush.bf16.xpose.msra.mxu0 0
    %937 = vmatpush.bf16.xpose.msra.mxu0 0
    %938 = vmatpush.bf16.xpose.msra.mxu0 %v929
    %939 = vmatmul.bf16.gmra.mxu0 %v926
    %v940 = vpop.f32.mrf.mxu0
    %v941 = vadd.f32 0.0, %v940
    %v942 = vpop.f32.mrf.mxu0
    %943 = vdwg.mxu0
    %944 = vrot.lane.b32.xlu0 %v238, 104
    %v945 = vpop.permute.xlu0 %944
    %946 = vrot.lane.b32.xlu0 %v238, 72
    %v947 = vpop.permute.xlu0 %946
    %v949 = vsel %vm216, %v945, 0
    %v952 = vsel %vm216, %v947, 0
    %954 = vmatpush.bf16.xpose.msra.mxu0 0
    %955 = vmatpush.bf16.xpose.msra.mxu0 0
    %956 = vmatpush.bf16.xpose.msra.mxu0 0
    %957 = vmatpush.bf16.xpose.msra.mxu0 0
    %958 = vmatpush.bf16.xpose.msra.mxu0 0
    %959 = vmatpush.bf16.xpose.msra.mxu0 0
    %960 = vmatpush.bf16.xpose.msra.mxu0 0
    %961 = vmatpush.bf16.xpose.msra.mxu0 %v952
    %962 = vmatmul.bf16.gmra.mxu0 %v949
    %v963 = vpop.f32.mrf.mxu0
    %v964 = vadd.f32 0.0, %v963
    %v965 = vpop.f32.mrf.mxu0
    %966 = vdwg.mxu0
    %967 = vrot.lane.b32.xlu0 %v262, 104
    %v968 = vpop.permute.xlu0 %967
    %969 = vrot.lane.b32.xlu0 %v262, 72
    %v970 = vpop.permute.xlu0 %969
    %v972 = vsel %vm216, %v968, 0
    %v975 = vsel %vm216, %v970, 0
    %977 = vmatpush.bf16.xpose.msra.mxu0 0
    %978 = vmatpush.bf16.xpose.msra.mxu0 0
    %979 = vmatpush.bf16.xpose.msra.mxu0 0
    %980 = vmatpush.bf16.xpose.msra.mxu0 0
    %981 = vmatpush.bf16.xpose.msra.mxu0 0
    %982 = vmatpush.bf16.xpose.msra.mxu0 0
    %983 = vmatpush.bf16.xpose.msra.mxu0 0
    %984 = vmatpush.bf16.xpose.msra.mxu0 %v975
    %985 = vmatmul.bf16.gmra.mxu0 %v972
    %v986 = vpop.f32.mrf.mxu0
    %v987 = vadd.f32 0.0, %v986
    %v988 = vpop.f32.mrf.mxu0
    %989 = vdwg.mxu0
    %990 = vrot.lane.b32.xlu0 %v286, 104
    %v991 = vpop.permute.xlu0 %990
    %992 = vrot.lane.b32.xlu0 %v286, 72
    %v993 = vpop.permute.xlu0 %992
    %v995 = vsel %vm216, %v991, 0
    %v998 = vsel %vm216, %v993, 0
    %1000 = vmatpush.bf16.xpose.msra.mxu0 0
    %1001 = vmatpush.bf16.xpose.msra.mxu0 0
    %1002 = vmatpush.bf16.xpose.msra.mxu0 0
    %1003 = vmatpush.bf16.xpose.msra.mxu0 0
    %1004 = vmatpush.bf16.xpose.msra.mxu0 0
    %1005 = vmatpush.bf16.xpose.msra.mxu0 0
    %1006 = vmatpush.bf16.xpose.msra.mxu0 0
    %1007 = vmatpush.bf16.xpose.msra.mxu0 %v998
    %1008 = vmatmul.bf16.gmra.mxu0 %v995
    %v1009 = vpop.f32.mrf.mxu0
    %v1010 = vadd.f32 0.0, %v1009
    %v1011 = vpop.f32.mrf.mxu0
    %1012 = vdwg.mxu0
    %v1013 = vmul.f32 %v941, 0.35355338
    %v1014 = vmul.f32 %v964, 0.35355338
    %v1015 = vmul.f32 %v987, 0.35355338
    %v1016 = vmul.f32 %v1010, 0.35355338
    %v1017 = vadd.f32 %v1013, %v312
    %v1018 = vadd.f32 %v1014, %v313
    %v1019 = vadd.f32 %v1015, %v314
    %v1020 = vadd.f32 %v1016, %v315
    %v1021 = vsel %vm216, %v1017, -inf
    %1022 = vmax.xlane.f32.xlu0 %v1021
    %v1023 = vpop.xlane.xlu0 %1022
    %v1024 = vsel %vm216, %v1018, -inf
    %1025 = vmax.xlane.f32.xlu0 %v1024
    %v1026 = vpop.xlane.xlu0 %1025
    %v1027 = vsel %vm216, %v1019, -inf
    %1028 = vmax.xlane.f32.xlu0 %v1027
    %v1029 = vpop.xlane.xlu0 %1028
    %v1030 = vsel %vm216, %v1020, -inf
    %1031 = vmax.xlane.f32.xlu0 %v1030
    %v1032 = vpop.xlane.xlu0 %1031
    %v1033 = vsub.f32 %v1017, %v1023
    %v1034 = vsub.f32 %v1018, %v1026
    %v1035 = vsub.f32 %v1019, %v1029
    %v1036 = vsub.f32 %v1020, %v1032
    %v1037 = vmul.f32 %v1033, 1.442695
    %v1038 = vpow.pop %v1037
    %v1039 = vmul.f32 %v1034, 1.442695
    %v1040 = vpow.pop %v1039
    %v1041 = vmul.f32 %v1035, 1.442695
    %v1042 = vpow.pop %v1041
    %v1043 = vmul.f32 %v1036, 1.442695
    %v1044 = vpow.pop %v1043
    %v1045 = vsel %vm216, %v1038, 0.0
    %1046 = vadd.xlane.f32.xlu0 %v1045
    %v1047 = vpop.xlane.xlu0 %1046
    %v1048 = vsel %vm216, %v1040, 0.0
    %1049 = vadd.xlane.f32.xlu0 %v1048
    %v1050 = vpop.xlane.xlu0 %1049
    %v1051 = vsel %vm216, %v1042, 0.0
    %1052 = vadd.xlane.f32.xlu0 %v1051
    %v1053 = vpop.xlane.xlu0 %1052
    %v1054 = vsel %vm216, %v1044, 0.0
    %1055 = vadd.xlane.f32.xlu0 %v1054
    %v1056 = vpop.xlane.xlu0 %1055
    %v1057 = vrcp.pop %v1047
    %v1058 = vrcp.pop %v1050
    %v1059 = vrcp.pop %v1053
    %v1060 = vrcp.pop %v1056
    %v1061 = vmul.f32 %v1038, %v1057
    %v1062 = vmul.f32 %v1040, %v1058
    %v1063 = vmul.f32 %v1042, %v1059
    %v1064 = vmul.f32 %v1044, %v1060
    %v1065 = vpack.c.bf16 %v1061, %v1061
    %v1066 = vpack.c.bf16 %v1062, %v1062
    %v1067 = vpack.c.bf16 %v1063, %v1063
    %v1068 = vpack.c.bf16 %v1064, %v1064
    %1069 = vrot.lane.b32.xlu0 %v213, 40
    %v1070 = vpop.permute.xlu0 %1069
    %v1072 = vsel %vm216, %v1065, 0
    %v1075 = vsel %vm377, %v1070, 0
    %1077 = vmatpush.bf16.msra.mxu0 0
    %1078 = vmatpush.bf16.msra.mxu0 0
    %1079 = vmatpush.bf16.msra.mxu0 0
    %1080 = vmatpush.bf16.msra.mxu0 0
    %1081 = vmatpush.bf16.msra.mxu0 0
    %1082 = vmatpush.bf16.msra.mxu0 0
    %1083 = vmatpush.bf16.msra.mxu0 0
    %1084 = vmatpush.bf16.msra.mxu0 %v1075
    %1085 = vmatmul.bf16.gmra.mxu0 %v1072
    %v1086 = vpop.f32.mrf.mxu0
    %v1087 = vadd.f32 0.0, %v1086
    %v1088 = vpop.f32.mrf.mxu0
    %1089 = vdwg.mxu0
    %1090 = vrot.lane.b32.xlu0 %v238, 40
    %v1091 = vpop.permute.xlu0 %1090
    %v1093 = vsel %vm216, %v1066, 0
    %v1096 = vsel %vm377, %v1091, 0
    %1098 = vmatpush.bf16.msra.mxu0 0
    %1099 = vmatpush.bf16.msra.mxu0 0
    %1100 = vmatpush.bf16.msra.mxu0 0
    %1101 = vmatpush.bf16.msra.mxu0 0
    %1102 = vmatpush.bf16.msra.mxu0 0
    %1103 = vmatpush.bf16.msra.mxu0 0
    %1104 = vmatpush.bf16.msra.mxu0 0
    %1105 = vmatpush.bf16.msra.mxu0 %v1096
    %1106 = vmatmul.bf16.gmra.mxu0 %v1093
    %v1107 = vpop.f32.mrf.mxu0
    %v1108 = vadd.f32 0.0, %v1107
    %v1109 = vpop.f32.mrf.mxu0
    %1110 = vdwg.mxu0
    %1111 = vrot.lane.b32.xlu0 %v262, 40
    %v1112 = vpop.permute.xlu0 %1111
    %v1114 = vsel %vm216, %v1067, 0
    %v1117 = vsel %vm377, %v1112, 0
    %1119 = vmatpush.bf16.msra.mxu0 0
    %1120 = vmatpush.bf16.msra.mxu0 0
    %1121 = vmatpush.bf16.msra.mxu0 0
    %1122 = vmatpush.bf16.msra.mxu0 0
    %1123 = vmatpush.bf16.msra.mxu0 0
    %1124 = vmatpush.bf16.msra.mxu0 0
    %1125 = vmatpush.bf16.msra.mxu0 0
    %1126 = vmatpush.bf16.msra.mxu0 %v1117
    %1127 = vmatmul.bf16.gmra.mxu0 %v1114
    %v1128 = vpop.f32.mrf.mxu0
    %v1129 = vadd.f32 0.0, %v1128
    %v1130 = vpop.f32.mrf.mxu0
    %1131 = vdwg.mxu0
    %1132 = vrot.lane.b32.xlu0 %v286, 40
    %v1133 = vpop.permute.xlu0 %1132
    %v1135 = vsel %vm216, %v1068, 0
    %v1138 = vsel %vm377, %v1133, 0
    %1140 = vmatpush.bf16.msra.mxu0 0
    %1141 = vmatpush.bf16.msra.mxu0 0
    %1142 = vmatpush.bf16.msra.mxu0 0
    %1143 = vmatpush.bf16.msra.mxu0 0
    %1144 = vmatpush.bf16.msra.mxu0 0
    %1145 = vmatpush.bf16.msra.mxu0 0
    %1146 = vmatpush.bf16.msra.mxu0 0
    %1147 = vmatpush.bf16.msra.mxu0 %v1138
    %1148 = vmatmul.bf16.gmra.mxu0 %v1135
    %v1149 = vpop.f32.mrf.mxu0
    %v1150 = vadd.f32 0.0, %v1149
    %v1151 = vpop.f32.mrf.mxu0
    %1152 = vdwg.mxu0
    %1157 = vrot.lane.b32.xlu0 %v623, 8
    %v1158 = vpop.permute.xlu0 %1157
    %1159 = vrot.lane.b32.xlu0 %v644, 8
    %v1160 = vpop.permute.xlu0 %1159
    %1161 = vrot.lane.b32.xlu0 %v665, 8
    %v1162 = vpop.permute.xlu0 %1161
    %1163 = vrot.lane.b32.xlu0 %v686, 8
    %v1164 = vpop.permute.xlu0 %1163
    %1173 = vrot.lane.b32.xlu0 %v855, 16
    %v1174 = vpop.permute.xlu0 %1173
    %1175 = vrot.lane.b32.xlu0 %v876, 16
    %v1176 = vpop.permute.xlu0 %1175
    %1177 = vrot.lane.b32.xlu0 %v897, 16
    %v1178 = vpop.permute.xlu0 %1177
    %1179 = vrot.lane.b32.xlu0 %v918, 16
    %v1180 = vpop.permute.xlu0 %1179
    %1189 = vrot.lane.b32.xlu0 %v1087, 24
    %v1190 = vpop.permute.xlu0 %1189
    %1191 = vrot.lane.b32.xlu0 %v1108, 24
    %v1192 = vpop.permute.xlu0 %1191
    %1193 = vrot.lane.b32.xlu0 %v1129, 24
    %v1194 = vpop.permute.xlu0 %1193
    %1195 = vrot.lane.b32.xlu0 %v1150, 24
    %v1196 = vpop.permute.xlu0 %1195
    %v1201 = vsel %vm216, %v391, %v1158
    %v1202 = vsel %vm216, %v412, %v1160
    %v1203 = vsel %vm216, %v433, %v1162
    %v1204 = vsel %vm216, %v454, %v1164
    %vm1205 = vcmask 130048
    %v1206 = vsel %vm1205, %v1201, %v1174
    %v1207 = vsel %vm1205, %v1202, %v1176
    %v1208 = vsel %vm1205, %v1203, %v1178
    %v1209 = vsel %vm1205, %v1204, %v1180
    %vm1210 = vcmask 195584
    %v1211 = vsel %vm1210, %v1206, %v1190
    %v1212 = vsel %vm1210, %v1207, %v1192
    %v1213 = vsel %vm1210, %v1208, %v1194
    %v1214 = vsel %vm1210, %v1209, %v1196
    %v1215 = vpack.c.bf16 %v1212, %v1211
    %v1216 = vpack.c.bf16 %v1214, %v1213
    %v1217 = vld [vmem:[%s6] sm:$0xf]
    %v1218 = vld [vmem:[%s6 + $0x4] sm:$0xf]
    %v1219 = vld [vmem:[%s6 + $0x8] sm:$0xf]
    %v1220 = vld [vmem:[%s6 + $0xc] sm:$0xf]
    %v1221 = vperm.slane %v159, 0
    %v1226 = vunpack.c.l.b16 %v1217
    %v1227 = vunpack.c.l.b16 %v1218
    %v1228 = vunpack.c.l.b16 %v1219
    %v1229 = vunpack.c.l.b16 %v1220
    %v1230 = vpack.c.b16 %v1227, %v1226
    %v1231 = vpack.c.b16 %v1229, %v1228
    %v1235 = vsel %vm53, %v1215, 0
    %v1238 = vsel %vm53, %v1216, 0
    %1240 = vmatpush.bf16.msra.mxu0 0
    %1241 = vmatpush.bf16.msra.mxu0 0
    %1242 = vmatpush.bf16.msra.mxu0 0
    %1243 = vmatpush.bf16.msra.mxu0 0
    %1244 = vmatpush.bf16.msra.mxu0 0
    %1245 = vmatpush.bf16.msra.mxu0 0
    %1246 = vmatpush.bf16.msra.mxu0 %v1231
    %1247 = vmatpush.bf16.msra.mxu0 %v1230
    %1248 = vmatmul.bf16.gmra.mxu0 %v1235
    %v1249 = vpop.f32.mrf.mxu0
    %v1250 = vadd.f32 %v1221, %v1249
    %v1251 = vpop.f32.mrf.mxu0
    %v1252 = vadd.f32 %v1221, %v1251
    %1253 = vmatmul.bf16.gmra.mxu0 %v1238
    %v1254 = vpop.f32.mrf.mxu0
    %v1255 = vadd.f32 %v1221, %v1254
    %v1256 = vpop.f32.mrf.mxu0
    %v1257 = vadd.f32 %v1221, %v1256
    %1258 = vdwg.mxu0
    %v1259 = vadd.f32 %v155, %v1250
    %v1260 = vadd.f32 %v156, %v1252
    %v1261 = vadd.f32 %v157, %v1255
    %v1262 = vadd.f32 %v158, %v1257
    %v1263 = vsel %vm53, %v1259, 0.0
    %1264 = vadd.xlane.f32.xlu0 %v1263
    %v1265 = vpop.xlane.xlu0 %1264
    %v1266 = vsel %vm53, %v1260, 0.0
    %1267 = vadd.xlane.f32.xlu0 %v1266
    %v1268 = vpop.xlane.xlu0 %1267
    %v1269 = vsel %vm53, %v1261, 0.0
    %1270 = vadd.xlane.f32.xlu0 %v1269
    %v1271 = vpop.xlane.xlu0 %1270
    %v1272 = vsel %vm53, %v1262, 0.0
    %1273 = vadd.xlane.f32.xlu0 %v1272
    %v1274 = vpop.xlane.xlu0 %1273
    %v1275 = vmul.f32 %v1265, %v72
    %v1276 = vmul.f32 %v1268, %v72
    %v1277 = vmul.f32 %v1271, %v72
    %v1278 = vmul.f32 %v1274, %v72
    %v1279 = vsub.f32 %v1259, %v1275
    %v1280 = vsub.f32 %v1260, %v1276
    %v1281 = vsub.f32 %v1261, %v1277
    %v1282 = vsub.f32 %v1262, %v1278
    %v1283 = vmul.f32 %v1279, %v1279
    %v1284 = vmul.f32 %v1280, %v1280
    %v1285 = vmul.f32 %v1281, %v1281
    %v1286 = vmul.f32 %v1282, %v1282
    %v1287 = vsel %vm53, %v1283, 0.0
    %1288 = vadd.xlane.f32.xlu0 %v1287
    %v1289 = vpop.xlane.xlu0 %1288
    %v1290 = vsel %vm53, %v1284, 0.0
    %1291 = vadd.xlane.f32.xlu0 %v1290
    %v1292 = vpop.xlane.xlu0 %1291
    %v1293 = vsel %vm53, %v1285, 0.0
    %1294 = vadd.xlane.f32.xlu0 %v1293
    %v1295 = vpop.xlane.xlu0 %1294
    %v1296 = vsel %vm53, %v1286, 0.0
    %1297 = vadd.xlane.f32.xlu0 %v1296
    %v1298 = vpop.xlane.xlu0 %1297
    %v1299 = vmul.f32 %v1289, %v72
    %v1300 = vmul.f32 %v1292, %v72
    %v1301 = vmul.f32 %v1295, %v72
    %v1302 = vmul.f32 %v1298, %v72
    %v1303 = vadd.f32 %v1299, 1e-12
    %v1304 = vadd.f32 %v1300, 1e-12
    %v1305 = vadd.f32 %v1301, 1e-12
    %v1306 = vadd.f32 %v1302, 1e-12
    %v1307 = vrsqrt.pop %v1303
    %v1308 = vmul.f32 %v1307, %v1303
    %v1309 = vmul.f32 %v1308, %v1307
    %v1310 = vmul.f32 0.5, %v1309
    %v1311 = vsub.f32 1.5, %v1310
    %v1312 = vmul.f32 %v1307, %v1311
    %vm1313 = vweird.f32 %v1303
    %vm1314 = vweird.f32 %v1307
    %vm1315 = vmor %vm1313, %vm1314
    %v1316 = vsel %vm1315, %v1307, %v1312
    %v1317 = vrsqrt.pop %v1304
    %v1318 = vmul.f32 %v1317, %v1304
    %v1319 = vmul.f32 %v1318, %v1317
    %v1320 = vmul.f32 0.5, %v1319
    %v1321 = vsub.f32 1.5, %v1320
    %v1322 = vmul.f32 %v1317, %v1321
    %vm1323 = vweird.f32 %v1304
    %vm1324 = vweird.f32 %v1317
    %vm1325 = vmor %vm1323, %vm1324
    %v1326 = vsel %vm1325, %v1317, %v1322
    %v1327 = vrsqrt.pop %v1305
    %v1328 = vmul.f32 %v1327, %v1305
    %v1329 = vmul.f32 %v1328, %v1327
    %v1330 = vmul.f32 0.5, %v1329
    %v1331 = vsub.f32 1.5, %v1330
    %v1332 = vmul.f32 %v1327, %v1331
    %vm1333 = vweird.f32 %v1305
    %vm1334 = vweird.f32 %v1327
    %vm1335 = vmor %vm1333, %vm1334
    %v1336 = vsel %vm1335, %v1327, %v1332
    %v1337 = vrsqrt.pop %v1306
    %v1338 = vmul.f32 %v1337, %v1306
    %v1339 = vmul.f32 %v1338, %v1337
    %v1340 = vmul.f32 0.5, %v1339
    %v1341 = vsub.f32 1.5, %v1340
    %v1342 = vmul.f32 %v1337, %v1341
    %vm1343 = vweird.f32 %v1306
    %vm1344 = vweird.f32 %v1337
    %vm1345 = vmor %vm1343, %vm1344
    %v1346 = vsel %vm1345, %v1337, %v1342
    %v1347 = vmul.f32 %v1279, %v1316
    %v1348 = vmul.f32 %v1280, %v1326
    %v1349 = vmul.f32 %v1281, %v1336
    %v1350 = vmul.f32 %v1282, %v1346
    %v1351 = vperm.slane %v159, 1
    %v1352 = vmul.f32 %v1347, %v1351
    %v1353 = vmul.f32 %v1348, %v1351
    %v1354 = vmul.f32 %v1349, %v1351
    %v1355 = vmul.f32 %v1350, %v1351
    %v1356 = vperm.slane %v159, 2
    %v1357 = vadd.f32 %v1352, %v1356
    %v1358 = vadd.f32 %v1353, %v1356
    %v1359 = vadd.f32 %v1354, %v1356
    %v1360 = vadd.f32 %v1355, %v1356
    %v1361 = vpack.c.bf16 %v1358, %v1357
    %v1362 = vpack.c.bf16 %v1360, %v1359
    %v1363 = vld [vmem:[%s7] sm:$0xf]
    %v1364 = vld [vmem:[%s7 + $0x4] sm:$0xf]
    %v1365 = vld [vmem:[%s7 + $0x8] sm:$0xf]
    %v1366 = vld [vmem:[%s7 + $0xc] sm:$0xf]
    %v1367 = vld [vmem:[%s8] sm:$0x1]
    %v1369 = vperm.slane %v1367, 0
    %v1375 = vunpack.c.l.b16 %v1363
    %v1376 = vunpack.c.l.b16 %v1364
    %v1377 = vunpack.c.l.b16 %v1365
    %v1378 = vunpack.c.l.b16 %v1366
    %v1379 = vpack.c.b16 %v1376, %v1375
    %v1380 = vpack.c.b16 %v1378, %v1377
    %v1384 = vsel %vm53, %v1361, 0
    %v1387 = vsel %vm53, %v1362, 0
    %1389 = vmatpush.bf16.msra.mxu0 0
    %1390 = vmatpush.bf16.msra.mxu0 0
    %1391 = vmatpush.bf16.msra.mxu0 0
    %1392 = vmatpush.bf16.msra.mxu0 0
    %1393 = vmatpush.bf16.msra.mxu0 0
    %1394 = vmatpush.bf16.msra.mxu0 0
    %1395 = vmatpush.bf16.msra.mxu0 %v1380
    %1396 = vmatpush.bf16.msra.mxu0 %v1379
    %1397 = vmatmul.bf16.gmra.mxu0 %v1384
    %v1398 = vpop.f32.mrf.mxu0
    %v1399 = vadd.f32 %v1369, %v1398
    %v1400 = vpop.f32.mrf.mxu0
    %v1401 = vadd.f32 %v1369, %v1400
    %1402 = vmatmul.bf16.gmra.mxu0 %v1387
    %v1403 = vpop.f32.mrf.mxu0
    %v1404 = vadd.f32 %v1369, %v1403
    %v1405 = vpop.f32.mrf.mxu0
    %v1406 = vadd.f32 %v1369, %v1405
    %1407 = vdwg.mxu0
    %v1408 = vmul.f32 %v1399, %v1399
    %v1409 = vmul.f32 %v1401, %v1401
    %v1410 = vmul.f32 %v1404, %v1404
    %v1411 = vmul.f32 %v1406, %v1406
    %v1412 = vmul.f32 %v1399, %v1408
    %v1413 = vmul.f32 %v1401, %v1409
    %v1414 = vmul.f32 %v1404, %v1410
    %v1415 = vmul.f32 %v1406, %v1411
    %v1416 = vmul.f32 %v1412, 0.044715
    %v1417 = vmul.f32 %v1413, 0.044715
    %v1418 = vmul.f32 %v1414, 0.044715
    %v1419 = vmul.f32 %v1415, 0.044715
    %v1420 = vadd.f32 %v1399, %v1416
    %v1421 = vadd.f32 %v1401, %v1417
    %v1422 = vadd.f32 %v1404, %v1418
    %v1423 = vadd.f32 %v1406, %v1419
    %v1424 = vmul.f32 %v1420, 0.7978846
    %v1425 = vmul.f32 %v1421, 0.7978846
    %v1426 = vmul.f32 %v1422, 0.7978846
    %v1427 = vmul.f32 %v1423, 0.7978846
    %v1428 = vtanh.pop %v1424
    %v1429 = vtanh.pop %v1425
    %v1430 = vtanh.pop %v1426
    %v1431 = vtanh.pop %v1427
    %v1432 = vadd.f32 %v1428, 1.0
    %v1433 = vadd.f32 %v1429, 1.0
    %v1434 = vadd.f32 %v1430, 1.0
    %v1435 = vadd.f32 %v1431, 1.0
    %v1436 = vmul.f32 %v1432, 0.5
    %v1437 = vmul.f32 %v1433, 0.5
    %v1438 = vmul.f32 %v1434, 0.5
    %v1439 = vmul.f32 %v1435, 0.5
    %v1440 = vmul.f32 %v1399, %v1436
    %v1441 = vmul.f32 %v1401, %v1437
    %v1442 = vmul.f32 %v1404, %v1438
    %v1443 = vmul.f32 %v1406, %v1439
    %v1444 = vpack.c.bf16 %v1441, %v1440
    %v1445 = vpack.c.bf16 %v1443, %v1442
    %v1446 = vld [vmem:[%s9] sm:$0xf]
    %v1447 = vld [vmem:[%s9 + $0x4] sm:$0xf]
    %v1448 = vld [vmem:[%s9 + $0x8] sm:$0xf]
    %v1449 = vld [vmem:[%s9 + $0xc] sm:$0xf]
    %v1450 = vld [vmem:[%s9 + $0x10] sm:$0xf]
    %v1451 = vld [vmem:[%s9 + $0x14] sm:$0xf]
    %v1452 = vld [vmem:[%s9 + $0x18] sm:$0xf]
    %v1453 = vld [vmem:[%s9 + $0x1c] sm:$0xf]
    %v1454 = vperm.slane %v159, 3
    %v1463 = vunpack.c.l.b16 %v1446
    %v1464 = vunpack.c.l.b16 %v1447
    %v1465 = vunpack.c.l.b16 %v1448
    %v1466 = vunpack.c.l.b16 %v1449
    %v1467 = vunpack.c.l.b16 %v1450
    %v1468 = vunpack.c.l.b16 %v1451
    %v1469 = vunpack.c.l.b16 %v1452
    %v1470 = vunpack.c.l.b16 %v1453
    %v1471 = vpack.c.b16 %v1464, %v1463
    %v1472 = vpack.c.b16 %v1466, %v1465
    %v1473 = vpack.c.b16 %v1468, %v1467
    %v1474 = vpack.c.b16 %v1470, %v1469
    %vm1479 = vcmask 523264
    %v1481 = vsel %vm1479, %v1444, 0
    %v1484 = vsel %vm1479, %v1445, 0
    %1486 = vmatpush.bf16.msra.mxu0 0
    %1487 = vmatpush.bf16.msra.mxu0 0
    %1488 = vmatpush.bf16.msra.mxu0 0
    %1489 = vmatpush.bf16.msra.mxu0 0
    %1490 = vmatpush.bf16.msra.mxu0 %v1474
    %1491 = vmatpush.bf16.msra.mxu0 %v1473
    %1492 = vmatpush.bf16.msra.mxu0 %v1472
    %1493 = vmatpush.bf16.msra.mxu0 %v1471
    %1494 = vmatmul.bf16.gmra.mxu0 %v1481
    %v1495 = vpop.f32.mrf.mxu0
    %v1496 = vadd.f32 %v1454, %v1495
    %v1497 = vpop.f32.mrf.mxu0
    %v1498 = vadd.f32 %v1454, %v1497
    %1499 = vmatmul.bf16.gmra.mxu0 %v1484
    %v1500 = vpop.f32.mrf.mxu0
    %v1501 = vadd.f32 %v1454, %v1500
    %v1502 = vpop.f32.mrf.mxu0
    %v1503 = vadd.f32 %v1454, %v1502
    %1504 = vdwg.mxu0
    %v1505 = vadd.f32 %v1357, %v1496
    %v1506 = vadd.f32 %v1358, %v1498
    %v1507 = vadd.f32 %v1359, %v1501
    %v1508 = vadd.f32 %v1360, %v1503
    %v1509 = vsel %vm53, %v1505, 0.0
    %1510 = vadd.xlane.f32.xlu0 %v1509
    %v1511 = vpop.xlane.xlu0 %1510
    %v1512 = vsel %vm53, %v1506, 0.0
    %1513 = vadd.xlane.f32.xlu0 %v1512
    %v1514 = vpop.xlane.xlu0 %1513
    %v1515 = vsel %vm53, %v1507, 0.0
    %1516 = vadd.xlane.f32.xlu0 %v1515
    %v1517 = vpop.xlane.xlu0 %1516
    %v1518 = vsel %vm53, %v1508, 0.0
    %1519 = vadd.xlane.f32.xlu0 %v1518
    %v1520 = vpop.xlane.xlu0 %1519
    %v1521 = vmul.f32 %v1511, %v72
    %v1522 = vmul.f32 %v1514, %v72
    %v1523 = vmul.f32 %v1517, %v72
    %v1524 = vmul.f32 %v1520, %v72
    %v1525 = vsub.f32 %v1505, %v1521
    %v1526 = vsub.f32 %v1506, %v1522
    %v1527 = vsub.f32 %v1507, %v1523
    %v1528 = vsub.f32 %v1508, %v1524
    %v1529 = vmul.f32 %v1525, %v1525
    %v1530 = vmul.f32 %v1526, %v1526
    %v1531 = vmul.f32 %v1527, %v1527
    %v1532 = vmul.f32 %v1528, %v1528
    %v1533 = vsel %vm53, %v1529, 0.0
    %1534 = vadd.xlane.f32.xlu0 %v1533
    %v1535 = vpop.xlane.xlu0 %1534
    %v1536 = vsel %vm53, %v1530, 0.0
    %1537 = vadd.xlane.f32.xlu0 %v1536
    %v1538 = vpop.xlane.xlu0 %1537
    %v1539 = vsel %vm53, %v1531, 0.0
    %1540 = vadd.xlane.f32.xlu0 %v1539
    %v1541 = vpop.xlane.xlu0 %1540
    %v1542 = vsel %vm53, %v1532, 0.0
    %1543 = vadd.xlane.f32.xlu0 %v1542
    %v1544 = vpop.xlane.xlu0 %1543
    %v1545 = vmul.f32 %v1535, %v72
    %v1546 = vmul.f32 %v1538, %v72
    %v1547 = vmul.f32 %v1541, %v72
    %v1548 = vmul.f32 %v1544, %v72
    %v1549 = vadd.f32 %v1545, 1e-12
    %v1550 = vadd.f32 %v1546, 1e-12
    %v1551 = vadd.f32 %v1547, 1e-12
    %v1552 = vadd.f32 %v1548, 1e-12
    %v1553 = vrsqrt.pop %v1549
    %v1554 = vmul.f32 %v1553, %v1549
    %v1555 = vmul.f32 %v1554, %v1553
    %v1556 = vmul.f32 0.5, %v1555
    %v1557 = vsub.f32 1.5, %v1556
    %v1558 = vmul.f32 %v1553, %v1557
    %vm1559 = vweird.f32 %v1549
    %vm1560 = vweird.f32 %v1553
    %vm1561 = vmor %vm1559, %vm1560
    %v1562 = vsel %vm1561, %v1553, %v1558
    %v1563 = vrsqrt.pop %v1550
    %v1564 = vmul.f32 %v1563, %v1550
    %v1565 = vmul.f32 %v1564, %v1563
    %v1566 = vmul.f32 0.5, %v1565
    %v1567 = vsub.f32 1.5, %v1566
    %v1568 = vmul.f32 %v1563, %v1567
    %vm1569 = vweird.f32 %v1550
    %vm1570 = vweird.f32 %v1563
    %vm1571 = vmor %vm1569, %vm1570
    %v1572 = vsel %vm1571, %v1563, %v1568
    %v1573 = vrsqrt.pop %v1551
    %v1574 = vmul.f32 %v1573, %v1551
    %v1575 = vmul.f32 %v1574, %v1573
    %v1576 = vmul.f32 0.5, %v1575
    %v1577 = vsub.f32 1.5, %v1576
    %v1578 = vmul.f32 %v1573, %v1577
    %vm1579 = vweird.f32 %v1551
    %vm1580 = vweird.f32 %v1573
    %vm1581 = vmor %vm1579, %vm1580
    %v1582 = vsel %vm1581, %v1573, %v1578
    %v1583 = vrsqrt.pop %v1552
    %v1584 = vmul.f32 %v1583, %v1552
    %v1585 = vmul.f32 %v1584, %v1583
    %v1586 = vmul.f32 0.5, %v1585
    %v1587 = vsub.f32 1.5, %v1586
    %v1588 = vmul.f32 %v1583, %v1587
    %vm1589 = vweird.f32 %v1552
    %vm1590 = vweird.f32 %v1583
    %vm1591 = vmor %vm1589, %vm1590
    %v1592 = vsel %vm1591, %v1583, %v1588
    %v1593 = vmul.f32 %v1525, %v1562
    %v1594 = vmul.f32 %v1526, %v1572
    %v1595 = vmul.f32 %v1527, %v1582
    %v1596 = vmul.f32 %v1528, %v1592
    %v1597 = vperm.slane %v159, 4
    %v1598 = vmul.f32 %v1593, %v1597
    %v1599 = vmul.f32 %v1594, %v1597
    %v1600 = vmul.f32 %v1595, %v1597
    %v1601 = vmul.f32 %v1596, %v1597
    %v1602 = vperm.slane %v159, 5
    %v1603 = vadd.f32 %v1598, %v1602
    %v1604 = vadd.f32 %v1599, %v1602
    %v1605 = vadd.f32 %v1600, %v1602
    %v1606 = vadd.f32 %v1601, %v1602
    %s1607 = scalar_lea.vmem %s10, 8
    %v1608 = vld [vmem:[%s1607] sm:$0x3f]
    %v1609 = vpack.c.bf16 %v1604, %v1603
    %v1610 = vpack.c.bf16 %v1606, %v1605
    %s1611 = scalar_lea.vmem %s4, 16
    %v1612 = vld [vmem:[%s1611] sm:$0xf]
    %v1613 = vld [vmem:[%s1611 + $0x4] sm:$0xf]
    %v1614 = vld [vmem:[%s1611 + $0x8] sm:$0xf]
    %v1615 = vld [vmem:[%s1611 + $0xc] sm:$0xf]
    %s1616 = scalar_lea.vmem %s5, 1
    %v1617 = vld [vmem:[%s1616] sm:$0x1]
    %v1619 = vperm.slane %v1617, 0
    %v1625 = vunpack.c.l.b16 %v1612
    %v1626 = vunpack.c.l.b16 %v1613
    %v1627 = vunpack.c.l.b16 %v1614
    %v1628 = vunpack.c.l.b16 %v1615
    %v1629 = vpack.c.b16 %v1626, %v1625
    %v1630 = vpack.c.b16 %v1628, %v1627
    %v1634 = vsel %vm53, %v1609, 0
    %v1637 = vsel %vm53, %v1610, 0
    %1639 = vmatpush.bf16.msra.mxu0 0
    %1640 = vmatpush.bf16.msra.mxu0 0
    %1641 = vmatpush.bf16.msra.mxu0 0
    %1642 = vmatpush.bf16.msra.mxu0 0
    %1643 = vmatpush.bf16.msra.mxu0 0
    %1644 = vmatpush.bf16.msra.mxu0 0
    %1645 = vmatpush.bf16.msra.mxu0 %v1630
    %1646 = vmatpush.bf16.msra.mxu0 %v1629
    %1647 = vmatmul.bf16.gmra.mxu0 %v1634
    %v1648 = vpop.f32.mrf.mxu0
    %v1649 = vadd.f32 %v1619, %v1648
    %v1650 = vpop.f32.mrf.mxu0
    %v1651 = vadd.f32 %v1619, %v1650
    %1652 = vmatmul.bf16.gmra.mxu0 %v1637
    %v1653 = vpop.f32.mrf.mxu0
    %v1654 = vadd.f32 %v1619, %v1653
    %v1655 = vpop.f32.mrf.mxu0
    %v1656 = vadd.f32 %v1619, %v1655
    %1657 = vdwg.mxu0
    %v1658 = vpack.c.bf16 %v1649, %v1649
    %v1659 = vpack.c.bf16 %v1651, %v1651
    %v1660 = vpack.c.bf16 %v1654, %v1654
    %v1661 = vpack.c.bf16 %v1656, %v1656
    %v1663 = vunpack.c.l.b16 %v1658
    %v1664 = vpack.c.b16 %v1663, %v1663
    %1665 = vrot.lane.b32.xlu0 %v1664, 96
    %v1666 = vpop.permute.xlu0 %1665
    %v1668 = vsel %vm216, %v1658, 0
    %v1671 = vsel %vm216, %v1666, 0
    %1673 = vmatpush.bf16.xpose.msra.mxu0 0
    %1674 = vmatpush.bf16.xpose.msra.mxu0 0
    %1675 = vmatpush.bf16.xpose.msra.mxu0 0
    %1676 = vmatpush.bf16.xpose.msra.mxu0 0
    %1677 = vmatpush.bf16.xpose.msra.mxu0 0
    %1678 = vmatpush.bf16.xpose.msra.mxu0 0
    %1679 = vmatpush.bf16.xpose.msra.mxu0 0
    %1680 = vmatpush.bf16.xpose.msra.mxu0 %v1671
    %1681 = vmatmul.bf16.gmra.mxu0 %v1668
    %v1682 = vpop.f32.mrf.mxu0
    %v1683 = vadd.f32 0.0, %v1682
    %v1684 = vpop.f32.mrf.mxu0
    %1685 = vdwg.mxu0
    %v1687 = vunpack.c.l.b16 %v1659
    %v1688 = vpack.c.b16 %v1687, %v1687
    %1689 = vrot.lane.b32.xlu0 %v1688, 96
    %v1690 = vpop.permute.xlu0 %1689
    %v1692 = vsel %vm216, %v1659, 0
    %v1695 = vsel %vm216, %v1690, 0
    %1697 = vmatpush.bf16.xpose.msra.mxu0 0
    %1698 = vmatpush.bf16.xpose.msra.mxu0 0
    %1699 = vmatpush.bf16.xpose.msra.mxu0 0
    %1700 = vmatpush.bf16.xpose.msra.mxu0 0
    %1701 = vmatpush.bf16.xpose.msra.mxu0 0
    %1702 = vmatpush.bf16.xpose.msra.mxu0 0
    %1703 = vmatpush.bf16.xpose.msra.mxu0 0
    %1704 = vmatpush.bf16.xpose.msra.mxu0 %v1695
    %1705 = vmatmul.bf16.gmra.mxu0 %v1692
    %v1706 = vpop.f32.mrf.mxu0
    %v1707 = vadd.f32 0.0, %v1706
    %v1708 = vpop.f32.mrf.mxu0
    %1709 = vdwg.mxu0
    %v1711 = vunpack.c.l.b16 %v1660
    %v1712 = vpack.c.b16 %v1711, %v1711
    %1713 = vrot.lane.b32.xlu0 %v1712, 96
    %v1714 = vpop.permute.xlu0 %1713
    %v1716 = vsel %vm216, %v1660, 0
    %v1719 = vsel %vm216, %v1714, 0
    %1721 = vmatpush.bf16.xpose.msra.mxu0 0
    %1722 = vmatpush.bf16.xpose.msra.mxu0 0
    %1723 = vmatpush.bf16.xpose.msra.mxu0 0
    %1724 = vmatpush.bf16.xpose.msra.mxu0 0
    %1725 = vmatpush.bf16.xpose.msra.mxu0 0
    %1726 = vmatpush.bf16.xpose.msra.mxu0 0
    %1727 = vmatpush.bf16.xpose.msra.mxu0 0
    %1728 = vmatpush.bf16.xpose.msra.mxu0 %v1719
    %1729 = vmatmul.bf16.gmra.mxu0 %v1716
    %v1730 = vpop.f32.mrf.mxu0
    %v1731 = vadd.f32 0.0, %v1730
    %v1732 = vpop.f32.mrf.mxu0
    %1733 = vdwg.mxu0
    %v1735 = vunpack.c.l.b16 %v1661
    %v1736 = vpack.c.b16 %v1735, %v1735
    %1737 = vrot.lane.b32.xlu0 %v1736, 96
    %v1738 = vpop.permute.xlu0 %1737
    %v1740 = vsel %vm216, %v1661, 0
    %v1743 = vsel %vm216, %v1738, 0
    %1745 = vmatpush.bf16.xpose.msra.mxu0 0
    %1746 = vmatpush.bf16.xpose.msra.mxu0 0
    %1747 = vmatpush.bf16.xpose.msra.mxu0 0
    %1748 = vmatpush.bf16.xpose.msra.mxu0 0
    %1749 = vmatpush.bf16.xpose.msra.mxu0 0
    %1750 = vmatpush.bf16.xpose.msra.mxu0 0
    %1751 = vmatpush.bf16.xpose.msra.mxu0 0
    %1752 = vmatpush.bf16.xpose.msra.mxu0 %v1743
    %1753 = vmatmul.bf16.gmra.mxu0 %v1740
    %v1754 = vpop.f32.mrf.mxu0
    %v1755 = vadd.f32 0.0, %v1754
    %v1756 = vpop.f32.mrf.mxu0
    %1757 = vdwg.mxu0
    %v1758 = vmul.f32 %v1683, 0.35355338
    %v1759 = vmul.f32 %v1707, 0.35355338
    %v1760 = vmul.f32 %v1731, 0.35355338
    %v1761 = vmul.f32 %v1755, 0.35355338
    %v1762 = vadd.f32 %v1758, %v312
    %v1763 = vadd.f32 %v1759, %v313
    %v1764 = vadd.f32 %v1760, %v314
    %v1765 = vadd.f32 %v1761, %v315
    %v1766 = vsel %vm216, %v1762, -inf
    %1767 = vmax.xlane.f32.xlu0 %v1766
    %v1768 = vpop.xlane.xlu0 %1767
    %v1769 = vsel %vm216, %v1763, -inf
    %1770 = vmax.xlane.f32.xlu0 %v1769
    %v1771 = vpop.xlane.xlu0 %1770
    %v1772 = vsel %vm216, %v1764, -inf
    %1773 = vmax.xlane.f32.xlu0 %v1772
    %v1774 = vpop.xlane.xlu0 %1773
    %v1775 = vsel %vm216, %v1765, -inf
    %1776 = vmax.xlane.f32.xlu0 %v1775
    %v1777 = vpop.xlane.xlu0 %1776
    %v1778 = vsub.f32 %v1762, %v1768
    %v1779 = vsub.f32 %v1763, %v1771
    %v1780 = vsub.f32 %v1764, %v1774
    %v1781 = vsub.f32 %v1765, %v1777
    %v1782 = vmul.f32 %v1778, 1.442695
    %v1783 = vpow.pop %v1782
    %v1784 = vmul.f32 %v1779, 1.442695
    %v1785 = vpow.pop %v1784
    %v1786 = vmul.f32 %v1780, 1.442695
    %v1787 = vpow.pop %v1786
    %v1788 = vmul.f32 %v1781, 1.442695
    %v1789 = vpow.pop %v1788
    %v1790 = vsel %vm216, %v1783, 0.0
    %1791 = vadd.xlane.f32.xlu0 %v1790
    %v1792 = vpop.xlane.xlu0 %1791
    %v1793 = vsel %vm216, %v1785, 0.0
    %1794 = vadd.xlane.f32.xlu0 %v1793
    %v1795 = vpop.xlane.xlu0 %1794
    %v1796 = vsel %vm216, %v1787, 0.0
    %1797 = vadd.xlane.f32.xlu0 %v1796
    %v1798 = vpop.xlane.xlu0 %1797
    %v1799 = vsel %vm216, %v1789, 0.0
    %1800 = vadd.xlane.f32.xlu0 %v1799
    %v1801 = vpop.xlane.xlu0 %1800
    %v1802 = vrcp.pop %v1792
    %v1803 = vrcp.pop %v1795
    %v1804 = vrcp.pop %v1798
    %v1805 = vrcp.pop %v1801
    %v1806 = vmul.f32 %v1783, %v1802
    %v1807 = vmul.f32 %v1785, %v1803
    %v1808 = vmul.f32 %v1787, %v1804
    %v1809 = vmul.f32 %v1789, %v1805
    %v1810 = vpack.c.bf16 %v1806, %v1806
    %v1811 = vpack.c.bf16 %v1807, %v1807
    %v1812 = vpack.c.bf16 %v1808, %v1808
    %v1813 = vpack.c.bf16 %v1809, %v1809
    %1814 = vrot.lane.b32.xlu0 %v1664, 64
    %v1815 = vpop.permute.xlu0 %1814
    %v1817 = vsel %vm216, %v1810, 0
    %v1820 = vsel %vm377, %v1815, 0
    %1822 = vmatpush.bf16.msra.mxu0 0
    %1823 = vmatpush.bf16.msra.mxu0 0
    %1824 = vmatpush.bf16.msra.mxu0 0
    %1825 = vmatpush.bf16.msra.mxu0 0
    %1826 = vmatpush.bf16.msra.mxu0 0
    %1827 = vmatpush.bf16.msra.mxu0 0
    %1828 = vmatpush.bf16.msra.mxu0 0
    %1829 = vmatpush.bf16.msra.mxu0 %v1820
    %1830 = vmatmul.bf16.gmra.mxu0 %v1817
    %v1831 = vpop.f32.mrf.mxu0
    %v1832 = vadd.f32 0.0, %v1831
    %v1833 = vpop.f32.mrf.mxu0
    %1834 = vdwg.mxu0
    %1835 = vrot.lane.b32.xlu0 %v1688, 64
    %v1836 = vpop.permute.xlu0 %1835
    %v1838 = vsel %vm216, %v1811, 0
    %v1841 = vsel %vm377, %v1836, 0
    %1843 = vmatpush.bf16.msra.mxu0 0
    %1844 = vmatpush.bf16.msra.mxu0 0
    %1845 = vmatpush.bf16.msra.mxu0 0
    %1846 = vmatpush.bf16.msra.mxu0 0
    %1847 = vmatpush.bf16.msra.mxu0 0
    %1848 = vmatpush.bf16.msra.mxu0 0
    %1849 = vmatpush.bf16.msra.mxu0 0
    %1850 = vmatpush.bf16.msra.mxu0 %v1841
    %1851 = vmatmul.bf16.gmra.mxu0 %v1838
    %v1852 = vpop.f32.mrf.mxu0
    %v1853 = vadd.f32 0.0, %v1852
    %v1854 = vpop.f32.mrf.mxu0
    %1855 = vdwg.mxu0
    %1856 = vrot.lane.b32.xlu0 %v1712, 64
    %v1857 = vpop.permute.xlu0 %1856
    %v1859 = vsel %vm216, %v1812, 0
    %v1862 = vsel %vm377, %v1857, 0
    %1864 = vmatpush.bf16.msra.mxu0 0
    %1865 = vmatpush.bf16.msra.mxu0 0
    %1866 = vmatpush.bf16.msra.mxu0 0
    %1867 = vmatpush.bf16.msra.mxu0 0
    %1868 = vmatpush.bf16.msra.mxu0 0
    %1869 = vmatpush.bf16.msra.mxu0 0
    %1870 = vmatpush.bf16.msra.mxu0 0
    %1871 = vmatpush.bf16.msra.mxu0 %v1862
    %1872 = vmatmul.bf16.gmra.mxu0 %v1859
    %v1873 = vpop.f32.mrf.mxu0
    %v1874 = vadd.f32 0.0, %v1873
    %v1875 = vpop.f32.mrf.mxu0
    %1876 = vdwg.mxu0
    %1877 = vrot.lane.b32.xlu0 %v1736, 64
    %v1878 = vpop.permute.xlu0 %1877
    %v1880 = vsel %vm216, %v1813, 0
    %v1883 = vsel %vm377, %v1878, 0
    %1885 = vmatpush.bf16.msra.mxu0 0
    %1886 = vmatpush.bf16.msra.mxu0 0
    %1887 = vmatpush.bf16.msra.mxu0 0
    %1888 = vmatpush.bf16.msra.mxu0 0
    %1889 = vmatpush.bf16.msra.mxu0 0
    %1890 = vmatpush.bf16.msra.mxu0 0
    %1891 = vmatpush.bf16.msra.mxu0 0
    %1892 = vmatpush.bf16.msra.mxu0 %v1883
    %1893 = vmatmul.bf16.gmra.mxu0 %v1880
    %v1894 = vpop.f32.mrf.mxu0
    %v1895 = vadd.f32 0.0, %v1894
    %v1896 = vpop.f32.mrf.mxu0
    %1897 = vdwg.mxu0
    %1898 = vrot.lane.b32.xlu0 %v1664, 120
    %v1899 = vpop.permute.xlu0 %1898
    %1900 = vrot.lane.b32.xlu0 %v1664, 88
    %v1901 = vpop.permute.xlu0 %1900
    %v1903 = vsel %vm216, %v1899, 0
    %v1906 = vsel %vm216, %v1901, 0
    %1908 = vmatpush.bf16.xpose.msra.mxu0 0
    %1909 = vmatpush.bf16.xpose.msra.mxu0 0
    %1910 = vmatpush.bf16.xpose.msra.mxu0 0
    %1911 = vmatpush.bf16.xpose.msra.mxu0 0
    %1912 = vmatpush.bf16.xpose.msra.mxu0 0
    %1913 = vmatpush.bf16.xpose.msra.mxu0 0
    %1914 = vmatpush.bf16.xpose.msra.mxu0 0
    %1915 = vmatpush.bf16.xpose.msra.mxu0 %v1906
    %1916 = vmatmul.bf16.gmra.mxu0 %v1903
    %v1917 = vpop.f32.mrf.mxu0
    %v1918 = vadd.f32 0.0, %v1917
    %v1919 = vpop.f32.mrf.mxu0
    %1920 = vdwg.mxu0
    %1921 = vrot.lane.b32.xlu0 %v1688, 120
    %v1922 = vpop.permute.xlu0 %1921
    %1923 = vrot.lane.b32.xlu0 %v1688, 88
    %v1924 = vpop.permute.xlu0 %1923
    %v1926 = vsel %vm216, %v1922, 0
    %v1929 = vsel %vm216, %v1924, 0
    %1931 = vmatpush.bf16.xpose.msra.mxu0 0
    %1932 = vmatpush.bf16.xpose.msra.mxu0 0
    %1933 = vmatpush.bf16.xpose.msra.mxu0 0
    %1934 = vmatpush.bf16.xpose.msra.mxu0 0
    %1935 = vmatpush.bf16.xpose.msra.mxu0 0
    %1936 = vmatpush.bf16.xpose.msra.mxu0 0
    %1937 = vmatpush.bf16.xpose.msra.mxu0 0
    %1938 = vmatpush.bf16.xpose.msra.mxu0 %v1929
    %1939 = vmatmul.bf16.gmra.mxu0 %v1926
    %v1940 = vpop.f32.mrf.mxu0
    %v1941 = vadd.f32 0.0, %v1940
    %v1942 = vpop.f32.mrf.mxu0
    %1943 = vdwg.mxu0
    %1944 = vrot.lane.b32.xlu0 %v1712, 120
    %v1945 = vpop.permute.xlu0 %1944
    %1946 = vrot.lane.b32.xlu0 %v1712, 88
    %v1947 = vpop.permute.xlu0 %1946
    %v1949 = vsel %vm216, %v1945, 0
    %v1952 = vsel %vm216, %v1947, 0
    %1954 = vmatpush.bf16.xpose.msra.mxu0 0
    %1955 = vmatpush.bf16.xpose.msra.mxu0 0
    %1956 = vmatpush.bf16.xpose.msra.mxu0 0
    %1957 = vmatpush.bf16.xpose.msra.mxu0 0
    %1958 = vmatpush.bf16.xpose.msra.mxu0 0
    %1959 = vmatpush.bf16.xpose.msra.mxu0 0
    %1960 = vmatpush.bf16.xpose.msra.mxu0 0
    %1961 = vmatpush.bf16.xpose.msra.mxu0 %v1952
    %1962 = vmatmul.bf16.gmra.mxu0 %v1949
    %v1963 = vpop.f32.mrf.mxu0
    %v1964 = vadd.f32 0.0, %v1963
    %v1965 = vpop.f32.mrf.mxu0
    %1966 = vdwg.mxu0
    %1967 = vrot.lane.b32.xlu0 %v1736, 120
    %v1968 = vpop.permute.xlu0 %1967
    %1969 = vrot.lane.b32.xlu0 %v1736, 88
    %v1970 = vpop.permute.xlu0 %1969
    %v1972 = vsel %vm216, %v1968, 0
    %v1975 = vsel %vm216, %v1970, 0
    %1977 = vmatpush.bf16.xpose.msra.mxu0 0
    %1978 = vmatpush.bf16.xpose.msra.mxu0 0
    %1979 = vmatpush.bf16.xpose.msra.mxu0 0
    %1980 = vmatpush.bf16.xpose.msra.mxu0 0
    %1981 = vmatpush.bf16.xpose.msra.mxu0 0
    %1982 = vmatpush.bf16.xpose.msra.mxu0 0
    %1983 = vmatpush.bf16.xpose.msra.mxu0 0
    %1984 = vmatpush.bf16.xpose.msra.mxu0 %v1975
    %1985 = vmatmul.bf16.gmra.mxu0 %v1972
    %v1986 = vpop.f32.mrf.mxu0
    %v1987 = vadd.f32 0.0, %v1986
    %v1988 = vpop.f32.mrf.mxu0
    %1989 = vdwg.mxu0
    %v1990 = vmul.f32 %v1918, 0.35355338
    %v1991 = vmul.f32 %v1941, 0.35355338
    %v1992 = vmul.f32 %v1964, 0.35355338
    %v1993 = vmul.f32 %v1987, 0.35355338
    %v1994 = vadd.f32 %v1990, %v312
    %v1995 = vadd.f32 %v1991, %v313
    %v1996 = vadd.f32 %v1992, %v314
    %v1997 = vadd.f32 %v1993, %v315
    %v1998 = vsel %vm216, %v1994, -inf
    %1999 = vmax.xlane.f32.xlu0 %v1998
    %v2000 = vpop.xlane.xlu0 %1999
    %v2001 = vsel %vm216, %v1995, -inf
    %2002 = vmax.xlane.f32.xlu0 %v2001
    %v2003 = vpop.xlane.xlu0 %2002
    %v2004 = vsel %vm216, %v1996, -inf
    %2005 = vmax.xlane.f32.xlu0 %v2004
    %v2006 = vpop.xlane.xlu0 %2005
    %v2007 = vsel %vm216, %v1997, -inf
    %2008 = vmax.xlane.f32.xlu0 %v2007
    %v2009 = vpop.xlane.xlu0 %2008
    %v2010 = vsub.f32 %v1994, %v2000
    %v2011 = vsub.f32 %v1995, %v2003
    %v2012 = vsub.f32 %v1996, %v2006
    %v2013 = vsub.f32 %v1997, %v2009
    %v2014 = vmul.f32 %v2010, 1.442695
    %v2015 = vpow.pop %v2014
    %v2016 = vmul.f32 %v2011, 1.442695
    %v2017 = vpow.pop %v2016
    %v2018 = vmul.f32 %v2012, 1.442695
    %v2019 = vpow.pop %v2018
    %v2020 = vmul.f32 %v2013, 1.442695
    %v2021 = vpow.pop %v2020
    %v2022 = vsel %vm216, %v2015, 0.0
    %2023 = vadd.xlane.f32.xlu0 %v2022
    %v2024 = vpop.xlane.xlu0 %2023
    %v2025 = vsel %vm216, %v2017, 0.0
    %2026 = vadd.xlane.f32.xlu0 %v2025
    %v2027 = vpop.xlane.xlu0 %2026
    %v2028 = vsel %vm216, %v2019, 0.0
    %2029 = vadd.xlane.f32.xlu0 %v2028
    %v2030 = vpop.xlane.xlu0 %2029
    %v2031 = vsel %vm216, %v2021, 0.0
    %2032 = vadd.xlane.f32.xlu0 %v2031
    %v2033 = vpop.xlane.xlu0 %2032
    %v2034 = vrcp.pop %v2024
    %v2035 = vrcp.pop %v2027
    %v2036 = vrcp.pop %v2030
    %v2037 = vrcp.pop %v2033
    %v2038 = vmul.f32 %v2015, %v2034
    %v2039 = vmul.f32 %v2017, %v2035
    %v2040 = vmul.f32 %v2019, %v2036
    %v2041 = vmul.f32 %v2021, %v2037
    %v2042 = vpack.c.bf16 %v2038, %v2038
    %v2043 = vpack.c.bf16 %v2039, %v2039
    %v2044 = vpack.c.bf16 %v2040, %v2040
    %v2045 = vpack.c.bf16 %v2041, %v2041
    %2046 = vrot.lane.b32.xlu0 %v1664, 56
    %v2047 = vpop.permute.xlu0 %2046
    %v2049 = vsel %vm216, %v2042, 0
    %v2052 = vsel %vm377, %v2047, 0
    %2054 = vmatpush.bf16.msra.mxu0 0
    %2055 = vmatpush.bf16.msra.mxu0 0
    %2056 = vmatpush.bf16.msra.mxu0 0
    %2057 = vmatpush.bf16.msra.mxu0 0
    %2058 = vmatpush.bf16.msra.mxu0 0
    %2059 = vmatpush.bf16.msra.mxu0 0
    %2060 = vmatpush.bf16.msra.mxu0 0
    %2061 = vmatpush.bf16.msra.mxu0 %v2052
    %2062 = vmatmul.bf16.gmra.mxu0 %v2049
    %v2063 = vpop.f32.mrf.mxu0
    %v2064 = vadd.f32 0.0, %v2063
    %v2065 = vpop.f32.mrf.mxu0
    %2066 = vdwg.mxu0
    %2067 = vrot.lane.b32.xlu0 %v1688, 56
    %v2068 = vpop.permute.xlu0 %2067
    %v2070 = vsel %vm216, %v2043, 0
    %v2073 = vsel %vm377, %v2068, 0
    %2075 = vmatpush.bf16.msra.mxu0 0
    %2076 = vmatpush.bf16.msra.mxu0 0
    %2077 = vmatpush.bf16.msra.mxu0 0
    %2078 = vmatpush.bf16.msra.mxu0 0
    %2079 = vmatpush.bf16.msra.mxu0 0
    %2080 = vmatpush.bf16.msra.mxu0 0
    %2081 = vmatpush.bf16.msra.mxu0 0
    %2082 = vmatpush.bf16.msra.mxu0 %v2073
    %2083 = vmatmul.bf16.gmra.mxu0 %v2070
    %v2084 = vpop.f32.mrf.mxu0
    %v2085 = vadd.f32 0.0, %v2084
    %v2086 = vpop.f32.mrf.mxu0
    %2087 = vdwg.mxu0
    %2088 = vrot.lane.b32.xlu0 %v1712, 56
    %v2089 = vpop.permute.xlu0 %2088
    %v2091 = vsel %vm216, %v2044, 0
    %v2094 = vsel %vm377, %v2089, 0
    %2096 = vmatpush.bf16.msra.mxu0 0
    %2097 = vmatpush.bf16.msra.mxu0 0
    %2098 = vmatpush.bf16.msra.mxu0 0
    %2099 = vmatpush.bf16.msra.mxu0 0
    %2100 = vmatpush.bf16.msra.mxu0 0
    %2101 = vmatpush.bf16.msra.mxu0 0
    %2102 = vmatpush.bf16.msra.mxu0 0
    %2103 = vmatpush.bf16.msra.mxu0 %v2094
    %2104 = vmatmul.bf16.gmra.mxu0 %v2091
    %v2105 = vpop.f32.mrf.mxu0
    %v2106 = vadd.f32 0.0, %v2105
    %v2107 = vpop.f32.mrf.mxu0
    %2108 = vdwg.mxu0
    %2109 = vrot.lane.b32.xlu0 %v1736, 56
    %v2110 = vpop.permute.xlu0 %2109
    %v2112 = vsel %vm216, %v2045, 0
    %v2115 = vsel %vm377, %v2110, 0
    %2117 = vmatpush.bf16.msra.mxu0 0
    %2118 = vmatpush.bf16.msra.mxu0 0
    %2119 = vmatpush.bf16.msra.mxu0 0
    %2120 = vmatpush.bf16.msra.mxu0 0
    %2121 = vmatpush.bf16.msra.mxu0 0
    %2122 = vmatpush.bf16.msra.mxu0 0
    %2123 = vmatpush.bf16.msra.mxu0 0
    %2124 = vmatpush.bf16.msra.mxu0 %v2115
    %2125 = vmatmul.bf16.gmra.mxu0 %v2112
    %v2126 = vpop.f32.mrf.mxu0
    %v2127 = vadd.f32 0.0, %v2126
    %v2128 = vpop.f32.mrf.mxu0
    %2129 = vdwg.mxu0
    %2130 = vrot.lane.b32.xlu0 %v1664, 112
    %v2131 = vpop.permute.xlu0 %2130
    %2132 = vrot.lane.b32.xlu0 %v1664, 80
    %v2133 = vpop.permute.xlu0 %2132
    %v2135 = vsel %vm216, %v2131, 0
    %v2138 = vsel %vm216, %v2133, 0
    %2140 = vmatpush.bf16.xpose.msra.mxu0 0
    %2141 = vmatpush.bf16.xpose.msra.mxu0 0
    %2142 = vmatpush.bf16.xpose.msra.mxu0 0
    %2143 = vmatpush.bf16.xpose.msra.mxu0 0
    %2144 = vmatpush.bf16.xpose.msra.mxu0 0
    %2145 = vmatpush.bf16.xpose.msra.mxu0 0
    %2146 = vmatpush.bf16.xpose.msra.mxu0 0
    %2147 = vmatpush.bf16.xpose.msra.mxu0 %v2138
    %2148 = vmatmul.bf16.gmra.mxu0 %v2135
    %v2149 = vpop.f32.mrf.mxu0
    %v2150 = vadd.f32 0.0, %v2149
    %v2151 = vpop.f32.mrf.mxu0
    %2152 = vdwg.mxu0
    %2153 = vrot.lane.b32.xlu0 %v1688, 112
    %v2154 = vpop.permute.xlu0 %2153
    %2155 = vrot.lane.b32.xlu0 %v1688, 80
    %v2156 = vpop.permute.xlu0 %2155
    %v2158 = vsel %vm216, %v2154, 0
    %v2161 = vsel %vm216, %v2156, 0
    %2163 = vmatpush.bf16.xpose.msra.mxu0 0
    %2164 = vmatpush.bf16.xpose.msra.mxu0 0
    %2165 = vmatpush.bf16.xpose.msra.mxu0 0
    %2166 = vmatpush.bf16.xpose.msra.mxu0 0
    %2167 = vmatpush.bf16.xpose.msra.mxu0 0
    %2168 = vmatpush.bf16.xpose.msra.mxu0 0
    %2169 = vmatpush.bf16.xpose.msra.mxu0 0
    %2170 = vmatpush.bf16.xpose.msra.mxu0 %v2161
    %2171 = vmatmul.bf16.gmra.mxu0 %v2158
    %v2172 = vpop.f32.mrf.mxu0
    %v2173 = vadd.f32 0.0, %v2172
    %v2174 = vpop.f32.mrf.mxu0
    %2175 = vdwg.mxu0
    %2176 = vrot.lane.b32.xlu0 %v1712, 112
    %v2177 = vpop.permute.xlu0 %2176
    %2178 = vrot.lane.b32.xlu0 %v1712, 80
    %v2179 = vpop.permute.xlu0 %2178
    %v2181 = vsel %vm216, %v2177, 0
    %v2184 = vsel %vm216, %v2179, 0
    %2186 = vmatpush.bf16.xpose.msra.mxu0 0
    %2187 = vmatpush.bf16.xpose.msra.mxu0 0
    %2188 = vmatpush.bf16.xpose.msra.mxu0 0
    %2189 = vmatpush.bf16.xpose.msra.mxu0 0
    %2190 = vmatpush.bf16.xpose.msra.mxu0 0
    %2191 = vmatpush.bf16.xpose.msra.mxu0 0
    %2192 = vmatpush.bf16.xpose.msra.mxu0 0
    %2193 = vmatpush.bf16.xpose.msra.mxu0 %v2184
    %2194 = vmatmul.bf16.gmra.mxu0 %v2181
    %v2195 = vpop.f32.mrf.mxu0
    %v2196 = vadd.f32 0.0, %v2195
    %v2197 = vpop.f32.mrf.mxu0
    %2198 = vdwg.mxu0
    %2199 = vrot.lane.b32.xlu0 %v1736, 112
    %v2200 = vpop.permute.xlu0 %2199
    %2201 = vrot.lane.b32.xlu0 %v1736, 80
    %v2202 = vpop.permute.xlu0 %2201
    %v2204 = vsel %vm216, %v2200, 0
    %v2207 = vsel %vm216, %v2202, 0
    %2209 = vmatpush.bf16.xpose.msra.mxu0 0
    %2210 = vmatpush.bf16.xpose.msra.mxu0 0
    %2211 = vmatpush.bf16.xpose.msra.mxu0 0
    %2212 = vmatpush.bf16.xpose.msra.mxu0 0
    %2213 = vmatpush.bf16.xpose.msra.mxu0 0
    %2214 = vmatpush.bf16.xpose.msra.mxu0 0
    %2215 = vmatpush.bf16.xpose.msra.mxu0 0
    %2216 = vmatpush.bf16.xpose.msra.mxu0 %v2207
    %2217 = vmatmul.bf16.gmra.mxu0 %v2204
    %v2218 = vpop.f32.mrf.mxu0
    %v2219 = vadd.f32 0.0, %v2218
    %v2220 = vpop.f32.mrf.mxu0
    %2221 = vdwg.mxu0
    %v2222 = vmul.f32 %v2150, 0.35355338
    %v2223 = vmul.f32 %v2173, 0.35355338
    %v2224 = vmul.f32 %v2196, 0.35355338
    %v2225 = vmul.f32 %v2219, 0.35355338
    %v2226 = vadd.f32 %v2222, %v312
    %v2227 = vadd.f32 %v2223, %v313
    %v2228 = vadd.f32 %v2224, %v314
    %v2229 = vadd.f32 %v2225, %v315
    %v2230 = vsel %vm216, %v2226, -inf
    %2231 = vmax.xlane.f32.xlu0 %v2230
    %v2232 = vpop.xlane.xlu0 %2231
    %v2233 = vsel %vm216, %v2227, -inf
    %2234 = vmax.xlane.f32.xlu0 %v2233
    %v2235 = vpop.xlane.xlu0 %2234
    %v2236 = vsel %vm216, %v2228, -inf
    %2237 = vmax.xlane.f32.xlu0 %v2236
    %v2238 = vpop.xlane.xlu0 %2237
    %v2239 = vsel %vm216, %v2229, -inf
    %2240 = vmax.xlane.f32.xlu0 %v2239
    %v2241 = vpop.xlane.xlu0 %2240
    %v2242 = vsub.f32 %v2226, %v2232
    %v2243 = vsub.f32 %v2227, %v2235
    %v2244 = vsub.f32 %v2228, %v2238
    %v2245 = vsub.f32 %v2229, %v2241
    %v2246 = vmul.f32 %v2242, 1.442695
    %v2247 = vpow.pop %v2246
    %v2248 = vmul.f32 %v2243, 1.442695
    %v2249 = vpow.pop %v2248
    %v2250 = vmul.f32 %v2244, 1.442695
    %v2251 = vpow.pop %v2250
    %v2252 = vmul.f32 %v2245, 1.442695
    %v2253 = vpow.pop %v2252
    %v2254 = vsel %vm216, %v2247, 0.0
    %2255 = vadd.xlane.f32.xlu0 %v2254
    %v2256 = vpop.xlane.xlu0 %2255
    %v2257 = vsel %vm216, %v2249, 0.0
    %2258 = vadd.xlane.f32.xlu0 %v2257
    %v2259 = vpop.xlane.xlu0 %2258
    %v2260 = vsel %vm216, %v2251, 0.0
    %2261 = vadd.xlane.f32.xlu0 %v2260
    %v2262 = vpop.xlane.xlu0 %2261
    %v2263 = vsel %vm216, %v2253, 0.0
    %2264 = vadd.xlane.f32.xlu0 %v2263
    %v2265 = vpop.xlane.xlu0 %2264
    %v2266 = vrcp.pop %v2256
    %v2267 = vrcp.pop %v2259
    %v2268 = vrcp.pop %v2262
    %v2269 = vrcp.pop %v2265
    %v2270 = vmul.f32 %v2247, %v2266
    %v2271 = vmul.f32 %v2249, %v2267
    %v2272 = vmul.f32 %v2251, %v2268
    %v2273 = vmul.f32 %v2253, %v2269
    %v2274 = vpack.c.bf16 %v2270, %v2270
    %v2275 = vpack.c.bf16 %v2271, %v2271
    %v2276 = vpack.c.bf16 %v2272, %v2272
    %v2277 = vpack.c.bf16 %v2273, %v2273
    %2278 = vrot.lane.b32.xlu0 %v1664, 48
    %v2279 = vpop.permute.xlu0 %2278
    %v2281 = vsel %vm216, %v2274, 0
    %v2284 = vsel %vm377, %v2279, 0
    %2286 = vmatpush.bf16.msra.mxu0 0
    %2287 = vmatpush.bf16.msra.mxu0 0
    %2288 = vmatpush.bf16.msra.mxu0 0
    %2289 = vmatpush.bf16.msra.mxu0 0
    %2290 = vmatpush.bf16.msra.mxu0 0
    %2291 = vmatpush.bf16.msra.mxu0 0
    %2292 = vmatpush.bf16.msra.mxu0 0
    %2293 = vmatpush.bf16.msra.mxu0 %v2284
    %2294 = vmatmul.bf16.gmra.mxu0 %v2281
    %v2295 = vpop.f32.mrf.mxu0
    %v2296 = vadd.f32 0.0, %v2295
    %v2297 = vpop.f32.mrf.mxu0
    %2298 = vdwg.mxu0
    %2299 = vrot.lane.b32.xlu0 %v1688, 48
    %v2300 = vpop.permute.xlu0 %2299
    %v2302 = vsel %vm216, %v2275, 0
    %v2305 = vsel %vm377, %v2300, 0
    %2307 = vmatpush.bf16.msra.mxu0 0
    %2308 = vmatpush.bf16.msra.mxu0 0
    %2309 = vmatpush.bf16.msra.mxu0 0
    %2310 = vmatpush.bf16.msra.mxu0 0
    %2311 = vmatpush.bf16.msra.mxu0 0
    %2312 = vmatpush.bf16.msra.mxu0 0
    %2313 = vmatpush.bf16.msra.mxu0 0
    %2314 = vmatpush.bf16.msra.mxu0 %v2305
    %2315 = vmatmul.bf16.gmra.mxu0 %v2302
    %v2316 = vpop.f32.mrf.mxu0
    %v2317 = vadd.f32 0.0, %v2316
    %v2318 = vpop.f32.mrf.mxu0
    %2319 = vdwg.mxu0
    %2320 = vrot.lane.b32.xlu0 %v1712, 48
    %v2321 = vpop.permute.xlu0 %2320
    %v2323 = vsel %vm216, %v2276, 0
    %v2326 = vsel %vm377, %v2321, 0
    %2328 = vmatpush.bf16.msra.mxu0 0
    %2329 = vmatpush.bf16.msra.mxu0 0
    %2330 = vmatpush.bf16.msra.mxu0 0
    %2331 = vmatpush.bf16.msra.mxu0 0
    %2332 = vmatpush.bf16.msra.mxu0 0
    %2333 = vmatpush.bf16.msra.mxu0 0
    %2334 = vmatpush.bf16.msra.mxu0 0
    %2335 = vmatpush.bf16.msra.mxu0 %v2326
    %2336 = vmatmul.bf16.gmra.mxu0 %v2323
    %v2337 = vpop.f32.mrf.mxu0
    %v2338 = vadd.f32 0.0, %v2337
    %v2339 = vpop.f32.mrf.mxu0
    %2340 = vdwg.mxu0
    %2341 = vrot.lane.b32.xlu0 %v1736, 48
    %v2342 = vpop.permute.xlu0 %2341
    %v2344 = vsel %vm216, %v2277, 0
    %v2347 = vsel %vm377, %v2342, 0
    %2349 = vmatpush.bf16.msra.mxu0 0
    %2350 = vmatpush.bf16.msra.mxu0 0
    %2351 = vmatpush.bf16.msra.mxu0 0
    %2352 = vmatpush.bf16.msra.mxu0 0
    %2353 = vmatpush.bf16.msra.mxu0 0
    %2354 = vmatpush.bf16.msra.mxu0 0
    %2355 = vmatpush.bf16.msra.mxu0 0
    %2356 = vmatpush.bf16.msra.mxu0 %v2347
    %2357 = vmatmul.bf16.gmra.mxu0 %v2344
    %v2358 = vpop.f32.mrf.mxu0
    %v2359 = vadd.f32 0.0, %v2358
    %v2360 = vpop.f32.mrf.mxu0
    %2361 = vdwg.mxu0
    %2362 = vrot.lane.b32.xlu0 %v1664, 104
    %v2363 = vpop.permute.xlu0 %2362
    %2364 = vrot.lane.b32.xlu0 %v1664, 72
    %v2365 = vpop.permute.xlu0 %2364
    %v2367 = vsel %vm216, %v2363, 0
    %v2370 = vsel %vm216, %v2365, 0
    %2372 = vmatpush.bf16.xpose.msra.mxu0 0
    %2373 = vmatpush.bf16.xpose.msra.mxu0 0
    %2374 = vmatpush.bf16.xpose.msra.mxu0 0
    %2375 = vmatpush.bf16.xpose.msra.mxu0 0
    %2376 = vmatpush.bf16.xpose.msra.mxu0 0
    %2377 = vmatpush.bf16.xpose.msra.mxu0 0
    %2378 = vmatpush.bf16.xpose.msra.mxu0 0
    %2379 = vmatpush.bf16.xpose.msra.mxu0 %v2370
    %2380 = vmatmul.bf16.gmra.mxu0 %v2367
    %v2381 = vpop.f32.mrf.mxu0
    %v2382 = vadd.f32 0.0, %v2381
    %v2383 = vpop.f32.mrf.mxu0
    %2384 = vdwg.mxu0
    %2385 = vrot.lane.b32.xlu0 %v1688, 104
    %v2386 = vpop.permute.xlu0 %2385
    %2387 = vrot.lane.b32.xlu0 %v1688, 72
    %v2388 = vpop.permute.xlu0 %2387
    %v2390 = vsel %vm216, %v2386, 0
    %v2393 = vsel %vm216, %v2388, 0
    %2395 = vmatpush.bf16.xpose.msra.mxu0 0
    %2396 = vmatpush.bf16.xpose.msra.mxu0 0
    %2397 = vmatpush.bf16.xpose.msra.mxu0 0
    %2398 = vmatpush.bf16.xpose.msra.mxu0 0
    %2399 = vmatpush.bf16.xpose.msra.mxu0 0
    %2400 = vmatpush.bf16.xpose.msra.mxu0 0
    %2401 = vmatpush.bf16.xpose.msra.mxu0 0
    %2402 = vmatpush.bf16.xpose.msra.mxu0 %v2393
    %2403 = vmatmul.bf16.gmra.mxu0 %v2390
    %v2404 = vpop.f32.mrf.mxu0
    %v2405 = vadd.f32 0.0, %v2404
    %v2406 = vpop.f32.mrf.mxu0
    %2407 = vdwg.mxu0
    %2408 = vrot.lane.b32.xlu0 %v1712, 104
    %v2409 = vpop.permute.xlu0 %2408
    %2410 = vrot.lane.b32.xlu0 %v1712, 72
    %v2411 = vpop.permute.xlu0 %2410
    %v2413 = vsel %vm216, %v2409, 0
    %v2416 = vsel %vm216, %v2411, 0
    %2418 = vmatpush.bf16.xpose.msra.mxu0 0
    %2419 = vmatpush.bf16.xpose.msra.mxu0 0
    %2420 = vmatpush.bf16.xpose.msra.mxu0 0
    %2421 = vmatpush.bf16.xpose.msra.mxu0 0
    %2422 = vmatpush.bf16.xpose.msra.mxu0 0
    %2423 = vmatpush.bf16.xpose.msra.mxu0 0
    %2424 = vmatpush.bf16.xpose.msra.mxu0 0
    %2425 = vmatpush.bf16.xpose.msra.mxu0 %v2416
    %2426 = vmatmul.bf16.gmra.mxu0 %v2413
    %v2427 = vpop.f32.mrf.mxu0
    %v2428 = vadd.f32 0.0, %v2427
    %v2429 = vpop.f32.mrf.mxu0
    %2430 = vdwg.mxu0
    %2431 = vrot.lane.b32.xlu0 %v1736, 104
    %v2432 = vpop.permute.xlu0 %2431
    %2433 = vrot.lane.b32.xlu0 %v1736, 72
    %v2434 = vpop.permute.xlu0 %2433
    %v2436 = vsel %vm216, %v2432, 0
    %v2439 = vsel %vm216, %v2434, 0
    %2441 = vmatpush.bf16.xpose.msra.mxu0 0
    %2442 = vmatpush.bf16.xpose.msra.mxu0 0
    %2443 = vmatpush.bf16.xpose.msra.mxu0 0
    %2444 = vmatpush.bf16.xpose.msra.mxu0 0
    %2445 = vmatpush.bf16.xpose.msra.mxu0 0
    %2446 = vmatpush.bf16.xpose.msra.mxu0 0
    %2447 = vmatpush.bf16.xpose.msra.mxu0 0
    %2448 = vmatpush.bf16.xpose.msra.mxu0 %v2439
    %2449 = vmatmul.bf16.gmra.mxu0 %v2436
    %v2450 = vpop.f32.mrf.mxu0
    %v2451 = vadd.f32 0.0, %v2450
    %v2452 = vpop.f32.mrf.mxu0
    %2453 = vdwg.mxu0
    %v2454 = vmul.f32 %v2382, 0.35355338
    %v2455 = vmul.f32 %v2405, 0.35355338
    %v2456 = vmul.f32 %v2428, 0.35355338
    %v2457 = vmul.f32 %v2451, 0.35355338
    %v2458 = vadd.f32 %v2454, %v312
    %v2459 = vadd.f32 %v2455, %v313
    %v2460 = vadd.f32 %v2456, %v314
    %v2461 = vadd.f32 %v2457, %v315
    %v2462 = vsel %vm216, %v2458, -inf
    %2463 = vmax.xlane.f32.xlu0 %v2462
    %v2464 = vpop.xlane.xlu0 %2463
    %v2465 = vsel %vm216, %v2459, -inf
    %2466 = vmax.xlane.f32.xlu0 %v2465
    %v2467 = vpop.xlane.xlu0 %2466
    %v2468 = vsel %vm216, %v2460, -inf
    %2469 = vmax.xlane.f32.xlu0 %v2468
    %v2470 = vpop.xlane.xlu0 %2469
    %v2471 = vsel %vm216, %v2461, -inf
    %2472 = vmax.xlane.f32.xlu0 %v2471
    %v2473 = vpop.xlane.xlu0 %2472
    %v2474 = vsub.f32 %v2458, %v2464
    %v2475 = vsub.f32 %v2459, %v2467
    %v2476 = vsub.f32 %v2460, %v2470
    %v2477 = vsub.f32 %v2461, %v2473
    %v2478 = vmul.f32 %v2474, 1.442695
    %v2479 = vpow.pop %v2478
    %v2480 = vmul.f32 %v2475, 1.442695
    %v2481 = vpow.pop %v2480
    %v2482 = vmul.f32 %v2476, 1.442695
    %v2483 = vpow.pop %v2482
    %v2484 = vmul.f32 %v2477, 1.442695
    %v2485 = vpow.pop %v2484
    %v2486 = vsel %vm216, %v2479, 0.0
    %2487 = vadd.xlane.f32.xlu0 %v2486
    %v2488 = vpop.xlane.xlu0 %2487
    %v2489 = vsel %vm216, %v2481, 0.0
    %2490 = vadd.xlane.f32.xlu0 %v2489
    %v2491 = vpop.xlane.xlu0 %2490
    %v2492 = vsel %vm216, %v2483, 0.0
    %2493 = vadd.xlane.f32.xlu0 %v2492
    %v2494 = vpop.xlane.xlu0 %2493
    %v2495 = vsel %vm216, %v2485, 0.0
    %2496 = vadd.xlane.f32.xlu0 %v2495
    %v2497 = vpop.xlane.xlu0 %2496
    %v2498 = vrcp.pop %v2488
    %v2499 = vrcp.pop %v2491
    %v2500 = vrcp.pop %v2494
    %v2501 = vrcp.pop %v2497
    %v2502 = vmul.f32 %v2479, %v2498
    %v2503 = vmul.f32 %v2481, %v2499
    %v2504 = vmul.f32 %v2483, %v2500
    %v2505 = vmul.f32 %v2485, %v2501
    %v2506 = vpack.c.bf16 %v2502, %v2502
    %v2507 = vpack.c.bf16 %v2503, %v2503
    %v2508 = vpack.c.bf16 %v2504, %v2504
    %v2509 = vpack.c.bf16 %v2505, %v2505
    %2510 = vrot.lane.b32.xlu0 %v1664, 40
    %v2511 = vpop.permute.xlu0 %2510
    %v2513 = vsel %vm216, %v2506, 0
    %v2516 = vsel %vm377, %v2511, 0
    %2518 = vmatpush.bf16.msra.mxu0 0
    %2519 = vmatpush.bf16.msra.mxu0 0
    %2520 = vmatpush.bf16.msra.mxu0 0
    %2521 = vmatpush.bf16.msra.mxu0 0
    %2522 = vmatpush.bf16.msra.mxu0 0
    %2523 = vmatpush.bf16.msra.mxu0 0
    %2524 = vmatpush.bf16.msra.mxu0 0
    %2525 = vmatpush.bf16.msra.mxu0 %v2516
    %2526 = vmatmul.bf16.gmra.mxu0 %v2513
    %v2527 = vpop.f32.mrf.mxu0
    %v2528 = vadd.f32 0.0, %v2527
    %v2529 = vpop.f32.mrf.mxu0
    %2530 = vdwg.mxu0
    %2531 = vrot.lane.b32.xlu0 %v1688, 40
    %v2532 = vpop.permute.xlu0 %2531
    %v2534 = vsel %vm216, %v2507, 0
    %v2537 = vsel %vm377, %v2532, 0
    %2539 = vmatpush.bf16.msra.mxu0 0
    %2540 = vmatpush.bf16.msra.mxu0 0
    %2541 = vmatpush.bf16.msra.mxu0 0
    %2542 = vmatpush.bf16.msra.mxu0 0
    %2543 = vmatpush.bf16.msra.mxu0 0
    %2544 = vmatpush.bf16.msra.mxu0 0
    %2545 = vmatpush.bf16.msra.mxu0 0
    %2546 = vmatpush.bf16.msra.mxu0 %v2537
    %2547 = vmatmul.bf16.gmra.mxu0 %v2534
    %v2548 = vpop.f32.mrf.mxu0
    %v2549 = vadd.f32 0.0, %v2548
    %v2550 = vpop.f32.mrf.mxu0
    %2551 = vdwg.mxu0
    %2552 = vrot.lane.b32.xlu0 %v1712, 40
    %v2553 = vpop.permute.xlu0 %2552
    %v2555 = vsel %vm216, %v2508, 0
    %v2558 = vsel %vm377, %v2553, 0
    %2560 = vmatpush.bf16.msra.mxu0 0
    %2561 = vmatpush.bf16.msra.mxu0 0
    %2562 = vmatpush.bf16.msra.mxu0 0
    %2563 = vmatpush.bf16.msra.mxu0 0
    %2564 = vmatpush.bf16.msra.mxu0 0
    %2565 = vmatpush.bf16.msra.mxu0 0
    %2566 = vmatpush.bf16.msra.mxu0 0
    %2567 = vmatpush.bf16.msra.mxu0 %v2558
    %2568 = vmatmul.bf16.gmra.mxu0 %v2555
    %v2569 = vpop.f32.mrf.mxu0
    %v2570 = vadd.f32 0.0, %v2569
    %v2571 = vpop.f32.mrf.mxu0
    %2572 = vdwg.mxu0
    %2573 = vrot.lane.b32.xlu0 %v1736, 40
    %v2574 = vpop.permute.xlu0 %2573
    %v2576 = vsel %vm216, %v2509, 0
    %v2579 = vsel %vm377, %v2574, 0
    %2581 = vmatpush.bf16.msra.mxu0 0
    %2582 = vmatpush.bf16.msra.mxu0 0
    %2583 = vmatpush.bf16.msra.mxu0 0
    %2584 = vmatpush.bf16.msra.mxu0 0
    %2585 = vmatpush.bf16.msra.mxu0 0
    %2586 = vmatpush.bf16.msra.mxu0 0
    %2587 = vmatpush.bf16.msra.mxu0 0
    %2588 = vmatpush.bf16.msra.mxu0 %v2579
    %2589 = vmatmul.bf16.gmra.mxu0 %v2576
    %v2590 = vpop.f32.mrf.mxu0
    %v2591 = vadd.f32 0.0, %v2590
    %v2592 = vpop.f32.mrf.mxu0
    %2593 = vdwg.mxu0
    %2598 = vrot.lane.b32.xlu0 %v2064, 8
    %v2599 = vpop.permute.xlu0 %2598
    %2600 = vrot.lane.b32.xlu0 %v2085, 8
    %v2601 = vpop.permute.xlu0 %2600
    %2602 = vrot.lane.b32.xlu0 %v2106, 8
    %v2603 = vpop.permute.xlu0 %2602
    %2604 = vrot.lane.b32.xlu0 %v2127, 8
    %v2605 = vpop.permute.xlu0 %2604
    %2614 = vrot.lane.b32.xlu0 %v2296, 16
    %v2615 = vpop.permute.xlu0 %2614
    %2616 = vrot.lane.b32.xlu0 %v2317, 16
    %v2617 = vpop.permute.xlu0 %2616
    %2618 = vrot.lane.b32.xlu0 %v2338, 16
    %v2619 = vpop.permute.xlu0 %2618
    %2620 = vrot.lane.b32.xlu0 %v2359, 16
    %v2621 = vpop.permute.xlu0 %2620
    %2630 = vrot.lane.b32.xlu0 %v2528, 24
    %v2631 = vpop.permute.xlu0 %2630
    %2632 = vrot.lane.b32.xlu0 %v2549, 24
    %v2633 = vpop.permute.xlu0 %2632
    %2634 = vrot.lane.b32.xlu0 %v2570, 24
    %v2635 = vpop.permute.xlu0 %2634
    %2636 = vrot.lane.b32.xlu0 %v2591, 24
    %v2637 = vpop.permute.xlu0 %2636
    %v2642 = vsel %vm216, %v1832, %v2599
    %v2643 = vsel %vm216, %v1853, %v2601
    %v2644 = vsel %vm216, %v1874, %v2603
    %v2645 = vsel %vm216, %v1895, %v2605
    %v2646 = vsel %vm1205, %v2642, %v2615
    %v2647 = vsel %vm1205, %v2643, %v2617
    %v2648 = vsel %vm1205, %v2644, %v2619
    %v2649 = vsel %vm1205, %v2645, %v2621
    %v2650 = vsel %vm1210, %v2646, %v2631
    %v2651 = vsel %vm1210, %v2647, %v2633
    %v2652 = vsel %vm1210, %v2648, %v2635
    %v2653 = vsel %vm1210, %v2649, %v2637
    %v2654 = vpack.c.bf16 %v2651, %v2650
    %v2655 = vpack.c.bf16 %v2653, %v2652
    %s2656 = scalar_lea.vmem %s6, 16
    %v2657 = vld [vmem:[%s2656] sm:$0xf]
    %v2658 = vld [vmem:[%s2656 + $0x4] sm:$0xf]
    %v2659 = vld [vmem:[%s2656 + $0x8] sm:$0xf]
    %v2660 = vld [vmem:[%s2656 + $0xc] sm:$0xf]
    %v2661 = vperm.slane %v1608, 0
    %v2666 = vunpack.c.l.b16 %v2657
    %v2667 = vunpack.c.l.b16 %v2658
    %v2668 = vunpack.c.l.b16 %v2659
    %v2669 = vunpack.c.l.b16 %v2660
    %v2670 = vpack.c.b16 %v2667, %v2666
    %v2671 = vpack.c.b16 %v2669, %v2668
    %v2675 = vsel %vm53, %v2654, 0
    %v2678 = vsel %vm53, %v2655, 0
    %2680 = vmatpush.bf16.msra.mxu0 0
    %2681 = vmatpush.bf16.msra.mxu0 0
    %2682 = vmatpush.bf16.msra.mxu0 0
    %2683 = vmatpush.bf16.msra.mxu0 0
    %2684 = vmatpush.bf16.msra.mxu0 0
    %2685 = vmatpush.bf16.msra.mxu0 0
    %2686 = vmatpush.bf16.msra.mxu0 %v2671
    %2687 = vmatpush.bf16.msra.mxu0 %v2670
    %2688 = vmatmul.bf16.gmra.mxu0 %v2675
    %v2689 = vpop.f32.mrf.mxu0
    %v2690 = vadd.f32 %v2661, %v2689
    %v2691 = vpop.f32.mrf.mxu0
    %v2692 = vadd.f32 %v2661, %v2691
    %2693 = vmatmul.bf16.gmra.mxu0 %v2678
    %v2694 = vpop.f32.mrf.mxu0
    %v2695 = vadd.f32 %v2661, %v2694
    %v2696 = vpop.f32.mrf.mxu0
    %v2697 = vadd.f32 %v2661, %v2696
    %2698 = vdwg.mxu0
    %v2699 = vadd.f32 %v1603, %v2690
    %v2700 = vadd.f32 %v1604, %v2692
    %v2701 = vadd.f32 %v1605, %v2695
    %v2702 = vadd.f32 %v1606, %v2697
    %v2703 = vsel %vm53, %v2699, 0.0
    %2704 = vadd.xlane.f32.xlu0 %v2703
    %v2705 = vpop.xlane.xlu0 %2704
    %v2706 = vsel %vm53, %v2700, 0.0
    %2707 = vadd.xlane.f32.xlu0 %v2706
    %v2708 = vpop.xlane.xlu0 %2707
    %v2709 = vsel %vm53, %v2701, 0.0
    %2710 = vadd.xlane.f32.xlu0 %v2709
    %v2711 = vpop.xlane.xlu0 %2710
    %v2712 = vsel %vm53, %v2702, 0.0
    %2713 = vadd.xlane.f32.xlu0 %v2712
    %v2714 = vpop.xlane.xlu0 %2713
    %v2715 = vmul.f32 %v2705, %v72
    %v2716 = vmul.f32 %v2708, %v72
    %v2717 = vmul.f32 %v2711, %v72
    %v2718 = vmul.f32 %v2714, %v72
    %v2719 = vsub.f32 %v2699, %v2715
    %v2720 = vsub.f32 %v2700, %v2716
    %v2721 = vsub.f32 %v2701, %v2717
    %v2722 = vsub.f32 %v2702, %v2718
    %v2723 = vmul.f32 %v2719, %v2719
    %v2724 = vmul.f32 %v2720, %v2720
    %v2725 = vmul.f32 %v2721, %v2721
    %v2726 = vmul.f32 %v2722, %v2722
    %v2727 = vsel %vm53, %v2723, 0.0
    %2728 = vadd.xlane.f32.xlu0 %v2727
    %v2729 = vpop.xlane.xlu0 %2728
    %v2730 = vsel %vm53, %v2724, 0.0
    %2731 = vadd.xlane.f32.xlu0 %v2730
    %v2732 = vpop.xlane.xlu0 %2731
    %v2733 = vsel %vm53, %v2725, 0.0
    %2734 = vadd.xlane.f32.xlu0 %v2733
    %v2735 = vpop.xlane.xlu0 %2734
    %v2736 = vsel %vm53, %v2726, 0.0
    %2737 = vadd.xlane.f32.xlu0 %v2736
    %v2738 = vpop.xlane.xlu0 %2737
    %v2739 = vmul.f32 %v2729, %v72
    %v2740 = vmul.f32 %v2732, %v72
    %v2741 = vmul.f32 %v2735, %v72
    %v2742 = vmul.f32 %v2738, %v72
    %v2743 = vadd.f32 %v2739, 1e-12
    %v2744 = vadd.f32 %v2740, 1e-12
    %v2745 = vadd.f32 %v2741, 1e-12
    %v2746 = vadd.f32 %v2742, 1e-12
    %v2747 = vrsqrt.pop %v2743
    %v2748 = vmul.f32 %v2747, %v2743
    %v2749 = vmul.f32 %v2748, %v2747
    %v2750 = vmul.f32 0.5, %v2749
    %v2751 = vsub.f32 1.5, %v2750
    %v2752 = vmul.f32 %v2747, %v2751
    %vm2753 = vweird.f32 %v2743
    %vm2754 = vweird.f32 %v2747
    %vm2755 = vmor %vm2753, %vm2754
    %v2756 = vsel %vm2755, %v2747, %v2752
    %v2757 = vrsqrt.pop %v2744
    %v2758 = vmul.f32 %v2757, %v2744
    %v2759 = vmul.f32 %v2758, %v2757
    %v2760 = vmul.f32 0.5, %v2759
    %v2761 = vsub.f32 1.5, %v2760
    %v2762 = vmul.f32 %v2757, %v2761
    %vm2763 = vweird.f32 %v2744
    %vm2764 = vweird.f32 %v2757
    %vm2765 = vmor %vm2763, %vm2764
    %v2766 = vsel %vm2765, %v2757, %v2762
    %v2767 = vrsqrt.pop %v2745
    %v2768 = vmul.f32 %v2767, %v2745
    %v2769 = vmul.f32 %v2768, %v2767
    %v2770 = vmul.f32 0.5, %v2769
    %v2771 = vsub.f32 1.5, %v2770
    %v2772 = vmul.f32 %v2767, %v2771
    %vm2773 = vweird.f32 %v2745
    %vm2774 = vweird.f32 %v2767
    %vm2775 = vmor %vm2773, %vm2774
    %v2776 = vsel %vm2775, %v2767, %v2772
    %v2777 = vrsqrt.pop %v2746
    %v2778 = vmul.f32 %v2777, %v2746
    %v2779 = vmul.f32 %v2778, %v2777
    %v2780 = vmul.f32 0.5, %v2779
    %v2781 = vsub.f32 1.5, %v2780
    %v2782 = vmul.f32 %v2777, %v2781
    %vm2783 = vweird.f32 %v2746
    %vm2784 = vweird.f32 %v2777
    %vm2785 = vmor %vm2783, %vm2784
    %v2786 = vsel %vm2785, %v2777, %v2782
    %v2787 = vmul.f32 %v2719, %v2756
    %v2788 = vmul.f32 %v2720, %v2766
    %v2789 = vmul.f32 %v2721, %v2776
    %v2790 = vmul.f32 %v2722, %v2786
    %v2791 = vperm.slane %v1608, 1
    %v2792 = vmul.f32 %v2787, %v2791
    %v2793 = vmul.f32 %v2788, %v2791
    %v2794 = vmul.f32 %v2789, %v2791
    %v2795 = vmul.f32 %v2790, %v2791
    %v2796 = vperm.slane %v1608, 2
    %v2797 = vadd.f32 %v2792, %v2796
    %v2798 = vadd.f32 %v2793, %v2796
    %v2799 = vadd.f32 %v2794, %v2796
    %v2800 = vadd.f32 %v2795, %v2796
    %v2801 = vpack.c.bf16 %v2798, %v2797
    %v2802 = vpack.c.bf16 %v2800, %v2799
    %s2803 = scalar_lea.vmem %s7, 16
    %v2804 = vld [vmem:[%s2803] sm:$0xf]
    %v2805 = vld [vmem:[%s2803 + $0x4] sm:$0xf]
    %v2806 = vld [vmem:[%s2803 + $0x8] sm:$0xf]
    %v2807 = vld [vmem:[%s2803 + $0xc] sm:$0xf]
    %s2808 = scalar_lea.vmem %s8, 1
    %v2809 = vld [vmem:[%s2808] sm:$0x1]
    %v2811 = vperm.slane %v2809, 0
    %v2817 = vunpack.c.l.b16 %v2804
    %v2818 = vunpack.c.l.b16 %v2805
    %v2819 = vunpack.c.l.b16 %v2806
    %v2820 = vunpack.c.l.b16 %v2807
    %v2821 = vpack.c.b16 %v2818, %v2817
    %v2822 = vpack.c.b16 %v2820, %v2819
    %v2826 = vsel %vm53, %v2801, 0
    %v2829 = vsel %vm53, %v2802, 0
    %2831 = vmatpush.bf16.msra.mxu0 0
    %2832 = vmatpush.bf16.msra.mxu0 0
    %2833 = vmatpush.bf16.msra.mxu0 0
    %2834 = vmatpush.bf16.msra.mxu0 0
    %2835 = vmatpush.bf16.msra.mxu0 0
    %2836 = vmatpush.bf16.msra.mxu0 0
    %2837 = vmatpush.bf16.msra.mxu0 %v2822
    %2838 = vmatpush.bf16.msra.mxu0 %v2821
    %2839 = vmatmul.bf16.gmra.mxu0 %v2826
    %v2840 = vpop.f32.mrf.mxu0
    %v2841 = vadd.f32 %v2811, %v2840
    %v2842 = vpop.f32.mrf.mxu0
    %v2843 = vadd.f32 %v2811, %v2842
    %2844 = vmatmul.bf16.gmra.mxu0 %v2829
    %v2845 = vpop.f32.mrf.mxu0
    %v2846 = vadd.f32 %v2811, %v2845
    %v2847 = vpop.f32.mrf.mxu0
    %v2848 = vadd.f32 %v2811, %v2847
    %2849 = vdwg.mxu0
    %v2850 = vmul.f32 %v2841, %v2841
    %v2851 = vmul.f32 %v2843, %v2843
    %v2852 = vmul.f32 %v2846, %v2846
    %v2853 = vmul.f32 %v2848, %v2848
    %v2854 = vmul.f32 %v2841, %v2850
    %v2855 = vmul.f32 %v2843, %v2851
    %v2856 = vmul.f32 %v2846, %v2852
    %v2857 = vmul.f32 %v2848, %v2853
    %v2858 = vmul.f32 %v2854, 0.044715
    %v2859 = vmul.f32 %v2855, 0.044715
    %v2860 = vmul.f32 %v2856, 0.044715
    %v2861 = vmul.f32 %v2857, 0.044715
    %v2862 = vadd.f32 %v2841, %v2858
    %v2863 = vadd.f32 %v2843, %v2859
    %v2864 = vadd.f32 %v2846, %v2860
    %v2865 = vadd.f32 %v2848, %v2861
    %v2866 = vmul.f32 %v2862, 0.7978846
    %v2867 = vmul.f32 %v2863, 0.7978846
    %v2868 = vmul.f32 %v2864, 0.7978846
    %v2869 = vmul.f32 %v2865, 0.7978846
    %v2870 = vtanh.pop %v2866
    %v2871 = vtanh.pop %v2867
    %v2872 = vtanh.pop %v2868
    %v2873 = vtanh.pop %v2869
    %v2874 = vadd.f32 %v2870, 1.0
    %v2875 = vadd.f32 %v2871, 1.0
    %v2876 = vadd.f32 %v2872, 1.0
    %v2877 = vadd.f32 %v2873, 1.0
    %v2878 = vmul.f32 %v2874, 0.5
    %v2879 = vmul.f32 %v2875, 0.5
    %v2880 = vmul.f32 %v2876, 0.5
    %v2881 = vmul.f32 %v2877, 0.5
    %v2882 = vmul.f32 %v2841, %v2878
    %v2883 = vmul.f32 %v2843, %v2879
    %v2884 = vmul.f32 %v2846, %v2880
    %v2885 = vmul.f32 %v2848, %v2881
    %v2886 = vpack.c.bf16 %v2883, %v2882
    %v2887 = vpack.c.bf16 %v2885, %v2884
    %s2888 = scalar_lea.vmem %s9, 32
    %v2889 = vld [vmem:[%s2888] sm:$0xf]
    %v2890 = vld [vmem:[%s2888 + $0x4] sm:$0xf]
    %v2891 = vld [vmem:[%s2888 + $0x8] sm:$0xf]
    %v2892 = vld [vmem:[%s2888 + $0xc] sm:$0xf]
    %v2893 = vld [vmem:[%s2888 + $0x10] sm:$0xf]
    %v2894 = vld [vmem:[%s2888 + $0x14] sm:$0xf]
    %v2895 = vld [vmem:[%s2888 + $0x18] sm:$0xf]
    %v2896 = vld [vmem:[%s2888 + $0x1c] sm:$0xf]
    %v2897 = vperm.slane %v1608, 3
    %v2906 = vunpack.c.l.b16 %v2889
    %v2907 = vunpack.c.l.b16 %v2890
    %v2908 = vunpack.c.l.b16 %v2891
    %v2909 = vunpack.c.l.b16 %v2892
    %v2910 = vunpack.c.l.b16 %v2893
    %v2911 = vunpack.c.l.b16 %v2894
    %v2912 = vunpack.c.l.b16 %v2895
    %v2913 = vunpack.c.l.b16 %v2896
    %v2914 = vpack.c.b16 %v2907, %v2906
    %v2915 = vpack.c.b16 %v2909, %v2908
    %v2916 = vpack.c.b16 %v2911, %v2910
    %v2917 = vpack.c.b16 %v2913, %v2912
    %v2923 = vsel %vm1479, %v2886, 0
    %v2926 = vsel %vm1479, %v2887, 0
    %2928 = vmatpush.bf16.msra.mxu0 0
    %2929 = vmatpush.bf16.msra.mxu0 0
    %2930 = vmatpush.bf16.msra.mxu0 0
    %2931 = vmatpush.bf16.msra.mxu0 0
    %2932 = vmatpush.bf16.msra.mxu0 %v2917
    %2933 = vmatpush.bf16.msra.mxu0 %v2916
    %2934 = vmatpush.bf16.msra.mxu0 %v2915
    %2935 = vmatpush.bf16.msra.mxu0 %v2914
    %2936 = vmatmul.bf16.gmra.mxu0 %v2923
    %v2937 = vpop.f32.mrf.mxu0
    %v2938 = vadd.f32 %v2897, %v2937
    %v2939 = vpop.f32.mrf.mxu0
    %v2940 = vadd.f32 %v2897, %v2939
    %2941 = vmatmul.bf16.gmra.mxu0 %v2926
    %v2942 = vpop.f32.mrf.mxu0
    %v2943 = vadd.f32 %v2897, %v2942
    %v2944 = vpop.f32.mrf.mxu0
    %v2945 = vadd.f32 %v2897, %v2944
    %2946 = vdwg.mxu0
    %v2947 = vadd.f32 %v2797, %v2938
    %v2948 = vadd.f32 %v2798, %v2940
    %v2949 = vadd.f32 %v2799, %v2943
    %v2950 = vadd.f32 %v2800, %v2945
    %v2951 = vsel %vm53, %v2947, 0.0
    %2952 = vadd.xlane.f32.xlu0 %v2951
    %v2953 = vpop.xlane.xlu0 %2952
    %v2954 = vsel %vm53, %v2948, 0.0
    %2955 = vadd.xlane.f32.xlu0 %v2954
    %v2956 = vpop.xlane.xlu0 %2955
    %v2957 = vsel %vm53, %v2949, 0.0
    %2958 = vadd.xlane.f32.xlu0 %v2957
    %v2959 = vpop.xlane.xlu0 %2958
    %v2960 = vsel %vm53, %v2950, 0.0
    %2961 = vadd.xlane.f32.xlu0 %v2960
    %v2962 = vpop.xlane.xlu0 %2961
    %v2963 = vmul.f32 %v2953, %v72
    %v2964 = vmul.f32 %v2956, %v72
    %v2965 = vmul.f32 %v2959, %v72
    %v2966 = vmul.f32 %v2962, %v72
    %v2967 = vsub.f32 %v2947, %v2963
    %v2968 = vsub.f32 %v2948, %v2964
    %v2969 = vsub.f32 %v2949, %v2965
    %v2970 = vsub.f32 %v2950, %v2966
    %v2971 = vmul.f32 %v2967, %v2967
    %v2972 = vmul.f32 %v2968, %v2968
    %v2973 = vmul.f32 %v2969, %v2969
    %v2974 = vmul.f32 %v2970, %v2970
    %v2975 = vsel %vm53, %v2971, 0.0
    %2976 = vadd.xlane.f32.xlu0 %v2975
    %v2977 = vpop.xlane.xlu0 %2976
    %v2978 = vsel %vm53, %v2972, 0.0
    %2979 = vadd.xlane.f32.xlu0 %v2978
    %v2980 = vpop.xlane.xlu0 %2979
    %v2981 = vsel %vm53, %v2973, 0.0
    %2982 = vadd.xlane.f32.xlu0 %v2981
    %v2983 = vpop.xlane.xlu0 %2982
    %v2984 = vsel %vm53, %v2974, 0.0
    %2985 = vadd.xlane.f32.xlu0 %v2984
    %v2986 = vpop.xlane.xlu0 %2985
    %v2987 = vmul.f32 %v2977, %v72
    %v2988 = vmul.f32 %v2980, %v72
    %v2989 = vmul.f32 %v2983, %v72
    %v2990 = vmul.f32 %v2986, %v72
    %v2991 = vadd.f32 %v2987, 1e-12
    %v2992 = vadd.f32 %v2988, 1e-12
    %v2993 = vadd.f32 %v2989, 1e-12
    %v2994 = vadd.f32 %v2990, 1e-12
    %v2995 = vrsqrt.pop %v2991
    %v2996 = vmul.f32 %v2995, %v2991
    %v2997 = vmul.f32 %v2996, %v2995
    %v2998 = vmul.f32 0.5, %v2997
    %v2999 = vsub.f32 1.5, %v2998
    %v3000 = vmul.f32 %v2995, %v2999
    %vm3001 = vweird.f32 %v2991
    %vm3002 = vweird.f32 %v2995
    %vm3003 = vmor %vm3001, %vm3002
    %v3004 = vsel %vm3003, %v2995, %v3000
    %v3005 = vrsqrt.pop %v2992
    %v3006 = vmul.f32 %v3005, %v2992
    %v3007 = vmul.f32 %v3006, %v3005
    %v3008 = vmul.f32 0.5, %v3007
    %v3009 = vsub.f32 1.5, %v3008
    %v3010 = vmul.f32 %v3005, %v3009
    %vm3011 = vweird.f32 %v2992
    %vm3012 = vweird.f32 %v3005
    %vm3013 = vmor %vm3011, %vm3012
    %v3014 = vsel %vm3013, %v3005, %v3010
    %v3015 = vrsqrt.pop %v2993
    %v3016 = vmul.f32 %v3015, %v2993
    %v3017 = vmul.f32 %v3016, %v3015
    %v3018 = vmul.f32 0.5, %v3017
    %v3019 = vsub.f32 1.5, %v3018
    %v3020 = vmul.f32 %v3015, %v3019
    %vm3021 = vweird.f32 %v2993
    %vm3022 = vweird.f32 %v3015
    %vm3023 = vmor %vm3021, %vm3022
    %v3024 = vsel %vm3023, %v3015, %v3020
    %v3025 = vrsqrt.pop %v2994
    %v3026 = vmul.f32 %v3025, %v2994
    %v3027 = vmul.f32 %v3026, %v3025
    %v3028 = vmul.f32 0.5, %v3027
    %v3029 = vsub.f32 1.5, %v3028
    %v3030 = vmul.f32 %v3025, %v3029
    %vm3031 = vweird.f32 %v2994
    %vm3032 = vweird.f32 %v3025
    %vm3033 = vmor %vm3031, %vm3032
    %v3034 = vsel %vm3033, %v3025, %v3030
    %v3035 = vmul.f32 %v2967, %v3004
    %v3036 = vmul.f32 %v2968, %v3014
    %v3037 = vmul.f32 %v2969, %v3024
    %v3038 = vmul.f32 %v2970, %v3034
    %v3039 = vperm.slane %v1608, 4
    %v3040 = vmul.f32 %v3035, %v3039
    %v3041 = vmul.f32 %v3036, %v3039
    %v3042 = vmul.f32 %v3037, %v3039
    %v3043 = vmul.f32 %v3038, %v3039
    %v3044 = vperm.slane %v1608, 5
    %v3045 = vadd.f32 %v3040, %v3044
    %v3046 = vadd.f32 %v3041, %v3044
    %v3047 = vadd.f32 %v3042, %v3044
    %v3048 = vadd.f32 %v3043, %v3044
    %v3049 = vld [vmem:[%s1] sm:$0xf]
    %vm3050 = vcmp.eq.s32.totalorder %v3049, 4
    %v3051 = vsel %vm3050, 1, 0
    %v3052 = vcvt.s32.f32 %v3051
    %v3053 = vperm.slane %v3052, 0
    %v3054 = vlaneseq
    %v3055 = vshrl.u32 %v3054, 7
    %3057 = vset.pattern.permute.xlu0 %v3055
    %3058 = vperm.xlu0 %3057, %v3053
    %v3059 = vpop.permute.xlu0 %3058
    %v3060 = vperm.slane %v3052, 1
    %v3061 = vlaneseq
    %v3062 = vshrl.u32 %v3061, 7
    %3064 = vset.pattern.permute.xlu0 %v3062
    %3065 = vperm.xlu0 %3064, %v3060
    %v3066 = vpop.permute.xlu0 %3065
    %v3067 = vperm.slane %v3052, 2
    %v3068 = vlaneseq
    %v3069 = vshrl.u32 %v3068, 7
    %3071 = vset.pattern.permute.xlu0 %v3069
    %3072 = vperm.xlu0 %3071, %v3067
    %v3073 = vpop.permute.xlu0 %3072
    %v3074 = vperm.slane %v3052, 3
    %v3075 = vlaneseq
    %v3076 = vshrl.u32 %v3075, 7
    %3078 = vset.pattern.permute.xlu0 %v3076
    %3079 = vperm.xlu0 %3078, %v3074
    %v3080 = vpop.permute.xlu0 %3079
    %v3081 = vmul.f32 %v3045, %v3059
    %v3082 = vmul.f32 %v3046, %v3066
    %v3083 = vmul.f32 %v3047, %v3073
    %v3084 = vmul.f32 %v3048, %v3080
    %v3085 = vsel %vm53, %v3081, 0.0
    %v3086 = vrot.slane %v3085, 4
    %v3087 = vadd.f32 %v3085, %v3086
    %v3088 = vrot.slane %v3087, 2
    %v3089 = vadd.f32 %v3087, %v3088
    %v3090 = vrot.slane %v3089, 1
    %v3091 = vadd.f32 %v3089, %v3090
    %v3092 = vsel %vm53, %v3082, 0.0
    %v3093 = vrot.slane %v3092, 4
    %v3094 = vadd.f32 %v3092, %v3093
    %v3095 = vrot.slane %v3094, 2
    %v3096 = vadd.f32 %v3094, %v3095
    %v3097 = vrot.slane %v3096, 1
    %v3098 = vadd.f32 %v3096, %v3097
    %v3099 = vsel %vm53, %v3083, 0.0
    %v3100 = vrot.slane %v3099, 4
    %v3101 = vadd.f32 %v3099, %v3100
    %v3102 = vrot.slane %v3101, 2
    %v3103 = vadd.f32 %v3101, %v3102
    %v3104 = vrot.slane %v3103, 1
    %v3105 = vadd.f32 %v3103, %v3104
    %v3106 = vsel %vm53, %v3084, 0.0
    %v3107 = vrot.slane %v3106, 4
    %v3108 = vadd.f32 %v3106, %v3107
    %v3109 = vrot.slane %v3108, 2
    %v3110 = vadd.f32 %v3108, %v3109
    %v3111 = vrot.slane %v3110, 1
    %v3112 = vadd.f32 %v3110, %v3111
    %v3113 = vsub.f32 %v3091, %v3105
    %v3114 = vsub.f32 %v3098, %v3112
    %vm3117 = vcmask 1041409
    %v3118 = vsel %vm3117, %v3114, %v3113
    %vm3120 = vcmask 254976
    %3121 = vst.msk [vmem:[#allocation2] sm:$0x3] %vm3120, %v3118
    // Predicated region
    $region46: #{prompt_bert_forward.1} parent=1 // pred_check
      _
    $region47: #{prompt_bert_forward.1} parent=1 // pred_check_branch
      %3123 = sbr.rel (0) target = $region49
    $region48: #{prompt_bert_forward.1} parent=1 // pred_region
      %3125 = vsyncadd [#allocation3], 0
      %s3127 = sshll.u32 [#allocation2], 4
      %s3128 = int_to_ptr.vmem [resolvable:$true] %s3127
      %s3129 = sshll.u32 %s11, 4
      %s3130 = int_to_ptr.hbm [resolvable:$true] %s3129
      %3132 = dma.vmem_to_hbm [thread:$0]  %s3128, 32, %s3130, [#allocation3]
    $region49: #{prompt_bert_forward.1} parent=1 // pred_fallthru
      _
    // Predicated region
    $region50: #{prompt_bert_forward.1} parent=1 // pred_check
      _
    $region51: #{prompt_bert_forward.1} parent=1 // pred_check_branch
      %3134 = sbr.rel (0) target = $region53
    $region52: #{prompt_bert_forward.1} parent=1 // pred_region
      %3136 = dma.done [#allocation3], 32
    $region53: #{prompt_bert_forward.1} parent=1 // pred_fallthru
      _
    %3137 = vsyncpa [#allocation3], 1

</llo_original>
